<compile_context>
chip_gen: v5e
topology: v5e:2x2
jax: 0.10.0
libtpu: 0.0.40
codegen_flags: <defaults>
</compile_context>

<pallas_src>
import jax
import jax.numpy as jnp
from jax.experimental import pallas as pl
from jax.experimental.pallas import tpu as pltpu

LANE = 128


def _round_up(n, m=LANE):
    return ((n + m - 1) // m) * m


def _pad_hw1(x):
    """Zero-pad the two leading (spatial) dims of an (H, W, C) array by 1 each side."""
    H, W, C = x.shape
    zc = jnp.zeros((H, 1, C), x.dtype)
    x = jnp.concatenate([zc, x, zc], axis=1)          # (H, W+2, C)
    zr = jnp.zeros((1, W + 2, C), x.dtype)
    return jnp.concatenate([zr, x, zr], axis=0)       # (H+2, W+2, C)


def _im2col_3x3(xp, H, W):
    """(H+2, W+2, C) -> (H*W, 9*C) patch matrix for a 3x3 / pad=1 stencil."""
    C = xp.shape[-1]
    taps = [xp[ky:ky + H, kx:kx + W, :].reshape(H * W, C)
            for ky in range(3) for kx in range(3)]
    return jnp.concatenate(taps, axis=-1)             # lane-tile-aligned concat


def feature_extractor_kernel(x_ref, w1_ref, b1_ref, w2_ref, b2_ref, o_ref):
    """conv3x3+ReLU -> conv3x3+ReLU -> global-avg-pool for one image (one grid step)."""
    _, H, W, _ = x_ref.shape
    C1P = w1_ref.shape[-1]
    C2P = w2_ref.shape[-1]
    inv_hw = 1.0 / (H * W)

    # ---- conv1: halo pad in VMEM, im2col, ONE MXU matmul; bias+ReLU epilogue in f32 ----
    xp = _pad_hw1(x_ref[0].astype(jnp.float32))                 # (H+2, W+2, CP)
    p1 = _im2col_3x3(xp, H, W).astype(jnp.bfloat16)             # (H*W, 9*CP) bf16
    h = jnp.dot(p1, w1_ref[...], preferred_element_type=jnp.float32)
    h = jnp.maximum(h + b1_ref[...], 0.0)                       # (H*W, C1P) f32

    # ---- conv2 + ReLU + GAP; hidden activation never leaves VMEM ----
    hp = _pad_hw1(h.reshape(H, W, C1P))                         # (H+2, W+2, C1P)
    p2 = _im2col_3x3(hp, H, W).astype(jnp.bfloat16)             # (H*W, 9*C1P) bf16
    y = jnp.dot(p2, w2_ref[...], preferred_element_type=jnp.float32)
    y = jnp.maximum(y + b2_ref[...], 0.0)                       # (H*W, C2P) f32

    pooled = jnp.sum(y, axis=0, keepdims=True) * inv_hw         # (1, C2P)  (AdaptiveAvgPool2d(1))
    o_ref[...] = pooled.reshape(1, 1, C2P).astype(o_ref.dtype)


def _pad_to(a, axis, target):
    if a.shape[axis] == target:
        return a
    pad = [(0, 0)] * a.ndim
    pad[axis] = (0, target - a.shape[axis])
    return jnp.pad(a, pad)


@jax.jit
def feature_extractor_forward(x_nchw, params):
    """FeatureExtractor.forward: features(x) then view(N, -1).  Input is NCHW."""
    N, Cin, H, W = x_nchw.shape
    C1 = params["w1"].shape[-1]
    C2 = params["w2"].shape[-1]
    CP, C1P, C2P = _round_up(Cin), _round_up(C1), _round_up(C2)

    # Layout plumbing (outside the kernel): NCHW->NHWC, lane-pad channels to a
    # multiple of 128, bf16 HBM operands, im2col-shaped weight matrices.
    x = jnp.transpose(x_nchw, (0, 2, 3, 1))
    x = _pad_to(x, 3, CP).astype(jnp.bfloat16)                        # (N, H, W, CP)
    w1 = _pad_to(_pad_to(params["w1"], 2, CP), 3, C1P)
    w1 = w1.reshape(9 * CP, C1P).astype(jnp.bfloat16)                 # (9*CP, C1P)
    w2 = _pad_to(_pad_to(params["w2"], 2, C1P), 3, C2P)
    w2 = w2.reshape(9 * C1P, C2P).astype(jnp.bfloat16)                # (9*C1P, C2P)
    b1 = _pad_to(params["b1"], 0, C1P).reshape(1, C1P).astype(jnp.float32)
    b2 = _pad_to(params["b2"], 0, C2P).reshape(1, C2P).astype(jnp.float32)

    cost = pl.CostEstimate(
        flops=2 * N * H * W * 9 * (CP * C1P + C1P * C2P),
        transcendentals=0,
        bytes_accessed=(x.size + w1.size + w2.size) * 2
                       + (b1.size + b2.size + N * C2P) * 4)

    # NOTE: for large images, add an H-tile grid axis (with a recomputed 1-row
    # halo) so the per-step VMEM footprint stays bounded; at 16x16 one image
    # per grid step already fits comfortably (<3 MiB live).
    out = pl.pallas_call(
        feature_extractor_kernel,
        out_shape=jax.ShapeDtypeStruct((N, 1, C2P), jnp.float32),
        grid_spec=pltpu.PrefetchScalarGridSpec(
            num_scalar_prefetch=0,
            grid=(N,),
            in_specs=[
                pl.BlockSpec((1, H, W, CP), lambda n: (n, 0, 0, 0)),
                pl.BlockSpec((9 * CP, C1P), lambda n: (0, 0)),   # weights: resident
                pl.BlockSpec((1, C1P), lambda n: (0, 0)),
                pl.BlockSpec((9 * C1P, C2P), lambda n: (0, 0)),  # weights: resident
                pl.BlockSpec((1, C2P), lambda n: (0, 0)),
            ],
            out_specs=pl.BlockSpec((1, 1, C2P), lambda n: (n, 0, 0)),
        ),
        compiler_params=pltpu.CompilerParams(
            dimension_semantics=("parallel",),           # megacore split on v7x
            vmem_limit_bytes=48 * 1024 * 1024),          # safe within v7x's 64 MiB
        cost_estimate=cost,
    )(x, w1, b1, w2, b2)

    # GAP output is (N, C2, 1, 1) in PyTorch; view(N, -1) -> (N, C2).
    return out.reshape(N, C2P)[:, :C2]


def init_params(key, cin=4, c1=8, c2=16):
    k1, k2, k3, k4 = jax.random.split(key, 4)
    return {
        "w1": 0.1 * jax.random.normal(k1, (3, 3, cin, c1), jnp.float32),
        "b1": 0.1 * jax.random.normal(k2, (c1,), jnp.float32),
        "w2": 0.1 * jax.random.normal(k3, (3, 3, c1, c2), jnp.float32),
        "b2": 0.1 * jax.random.normal(k4, (c2,), jnp.float32),
    }


def _reference(x_nchw, params):
    """Plain-JAX f32 reference (lax.conv) for sanity checking."""
    def conv(x, w, b):  # x NCHW, w HWIO
        w_oihw = jnp.transpose(w, (3, 2, 0, 1))
        y = jax.lax.conv_general_dilated(
            x, w_oihw, window_strides=(1, 1), padding="SAME",
            dimension_numbers=("NCHW", "OIHW", "NCHW"))
        return jnp.maximum(y + b[None, :, None, None], 0.0)

    h = conv(x_nchw, params["w1"], params["b1"])
    h = conv(h, params["w2"], params["b2"])
    return jnp.mean(h, axis=(2, 3))          # AdaptiveAvgPool2d(1) + flatten


if __name__ == "__main__":
    key = jax.random.PRNGKey(0)
    kx, kp = jax.random.split(key)

    N, C_IN, H, W = 2, 4, 16, 16
    x = jax.random.normal(kx, (N, C_IN, H, W), jnp.float32)
    params = init_params(kp, cin=C_IN, c1=8, c2=16)

    out = jax.block_until_ready(feature_extractor_forward(x, params))
    ref = _reference(x, params)

    assert out.shape == (N, 16), out.shape
    # bf16 MXU operands with f32 accumulation: allow a few 1e-3 of error.
    max_err = float(jnp.max(jnp.abs(out - ref)))
    assert jnp.allclose(out, ref, atol=2e-2, rtol=2e-2), max_err

    print("KERNEL_OK")
</pallas_src>

<mosaic_0001>
module attributes {stable_mosaic.version = 11 : i64} {
  func.func @feature_extractor_kernel(%arg0: i32, %arg1: memref<1x16x16x128xbf16, #tpu.memory_space<vmem>>, %arg2: memref<1152x128xbf16, #tpu.memory_space<vmem>>, %arg3: memref<1x128xf32, #tpu.memory_space<vmem>>, %arg4: memref<1152x128xbf16, #tpu.memory_space<vmem>>, %arg5: memref<1x128xf32, #tpu.memory_space<vmem>>, %arg6: memref<1x1x128xf32, #tpu.memory_space<vmem>>) attributes {dimension_semantics = [#tpu.dimension_semantics<parallel>], iteration_bounds = array<i64: 2>, scalar_prefetch = 0 : i64, scratch_operands = 0 : i64, tpu.core_type = #tpu.core_type<tc>, window_params = [{transform_indices = @transform_0, window_bounds = array<i64: 1, 16, 16, 128>}, {pipeline_mode = #tpu.pipeline_mode<synchronous>, transform_indices = @transform_1, window_bounds = array<i64: 1152, 128>}, {pipeline_mode = #tpu.pipeline_mode<synchronous>, transform_indices = @transform_2, window_bounds = array<i64: 1, 128>}, {pipeline_mode = #tpu.pipeline_mode<synchronous>, transform_indices = @transform_3, window_bounds = array<i64: 1152, 128>}, {pipeline_mode = #tpu.pipeline_mode<synchronous>, transform_indices = @transform_4, window_bounds = array<i64: 1, 128>}, {transform_indices = @transform_5, window_bounds = array<i64: 1, 1, 128>}]} {
    %c0 = arith.constant 0 : index
    %c0_0 = arith.constant 0 : index
    %c0_1 = arith.constant 0 : index
    %c0_2 = arith.constant 0 : index
    %0 = vector.load %arg1[%c0, %c0_0, %c0_1, %c0_2] : memref<1x16x16x128xbf16, #tpu.memory_space<vmem>>, vector<1x16x16x128xbf16>
    %1 = vector.shape_cast %0 : vector<1x16x16x128xbf16> to vector<16x16x128xbf16>
    %2 = arith.extf %1 : vector<16x16x128xbf16> to vector<16x16x128xf32>
    %cst = arith.constant 0.000000e+00 : f32
    %3 = vector.broadcast %cst : f32 to vector<16x1x128xf32>
    %4 = tpu.concatenate %3, %2, %3 in 1 : vector<16x1x128xf32>, vector<16x16x128xf32>, vector<16x1x128xf32> -> vector<16x18x128xf32>
    %cst_3 = arith.constant 0.000000e+00 : f32
    %5 = vector.broadcast %cst_3 : f32 to vector<1x18x128xf32>
    %6 = tpu.concatenate %5, %4, %5 in 0 : vector<1x18x128xf32>, vector<16x18x128xf32>, vector<1x18x128xf32> -> vector<18x18x128xf32>
    %7 = vector.extract_strided_slice %6 {offsets = [0, 0, 0], sizes = [16, 16, 128], strides = [1, 1, 1]} : vector<18x18x128xf32> to vector<16x16x128xf32>
    %8 = vector.shape_cast %7 : vector<16x16x128xf32> to vector<256x128xf32>
    %9 = vector.extract_strided_slice %6 {offsets = [0, 1, 0], sizes = [16, 16, 128], strides = [1, 1, 1]} : vector<18x18x128xf32> to vector<16x16x128xf32>
    %10 = vector.shape_cast %9 : vector<16x16x128xf32> to vector<256x128xf32>
    %11 = vector.extract_strided_slice %6 {offsets = [0, 2, 0], sizes = [16, 16, 128], strides = [1, 1, 1]} : vector<18x18x128xf32> to vector<16x16x128xf32>
    %12 = vector.shape_cast %11 : vector<16x16x128xf32> to vector<256x128xf32>
    %13 = vector.extract_strided_slice %6 {offsets = [1, 0, 0], sizes = [16, 16, 128], strides = [1, 1, 1]} : vector<18x18x128xf32> to vector<16x16x128xf32>
    %14 = vector.shape_cast %13 : vector<16x16x128xf32> to vector<256x128xf32>
    %15 = vector.extract_strided_slice %6 {offsets = [1, 1, 0], sizes = [16, 16, 128], strides = [1, 1, 1]} : vector<18x18x128xf32> to vector<16x16x128xf32>
    %16 = vector.shape_cast %15 : vector<16x16x128xf32> to vector<256x128xf32>
    %17 = vector.extract_strided_slice %6 {offsets = [1, 2, 0], sizes = [16, 16, 128], strides = [1, 1, 1]} : vector<18x18x128xf32> to vector<16x16x128xf32>
    %18 = vector.shape_cast %17 : vector<16x16x128xf32> to vector<256x128xf32>
    %19 = vector.extract_strided_slice %6 {offsets = [2, 0, 0], sizes = [16, 16, 128], strides = [1, 1, 1]} : vector<18x18x128xf32> to vector<16x16x128xf32>
    %20 = vector.shape_cast %19 : vector<16x16x128xf32> to vector<256x128xf32>
    %21 = vector.extract_strided_slice %6 {offsets = [2, 1, 0], sizes = [16, 16, 128], strides = [1, 1, 1]} : vector<18x18x128xf32> to vector<16x16x128xf32>
    %22 = vector.shape_cast %21 : vector<16x16x128xf32> to vector<256x128xf32>
    %23 = vector.extract_strided_slice %6 {offsets = [2, 2, 0], sizes = [16, 16, 128], strides = [1, 1, 1]} : vector<18x18x128xf32> to vector<16x16x128xf32>
    %24 = vector.shape_cast %23 : vector<16x16x128xf32> to vector<256x128xf32>
    %25 = tpu.concatenate %8, %10, %12, %14, %16, %18, %20, %22, %24 in 1 : vector<256x128xf32>, vector<256x128xf32>, vector<256x128xf32>, vector<256x128xf32>, vector<256x128xf32>, vector<256x128xf32>, vector<256x128xf32>, vector<256x128xf32>, vector<256x128xf32> -> vector<256x1152xf32>
    %26 = arith.truncf %25 : vector<256x1152xf32> to vector<256x1152xbf16>
    %c0_4 = arith.constant 0 : index
    %c0_5 = arith.constant 0 : index
    %27 = vector.load %arg2[%c0_4, %c0_5] : memref<1152x128xbf16, #tpu.memory_space<vmem>>, vector<1152x128xbf16>
    %cst_6 = arith.constant dense<0.000000e+00> : vector<256x128xf32>
    %28 = tpu.matmul %26, %27, %cst_6 {dimension_numbers = #tpu.dot_dimension_numbers<[1], [0], [0], [1], [0, 0, 1, 1], [], []>} : vector<256x1152xbf16>, vector<1152x128xbf16>, vector<256x128xf32> -> vector<256x128xf32>
    %c0_7 = arith.constant 0 : index
    %c0_8 = arith.constant 0 : index
    %29 = vector.load %arg3[%c0_7, %c0_8] : memref<1x128xf32, #tpu.memory_space<vmem>>, vector<1x128xf32>
    %30 = vector.broadcast %29 : vector<1x128xf32> to vector<256x128xf32>
    %31 = arith.addf %28, %30 : vector<256x128xf32>
    %cst_9 = arith.constant 0.000000e+00 : f32
    %32 = vector.broadcast %cst_9 : f32 to vector<256x128xf32>
    %33 = arith.maximumf %31, %32 : vector<256x128xf32>
    %34 = vector.shape_cast %33 : vector<256x128xf32> to vector<16x16x128xf32>
    %cst_10 = arith.constant 0.000000e+00 : f32
    %35 = vector.broadcast %cst_10 : f32 to vector<16x1x128xf32>
    %36 = tpu.concatenate %35, %34, %35 in 1 : vector<16x1x128xf32>, vector<16x16x128xf32>, vector<16x1x128xf32> -> vector<16x18x128xf32>
    %cst_11 = arith.constant 0.000000e+00 : f32
    %37 = vector.broadcast %cst_11 : f32 to vector<1x18x128xf32>
    %38 = tpu.concatenate %37, %36, %37 in 0 : vector<1x18x128xf32>, vector<16x18x128xf32>, vector<1x18x128xf32> -> vector<18x18x128xf32>
    %39 = vector.extract_strided_slice %38 {offsets = [0, 0, 0], sizes = [16, 16, 128], strides = [1, 1, 1]} : vector<18x18x128xf32> to vector<16x16x128xf32>
    %40 = vector.shape_cast %39 : vector<16x16x128xf32> to vector<256x128xf32>
    %41 = vector.extract_strided_slice %38 {offsets = [0, 1, 0], sizes = [16, 16, 128], strides = [1, 1, 1]} : vector<18x18x128xf32> to vector<16x16x128xf32>
    %42 = vector.shape_cast %41 : vector<16x16x128xf32> to vector<256x128xf32>
    %43 = vector.extract_strided_slice %38 {offsets = [0, 2, 0], sizes = [16, 16, 128], strides = [1, 1, 1]} : vector<18x18x128xf32> to vector<16x16x128xf32>
    %44 = vector.shape_cast %43 : vector<16x16x128xf32> to vector<256x128xf32>
    %45 = vector.extract_strided_slice %38 {offsets = [1, 0, 0], sizes = [16, 16, 128], strides = [1, 1, 1]} : vector<18x18x128xf32> to vector<16x16x128xf32>
    %46 = vector.shape_cast %45 : vector<16x16x128xf32> to vector<256x128xf32>
    %47 = vector.extract_strided_slice %38 {offsets = [1, 1, 0], sizes = [16, 16, 128], strides = [1, 1, 1]} : vector<18x18x128xf32> to vector<16x16x128xf32>
    %48 = vector.shape_cast %47 : vector<16x16x128xf32> to vector<256x128xf32>
    %49 = vector.extract_strided_slice %38 {offsets = [1, 2, 0], sizes = [16, 16, 128], strides = [1, 1, 1]} : vector<18x18x128xf32> to vector<16x16x128xf32>
    %50 = vector.shape_cast %49 : vector<16x16x128xf32> to vector<256x128xf32>
    %51 = vector.extract_strided_slice %38 {offsets = [2, 0, 0], sizes = [16, 16, 128], strides = [1, 1, 1]} : vector<18x18x128xf32> to vector<16x16x128xf32>
    %52 = vector.shape_cast %51 : vector<16x16x128xf32> to vector<256x128xf32>
    %53 = vector.extract_strided_slice %38 {offsets = [2, 1, 0], sizes = [16, 16, 128], strides = [1, 1, 1]} : vector<18x18x128xf32> to vector<16x16x128xf32>
    %54 = vector.shape_cast %53 : vector<16x16x128xf32> to vector<256x128xf32>
    %55 = vector.extract_strided_slice %38 {offsets = [2, 2, 0], sizes = [16, 16, 128], strides = [1, 1, 1]} : vector<18x18x128xf32> to vector<16x16x128xf32>
    %56 = vector.shape_cast %55 : vector<16x16x128xf32> to vector<256x128xf32>
    %57 = tpu.concatenate %40, %42, %44, %46, %48, %50, %52, %54, %56 in 1 : vector<256x128xf32>, vector<256x128xf32>, vector<256x128xf32>, vector<256x128xf32>, vector<256x128xf32>, vector<256x128xf32>, vector<256x128xf32>, vector<256x128xf32>, vector<256x128xf32> -> vector<256x1152xf32>
    %58 = arith.truncf %57 : vector<256x1152xf32> to vector<256x1152xbf16>
    %c0_12 = arith.constant 0 : index
    %c0_13 = arith.constant 0 : index
    %59 = vector.load %arg4[%c0_12, %c0_13] : memref<1152x128xbf16, #tpu.memory_space<vmem>>, vector<1152x128xbf16>
    %cst_14 = arith.constant dense<0.000000e+00> : vector<256x128xf32>
    %60 = tpu.matmul %58, %59, %cst_14 {dimension_numbers = #tpu.dot_dimension_numbers<[1], [0], [0], [1], [0, 0, 1, 1], [], []>} : vector<256x1152xbf16>, vector<1152x128xbf16>, vector<256x128xf32> -> vector<256x128xf32>
    %c0_15 = arith.constant 0 : index
    %c0_16 = arith.constant 0 : index
    %61 = vector.load %arg5[%c0_15, %c0_16] : memref<1x128xf32, #tpu.memory_space<vmem>>, vector<1x128xf32>
    %62 = vector.broadcast %61 : vector<1x128xf32> to vector<256x128xf32>
    %63 = arith.addf %60, %62 : vector<256x128xf32>
    %cst_17 = arith.constant 0.000000e+00 : f32
    %64 = vector.broadcast %cst_17 : f32 to vector<256x128xf32>
    %65 = arith.maximumf %63, %64 : vector<256x128xf32>
    %cst_18 = arith.constant dense<0.000000e+00> : vector<128xf32>
    %66 = vector.multi_reduction <add>, %65, %cst_18 [0] : vector<256x128xf32> to vector<128xf32>
    %67 = vector.shape_cast %66 : vector<128xf32> to vector<1x128xf32>
    %cst_19 = arith.constant 3.906250e-03 : f32
    %68 = vector.broadcast %cst_19 : f32 to vector<1x128xf32>
    %69 = arith.mulf %67, %68 : vector<1x128xf32>
    %70 = vector.shape_cast %69 : vector<1x128xf32> to vector<1x1x128xf32>
    %c0_20 = arith.constant 0 : index
    %c0_21 = arith.constant 0 : index
    %c0_22 = arith.constant 0 : index
    %71 = vector.load %arg6[%c0_20, %c0_21, %c0_22] : memref<1x1x128xf32, #tpu.memory_space<vmem>>, vector<1x1x128xf32>
    tpu.vector_store %arg6[%c0_20, %c0_21, %c0_22], %70 {strides = array<i32>} : memref<1x1x128xf32, #tpu.memory_space<vmem>>, vector<1x1x128xf32>,
    return
  }
  func.func @transform_0(%arg0: i32) -> (i32, i32, i32, i32) {
    %c0_i32 = arith.constant 0 : i32
    %c0_i32_0 = arith.constant 0 : i32
    %c0_i32_1 = arith.constant 0 : i32
    %c0_i32_2 = arith.constant 0 : i32
    return %arg0, %c0_i32, %c0_i32_0, %c0_i32_1 : i32, i32, i32, i32
  }
  func.func @transform_1(%arg0: i32) -> (i32, i32) {
    %c0_i32 = arith.constant 0 : i32
    %c0_i32_0 = arith.constant 0 : i32
    %c0_i32_1 = arith.constant 0 : i32
    return %c0_i32, %c0_i32_0 : i32, i32
  }
  func.func @transform_2(%arg0: i32) -> (i32, i32) {
    %c0_i32 = arith.constant 0 : i32
    %c0_i32_0 = arith.constant 0 : i32
    %c0_i32_1 = arith.constant 0 : i32
    return %c0_i32, %c0_i32_0 : i32, i32
  }
  func.func @transform_3(%arg0: i32) -> (i32, i32) {
    %c0_i32 = arith.constant 0 : i32
    %c0_i32_0 = arith.constant 0 : i32
    %c0_i32_1 = arith.constant 0 : i32
    return %c0_i32, %c0_i32_0 : i32, i32
  }
  func.func @transform_4(%arg0: i32) -> (i32, i32) {
    %c0_i32 = arith.constant 0 : i32
    %c0_i32_0 = arith.constant 0 : i32
    %c0_i32_1 = arith.constant 0 : i32
    return %c0_i32, %c0_i32_0 : i32, i32
  }
  func.func @transform_5(%arg0: i32) -> (i32, i32, i32) {
    %c0_i32 = arith.constant 0 : i32
    %c0_i32_0 = arith.constant 0 : i32
    %c0_i32_1 = arith.constant 0 : i32
    return %arg0, %c0_i32, %c0_i32_0 : i32, i32, i32
  }
}

</mosaic_0001>

<llo_original>
// kernel: feature_extractor_forward.1
$region0: #{feature_extractor_forward.1}
  #allocation0 [shape = 'u32[]', space=smem, size = 0x4, offset = 0x4, fixed_abs, tag = 'smem constant byte address 0x4 - core index']
  #allocation1 [shape = 'u32[72,128]{1,0:T(1,128)}', space=vmem, size = 0x9000, scoped, tag = 'internal scratch']
  %s0 = inlined_call_operand.vmem [shape: bf16[2,16,16,128], index: 0, kind: input, shape index: {}]
  %s1 = inlined_call_operand.vmem [shape: bf16[1152,128], index: 1, kind: input, shape index: {}]
  %s2 = inlined_call_operand.vmem [shape: f32[1,128], index: 2, kind: input, shape index: {}]
  %s3 = inlined_call_operand.vmem [shape: bf16[1152,128], index: 3, kind: input, shape index: {}]
  %s4 = inlined_call_operand.vmem [shape: f32[1,128], index: 4, kind: input, shape index: {}]
  %s5 = inlined_call_operand.hbm [shape: f32[2,1,128], index: 5, kind: output, shape index: {}]
  %s6 = sld [smem:[#allocation0]]
  $region53: #{feature_extractor_forward.1} parent=0
    _
  %s8 = ssub.s32 1, %s6
  %s9 = scalar_select 0, %s8, %s6
  $region1: #{feature_extractor_forward.1} parent=0
    #allocation2 [shape = 'u8[1024]{0}', space=vmem, size = 0x400, scoped, tag = 'output window, operand 0']
    #allocation3 [shape = 's32[2]{0}', space=sflag, size = 0x8, scoped, tag = 'scoped memory for feature_extractor_forward.1']
    %10 = vsyncpa [#allocation3], 0
    %s11 = scalar_lea.sflag [#allocation3], 1
    %12 = vsyncpa %s11, 0
    loop: start=0, step=1, limit=4
    $region2: #{feature_extractor_forward.1} parent=1 // loop_pre_header
      _
    $region3: #{feature_extractor_forward.1} parent=1 // loop_header
      %s14 = sphi 0, %s18
      %p15 = scmp.ge.s32.totalorder %s14, 4
      %s24 = sphi 0, %s26
      %s27 = sphi 0, %s24
      %s28 = sphi 0, %s27
      %s44 = sphi 0, %s28
      %s48 = sphi 0, %s48
      %s50 = sphi 0, %s48
      %s51 = sphi 0, %s50
      %s65 = sphi 0, %s51
      %s69 = sphi 0, %s69
      %s71 = sphi 0, %s69
      %s72 = sphi 0, %s71
      %s86 = sphi 0, %s72
      %s90 = sphi 0, %s90
      %s92 = sphi 0, %s90
      %s93 = sphi 0, %s92
      %s107 = sphi 0, %s93
      %s111 = sphi 0, %s111
      %s113 = sphi 0, %s111
      %s114 = sphi 0, %s113
      %s128 = sphi 0, %s114
      %s134 = sphi 0, %s136
      %s137 = sphi 0, %s134
      %s138 = sphi 0, %s137
      %s154 = sphi 0, %s138
    $region4: #{feature_extractor_forward.1} parent=1 // loop_header_branch
      %17 = sbr.rel (%p15) target = $region8
    $region5: #{feature_extractor_forward.1} parent=1 // loop_body
      %s19 = ssub.s32 %s14, 1
      %s20 = ssub.s32 %s14, 2
      %s21 = sadd.s32 %s14, 1
      %s22 = ssub.s32 %s14, %s21
      %p23 = scmp.eq.s32.totalorder %s22, 0
      %s25 = sadd.s32 %s24, 1
      %s26 = scalar_select %p23, %s24, %s25
      %p29 = pneg %p23
      %p30 = scmp.eq.s32.totalorder %s14, 1
      %p31 = por %p29, %p30
      %p32 = scmp.ne.s32.totalorder %s24, %s27
      %p33 = scmp.eq.s32.totalorder %s14, 0
      %p34 = por %p32, %p33
      %p35 = scmp.ne.s32.totalorder %s24, %s27
      %p36 = scmp.eq.s32.totalorder %s19, 1
      %p37 = por %p35, %p36
      %p38 = scmp.ne.s32.totalorder %s27, %s28
      %p39 = scmp.eq.s32.totalorder %s19, 0
      %p40 = por %p38, %p39
      %p41 = scmp.ne.s32.totalorder %s27, %s28
      %p42 = scmp.eq.s32.totalorder %s20, 1
      %p43 = por %p41, %p42
      %p45 = scmp.ne.s32.totalorder %s28, %s44
      %p46 = scmp.eq.s32.totalorder %s20, 0
      %p47 = por %p45, %p46
      %s49 = sadd.s32 %s48, 1
      %p52 = scmp.eq.s32.totalorder %s14, 1
      %p53 = scmp.ne.s32.totalorder %s48, %s50
      %p54 = scmp.eq.s32.totalorder %s14, 0
      %p55 = por %p53, %p54
      %p56 = scmp.ne.s32.totalorder %s48, %s50
      %p57 = scmp.eq.s32.totalorder %s19, 1
      %p58 = por %p56, %p57
      %p59 = scmp.ne.s32.totalorder %s50, %s51
      %p60 = scmp.eq.s32.totalorder %s19, 0
      %p61 = por %p59, %p60
      %p62 = scmp.ne.s32.totalorder %s50, %s51
      %p63 = scmp.eq.s32.totalorder %s20, 1
      %p64 = por %p62, %p63
      %p66 = scmp.ne.s32.totalorder %s51, %s65
      %p67 = scmp.eq.s32.totalorder %s20, 0
      %p68 = por %p66, %p67
      %s70 = sadd.s32 %s69, 1
      %p73 = scmp.eq.s32.totalorder %s14, 1
      %p74 = scmp.ne.s32.totalorder %s69, %s71
      %p75 = scmp.eq.s32.totalorder %s14, 0
      %p76 = por %p74, %p75
      %p77 = scmp.ne.s32.totalorder %s69, %s71
      %p78 = scmp.eq.s32.totalorder %s19, 1
      %p79 = por %p77, %p78
      %p80 = scmp.ne.s32.totalorder %s71, %s72
      %p81 = scmp.eq.s32.totalorder %s19, 0
      %p82 = por %p80, %p81
      %p83 = scmp.ne.s32.totalorder %s71, %s72
      %p84 = scmp.eq.s32.totalorder %s20, 1
      %p85 = por %p83, %p84
      %p87 = scmp.ne.s32.totalorder %s72, %s86
      %p88 = scmp.eq.s32.totalorder %s20, 0
      %p89 = por %p87, %p88
      %s91 = sadd.s32 %s90, 1
      %p94 = scmp.eq.s32.totalorder %s14, 1
      %p95 = scmp.ne.s32.totalorder %s90, %s92
      %p96 = scmp.eq.s32.totalorder %s14, 0
      %p97 = por %p95, %p96
      %p98 = scmp.ne.s32.totalorder %s90, %s92
      %p99 = scmp.eq.s32.totalorder %s19, 1
      %p100 = por %p98, %p99
      %p101 = scmp.ne.s32.totalorder %s92, %s93
      %p102 = scmp.eq.s32.totalorder %s19, 0
      %p103 = por %p101, %p102
      %p104 = scmp.ne.s32.totalorder %s92, %s93
      %p105 = scmp.eq.s32.totalorder %s20, 1
      %p106 = por %p104, %p105
      %p108 = scmp.ne.s32.totalorder %s93, %s107
      %p109 = scmp.eq.s32.totalorder %s20, 0
      %p110 = por %p108, %p109
      %s112 = sadd.s32 %s111, 1
      %p115 = scmp.eq.s32.totalorder %s14, 1
      %p116 = scmp.ne.s32.totalorder %s111, %s113
      %p117 = scmp.eq.s32.totalorder %s14, 0
      %p118 = por %p116, %p117
      %p119 = scmp.ne.s32.totalorder %s111, %s113
      %p120 = scmp.eq.s32.totalorder %s19, 1
      %p121 = por %p119, %p120
      %p122 = scmp.ne.s32.totalorder %s113, %s114
      %p123 = scmp.eq.s32.totalorder %s19, 0
      %p124 = por %p122, %p123
      %p125 = scmp.ne.s32.totalorder %s113, %s114
      %p126 = scmp.eq.s32.totalorder %s20, 1
      %p127 = por %p125, %p126
      %p129 = scmp.ne.s32.totalorder %s114, %s128
      %p130 = scmp.eq.s32.totalorder %s20, 0
      %p131 = por %p129, %p130
      %s132 = ssub.s32 %s14, %s21
      %p133 = scmp.eq.s32.totalorder %s132, 0
      %s135 = sadd.s32 %s134, 1
      %s136 = scalar_select %p133, %s134, %s135
      %p139 = pneg %p133
      %p140 = scmp.eq.s32.totalorder %s14, 1
      %p141 = por %p139, %p140
      %p142 = scmp.ne.s32.totalorder %s134, %s137
      %p143 = scmp.eq.s32.totalorder %s14, 0
      %p144 = por %p142, %p143
      %p145 = scmp.ne.s32.totalorder %s134, %s137
      %p146 = scmp.eq.s32.totalorder %s19, 1
      %p147 = por %p145, %p146
      %p148 = scmp.ne.s32.totalorder %s137, %s138
      %p149 = scmp.eq.s32.totalorder %s19, 0
      %p150 = por %p148, %p149
      %p151 = scmp.ne.s32.totalorder %s137, %s138
      %p152 = scmp.eq.s32.totalorder %s20, 1
      %p153 = por %p151, %p152
      %p155 = scmp.ne.s32.totalorder %s138, %s154
      %p156 = scmp.eq.s32.totalorder %s20, 0
      %p157 = por %p155, %p156
      %p158 = scmp.le.s32.totalorder 1, %s14
      %p159 = scmp.lt.s32.totalorder %s14, 3
      %p160 = pnand %p158, %p159
      %p161 = pneg %p160
      // Predicated region
      $region9: #{feature_extractor_forward.1} parent=5 // pred_check
        _
      $region10: #{feature_extractor_forward.1} parent=5 // pred_check_branch
        %163 = sbr.rel (%p160) target = $region12
      $region11: #{feature_extractor_forward.1} parent=5 // pred_region
        %s164 = ssub.s32 %s14, 1
        // Predicated region
        $region13: #{feature_extractor_forward.1} parent=11 // pred_check
          %p165 = pneg %p61
        $region14: #{feature_extractor_forward.1} parent=11 // pred_check_branch
          %167 = sbr.rel (%p165) target = $region16
        $region15: #{feature_extractor_forward.1} parent=11 // pred_region
          _
        $region16: #{feature_extractor_forward.1} parent=11 // pred_fallthru
          _
        // Predicated region
        $region17: #{feature_extractor_forward.1} parent=11 // pred_check
          %p168 = pneg %p82
        $region18: #{feature_extractor_forward.1} parent=11 // pred_check_branch
          %170 = sbr.rel (%p168) target = $region20
        $region19: #{feature_extractor_forward.1} parent=11 // pred_region
          _
        $region20: #{feature_extractor_forward.1} parent=11 // pred_fallthru
          _
        // Predicated region
        $region21: #{feature_extractor_forward.1} parent=11 // pred_check
          %p171 = pneg %p103
        $region22: #{feature_extractor_forward.1} parent=11 // pred_check_branch
          %173 = sbr.rel (%p171) target = $region24
        $region23: #{feature_extractor_forward.1} parent=11 // pred_region
          _
        $region24: #{feature_extractor_forward.1} parent=11 // pred_fallthru
          _
        // Predicated region
        $region25: #{feature_extractor_forward.1} parent=11 // pred_check
          %p174 = pneg %p124
        $region26: #{feature_extractor_forward.1} parent=11 // pred_check_branch
          %176 = sbr.rel (%p174) target = $region28
        $region27: #{feature_extractor_forward.1} parent=11 // pred_region
          _
        $region28: #{feature_extractor_forward.1} parent=11 // pred_fallthru
          _
      $region12: #{feature_extractor_forward.1} parent=5 // pred_fallthru
        _
      %p177 = scmp.lt.s32.totalorder %s14, 2
      // Predicated region
      $region29: #{feature_extractor_forward.1} parent=5 // pred_check
        %p178 = pneg %p177
      $region30: #{feature_extractor_forward.1} parent=5 // pred_check_branch
        %180 = sbr.rel (%p178) target = $region32
      $region31: #{feature_extractor_forward.1} parent=5 // pred_region
        // Predicated region
        $region33: #{feature_extractor_forward.1} parent=31 // pred_check
          %p181 = pneg %p34
        $region34: #{feature_extractor_forward.1} parent=31 // pred_check_branch
          %183 = sbr.rel (%p181) target = $region36
        $region35: #{feature_extractor_forward.1} parent=31 // pred_region
          %p184 = scmp.lt.s32.totalorder %s14, 1
          %s185 = scalar_select %p184, %s14, 1
          %s186 = smul.addr %s185, 32
          %s187 = smul.addr %s186, 4
          %s188 = scalar_lea.vmem %s0, %s187
        $region36: #{feature_extractor_forward.1} parent=31 // pred_fallthru
          _
      $region32: #{feature_extractor_forward.1} parent=5 // pred_fallthru
        _
      %p189 = scmp.le.s32.totalorder 1, %s14
      %p190 = scmp.lt.s32.totalorder %s14, 3
      %p191 = pnand %p189, %p190
      %p192 = pneg %p191
      // Predicated region
      $region37: #{feature_extractor_forward.1} parent=5 // pred_check
        _
      $region38: #{feature_extractor_forward.1} parent=5 // pred_check_branch
        %194 = sbr.rel (%p191) target = $region40
      $region39: #{feature_extractor_forward.1} parent=5 // pred_region
        %s195 = ssub.s32 %s14, 1
        %p196 = scmp.lt.s32.totalorder %s19, 1
        %s197 = scalar_select %p196, %s19, 1
        %s198 = smul.addr %s197, 32
        %s199 = smul.addr %s198, 4
        %s200 = scalar_lea.vmem %s0, %s199
        %p201 = pneg %p40
        %p202 = pneg %p37
        %p203 = pneg %p61
        %p204 = pneg %p58
        %p205 = pneg %p82
        %p206 = pneg %p79
        %p207 = pneg %p103
        %p208 = pneg %p100
        %p209 = pneg %p124
        %p210 = pneg %p121
        %p211 = pneg %p150
        %p212 = pneg %p147
        %s213 = sand.u32 %s137, 1
        %s214 = scalar_lea.sflag [#allocation3], %s213
        %s215 = sand.u32 %s137, 1
        %s216 = scalar_lea.vmem [#allocation2], %s215
        %p217 = scmp.lt.s32.totalorder %s19, 1
        %s218 = scalar_select %p217, %s19, 1
        %s219 = smul.addr %s218, 32
        %s220 = smul.addr %s219, 4
        %s221 = scalar_lea.vmem %s0, %s220
        %v222 = vld [vmem:[%s221] sm:$0xf]
        %v223 = vld [vmem:[%s221 + $0x4] sm:$0xf]
        %v224 = vld [vmem:[%s221 + $0x8] sm:$0xf]
        %v225 = vld [vmem:[%s221 + $0xc] sm:$0xf]
        %v226 = vld [vmem:[%s221 + $0x10] sm:$0xf]
        %v227 = vld [vmem:[%s221 + $0x14] sm:$0xf]
        %v228 = vld [vmem:[%s221 + $0x18] sm:$0xf]
        %v229 = vld [vmem:[%s221 + $0x1c] sm:$0xf]
        %v230 = vld [vmem:[%s221 + $0x20] sm:$0xf]
        %v231 = vld [vmem:[%s221 + $0x24] sm:$0xf]
        %v232 = vld [vmem:[%s221 + $0x28] sm:$0xf]
        %v233 = vld [vmem:[%s221 + $0x2c] sm:$0xf]
        %v234 = vld [vmem:[%s221 + $0x30] sm:$0xf]
        %v235 = vld [vmem:[%s221 + $0x34] sm:$0xf]
        %v236 = vld [vmem:[%s221 + $0x38] sm:$0xf]
        %v237 = vld [vmem:[%s221 + $0x3c] sm:$0xf]
        %v238 = vld [vmem:[%s221 + $0x40] sm:$0xf]
        %v239 = vld [vmem:[%s221 + $0x44] sm:$0xf]
        %v240 = vld [vmem:[%s221 + $0x48] sm:$0xf]
        %v241 = vld [vmem:[%s221 + $0x4c] sm:$0xf]
        %v242 = vld [vmem:[%s221 + $0x50] sm:$0xf]
        %v243 = vld [vmem:[%s221 + $0x54] sm:$0xf]
        %v244 = vld [vmem:[%s221 + $0x58] sm:$0xf]
        %v245 = vld [vmem:[%s221 + $0x5c] sm:$0xf]
        %v246 = vld [vmem:[%s221 + $0x60] sm:$0xf]
        %v247 = vld [vmem:[%s221 + $0x64] sm:$0xf]
        %v248 = vld [vmem:[%s221 + $0x68] sm:$0xf]
        %v249 = vld [vmem:[%s221 + $0x6c] sm:$0xf]
        %v250 = vld [vmem:[%s221 + $0x70] sm:$0xf]
        %v251 = vld [vmem:[%s221 + $0x74] sm:$0xf]
        %v252 = vld [vmem:[%s221 + $0x78] sm:$0xf]
        %v253 = vld [vmem:[%s221 + $0x7c] sm:$0xf]
        %v254 = vunpack.c.l.bf16 %v222
        %v255 = vunpack.c.l.bf16 %v223
        %v256 = vunpack.c.l.bf16 %v224
        %v257 = vunpack.c.l.bf16 %v225
        %v258 = vunpack.c.l.bf16 %v226
        %v259 = vunpack.c.l.bf16 %v227
        %v260 = vunpack.c.l.bf16 %v228
        %v261 = vunpack.c.l.bf16 %v229
        %v262 = vunpack.c.l.bf16 %v230
        %v263 = vunpack.c.l.bf16 %v231
        %v264 = vunpack.c.l.bf16 %v232
        %v265 = vunpack.c.l.bf16 %v233
        %v266 = vunpack.c.l.bf16 %v234
        %v267 = vunpack.c.l.bf16 %v235
        %v268 = vunpack.c.l.bf16 %v236
        %v269 = vunpack.c.l.bf16 %v237
        %v270 = vunpack.c.l.bf16 %v238
        %v271 = vunpack.c.l.bf16 %v239
        %v272 = vunpack.c.l.bf16 %v240
        %v273 = vunpack.c.l.bf16 %v241
        %v274 = vunpack.c.l.bf16 %v242
        %v275 = vunpack.c.l.bf16 %v243
        %v276 = vunpack.c.l.bf16 %v244
        %v277 = vunpack.c.l.bf16 %v245
        %v278 = vunpack.c.l.bf16 %v246
        %v279 = vunpack.c.l.bf16 %v247
        %v280 = vunpack.c.l.bf16 %v248
        %v281 = vunpack.c.l.bf16 %v249
        %v282 = vunpack.c.l.bf16 %v250
        %v283 = vunpack.c.l.bf16 %v251
        %v284 = vunpack.c.l.bf16 %v252
        %v285 = vunpack.c.l.bf16 %v253
        %vm318 = vcmask 1040384
        %v319 = vrot.slane %v254, 7
        %v320 = vrot.slane %v255, 7
        %v321 = vsel %vm318, %v319, %v320
        %v322 = vrot.slane %v256, 7
        %v323 = vrot.slane %v257, 7
        %v324 = vsel %vm318, %v322, %v323
        %v325 = vrot.slane %v258, 7
        %v326 = vrot.slane %v259, 7
        %v327 = vsel %vm318, %v325, %v326
        %v328 = vrot.slane %v260, 7
        %v329 = vrot.slane %v261, 7
        %v330 = vsel %vm318, %v328, %v329
        %v331 = vrot.slane %v262, 7
        %v332 = vrot.slane %v263, 7
        %v333 = vsel %vm318, %v331, %v332
        %v334 = vrot.slane %v264, 7
        %v335 = vrot.slane %v265, 7
        %v336 = vsel %vm318, %v334, %v335
        %v337 = vrot.slane %v266, 7
        %v338 = vrot.slane %v267, 7
        %v339 = vsel %vm318, %v337, %v338
        %v340 = vrot.slane %v268, 7
        %v341 = vrot.slane %v269, 7
        %v342 = vsel %vm318, %v340, %v341
        %v343 = vrot.slane %v270, 7
        %v344 = vrot.slane %v271, 7
        %v345 = vsel %vm318, %v343, %v344
        %v346 = vrot.slane %v272, 7
        %v347 = vrot.slane %v273, 7
        %v348 = vsel %vm318, %v346, %v347
        %v349 = vrot.slane %v274, 7
        %v350 = vrot.slane %v275, 7
        %v351 = vsel %vm318, %v349, %v350
        %v352 = vrot.slane %v276, 7
        %v353 = vrot.slane %v277, 7
        %v354 = vsel %vm318, %v352, %v353
        %v355 = vrot.slane %v278, 7
        %v356 = vrot.slane %v279, 7
        %v357 = vsel %vm318, %v355, %v356
        %v358 = vrot.slane %v280, 7
        %v359 = vrot.slane %v281, 7
        %v360 = vsel %vm318, %v358, %v359
        %v361 = vrot.slane %v282, 7
        %v362 = vrot.slane %v283, 7
        %v363 = vsel %vm318, %v361, %v362
        %v364 = vrot.slane %v284, 7
        %v365 = vrot.slane %v285, 7
        %v366 = vsel %vm318, %v364, %v365
        %v415 = vsel %vm318, 0.0, %v319
        %v416 = vsel %vm318, 0.0, %v322
        %v417 = vsel %vm318, 0.0, %v325
        %v418 = vsel %vm318, 0.0, %v328
        %v419 = vsel %vm318, 0.0, %v331
        %v420 = vsel %vm318, 0.0, %v334
        %v421 = vsel %vm318, 0.0, %v337
        %v422 = vsel %vm318, 0.0, %v340
        %v423 = vsel %vm318, 0.0, %v343
        %v424 = vsel %vm318, 0.0, %v346
        %v425 = vsel %vm318, 0.0, %v349
        %v426 = vsel %vm318, 0.0, %v352
        %v427 = vsel %vm318, 0.0, %v355
        %v428 = vsel %vm318, 0.0, %v358
        %v429 = vsel %vm318, 0.0, %v361
        %v430 = vsel %vm318, 0.0, %v364
        %v431 = vsel %vm318, %v320, 0.0
        %v432 = vsel %vm318, %v323, 0.0
        %v433 = vsel %vm318, %v326, 0.0
        %v434 = vsel %vm318, %v329, 0.0
        %v435 = vsel %vm318, %v332, 0.0
        %v436 = vsel %vm318, %v335, 0.0
        %v437 = vsel %vm318, %v338, 0.0
        %v438 = vsel %vm318, %v341, 0.0
        %v439 = vsel %vm318, %v344, 0.0
        %v440 = vsel %vm318, %v347, 0.0
        %v441 = vsel %vm318, %v350, 0.0
        %v442 = vsel %vm318, %v353, 0.0
        %v443 = vsel %vm318, %v356, 0.0
        %v444 = vsel %vm318, %v359, 0.0
        %v445 = vsel %vm318, %v362, 0.0
        %v446 = vsel %vm318, %v365, 0.0
        %vm478 = vcmask 1046528
        %v479 = vrot.slane 0.0, 1
        %v480 = vsel %vm478, %v479, %v479
        %v481 = vrot.slane %v415, 1
        %v482 = vrot.slane %v321, 1
        %v483 = vsel %vm478, %v481, %v482
        %v484 = vrot.slane %v431, 1
        %v485 = vsel %vm478, %v482, %v484
        %v486 = vrot.slane %v416, 1
        %v487 = vrot.slane %v324, 1
        %v488 = vsel %vm478, %v486, %v487
        %v489 = vrot.slane %v432, 1
        %v490 = vsel %vm478, %v487, %v489
        %v491 = vrot.slane %v417, 1
        %v492 = vrot.slane %v327, 1
        %v493 = vsel %vm478, %v491, %v492
        %v494 = vrot.slane %v433, 1
        %v495 = vsel %vm478, %v492, %v494
        %v496 = vrot.slane %v418, 1
        %v497 = vrot.slane %v330, 1
        %v498 = vsel %vm478, %v496, %v497
        %v499 = vrot.slane %v434, 1
        %v500 = vsel %vm478, %v497, %v499
        %v501 = vrot.slane %v419, 1
        %v502 = vrot.slane %v333, 1
        %v503 = vsel %vm478, %v501, %v502
        %v504 = vrot.slane %v435, 1
        %v505 = vsel %vm478, %v502, %v504
        %v506 = vrot.slane %v420, 1
        %v507 = vrot.slane %v336, 1
        %v508 = vsel %vm478, %v506, %v507
        %v509 = vrot.slane %v436, 1
        %v510 = vsel %vm478, %v507, %v509
        %v511 = vrot.slane %v421, 1
        %v512 = vrot.slane %v339, 1
        %v513 = vsel %vm478, %v511, %v512
        %v514 = vrot.slane %v437, 1
        %v515 = vsel %vm478, %v512, %v514
        %v516 = vrot.slane %v422, 1
        %v517 = vrot.slane %v342, 1
        %v518 = vsel %vm478, %v516, %v517
        %v519 = vrot.slane %v438, 1
        %v520 = vsel %vm478, %v517, %v519
        %v521 = vrot.slane %v423, 1
        %v522 = vrot.slane %v345, 1
        %v523 = vsel %vm478, %v521, %v522
        %v524 = vrot.slane %v439, 1
        %v525 = vsel %vm478, %v522, %v524
        %v526 = vrot.slane %v424, 1
        %v527 = vrot.slane %v348, 1
        %v528 = vsel %vm478, %v526, %v527
        %v529 = vrot.slane %v440, 1
        %v530 = vsel %vm478, %v527, %v529
        %v531 = vrot.slane %v425, 1
        %v532 = vrot.slane %v351, 1
        %v533 = vsel %vm478, %v531, %v532
        %v534 = vrot.slane %v441, 1
        %v535 = vsel %vm478, %v532, %v534
        %v536 = vrot.slane %v426, 1
        %v537 = vrot.slane %v354, 1
        %v538 = vsel %vm478, %v536, %v537
        %v539 = vrot.slane %v442, 1
        %v540 = vsel %vm478, %v537, %v539
        %v541 = vrot.slane %v427, 1
        %v542 = vrot.slane %v357, 1
        %v543 = vsel %vm478, %v541, %v542
        %v544 = vrot.slane %v443, 1
        %v545 = vsel %vm478, %v542, %v544
        %v546 = vrot.slane %v428, 1
        %v547 = vrot.slane %v360, 1
        %v548 = vsel %vm478, %v546, %v547
        %v549 = vrot.slane %v444, 1
        %v550 = vsel %vm478, %v547, %v549
        %v551 = vrot.slane %v429, 1
        %v552 = vrot.slane %v363, 1
        %v553 = vsel %vm478, %v551, %v552
        %v554 = vrot.slane %v445, 1
        %v555 = vsel %vm478, %v552, %v554
        %vm587 = vcmask 1045504
        %v588 = vrot.slane 0.0, 2
        %v589 = vsel %vm587, %v588, %v588
        %v590 = vrot.slane %v415, 2
        %v591 = vrot.slane %v321, 2
        %v592 = vsel %vm587, %v590, %v591
        %v593 = vrot.slane %v431, 2
        %v594 = vsel %vm587, %v591, %v593
        %v595 = vrot.slane %v416, 2
        %v596 = vrot.slane %v324, 2
        %v597 = vsel %vm587, %v595, %v596
        %v598 = vrot.slane %v432, 2
        %v599 = vsel %vm587, %v596, %v598
        %v600 = vrot.slane %v417, 2
        %v601 = vrot.slane %v327, 2
        %v602 = vsel %vm587, %v600, %v601
        %v603 = vrot.slane %v433, 2
        %v604 = vsel %vm587, %v601, %v603
        %v605 = vrot.slane %v418, 2
        %v606 = vrot.slane %v330, 2
        %v607 = vsel %vm587, %v605, %v606
        %v608 = vrot.slane %v434, 2
        %v609 = vsel %vm587, %v606, %v608
        %v610 = vrot.slane %v419, 2
        %v611 = vrot.slane %v333, 2
        %v612 = vsel %vm587, %v610, %v611
        %v613 = vrot.slane %v435, 2
        %v614 = vsel %vm587, %v611, %v613
        %v615 = vrot.slane %v420, 2
        %v616 = vrot.slane %v336, 2
        %v617 = vsel %vm587, %v615, %v616
        %v618 = vrot.slane %v436, 2
        %v619 = vsel %vm587, %v616, %v618
        %v620 = vrot.slane %v421, 2
        %v621 = vrot.slane %v339, 2
        %v622 = vsel %vm587, %v620, %v621
        %v623 = vrot.slane %v437, 2
        %v624 = vsel %vm587, %v621, %v623
        %v625 = vrot.slane %v422, 2
        %v626 = vrot.slane %v342, 2
        %v627 = vsel %vm587, %v625, %v626
        %v628 = vrot.slane %v438, 2
        %v629 = vsel %vm587, %v626, %v628
        %v630 = vrot.slane %v423, 2
        %v631 = vrot.slane %v345, 2
        %v632 = vsel %vm587, %v630, %v631
        %v633 = vrot.slane %v439, 2
        %v634 = vsel %vm587, %v631, %v633
        %v635 = vrot.slane %v424, 2
        %v636 = vrot.slane %v348, 2
        %v637 = vsel %vm587, %v635, %v636
        %v638 = vrot.slane %v440, 2
        %v639 = vsel %vm587, %v636, %v638
        %v640 = vrot.slane %v425, 2
        %v641 = vrot.slane %v351, 2
        %v642 = vsel %vm587, %v640, %v641
        %v643 = vrot.slane %v441, 2
        %v644 = vsel %vm587, %v641, %v643
        %v645 = vrot.slane %v426, 2
        %v646 = vrot.slane %v354, 2
        %v647 = vsel %vm587, %v645, %v646
        %v648 = vrot.slane %v442, 2
        %v649 = vsel %vm587, %v646, %v648
        %v650 = vrot.slane %v427, 2
        %v651 = vrot.slane %v357, 2
        %v652 = vsel %vm587, %v650, %v651
        %v653 = vrot.slane %v443, 2
        %v654 = vsel %vm587, %v651, %v653
        %v655 = vrot.slane %v428, 2
        %v656 = vrot.slane %v360, 2
        %v657 = vsel %vm587, %v655, %v656
        %v658 = vrot.slane %v444, 2
        %v659 = vsel %vm587, %v656, %v658
        %v660 = vrot.slane %v429, 2
        %v661 = vrot.slane %v363, 2
        %v662 = vsel %vm587, %v660, %v661
        %v663 = vrot.slane %v445, 2
        %v664 = vsel %vm587, %v661, %v663
        %v698 = vrot.slane %v430, 1
        %v699 = vrot.slane %v366, 1
        %v700 = vsel %vm478, %v698, %v699
        %v701 = vrot.slane %v446, 1
        %v702 = vsel %vm478, %v699, %v701
        %v705 = vrot.slane %v430, 2
        %v706 = vrot.slane %v366, 2
        %v707 = vsel %vm587, %v705, %v706
        %v708 = vrot.slane %v446, 2
        %v709 = vsel %vm587, %v706, %v708
        %v712 = vpack.c.bf16 0.0, 0.0
        %v713 = vpack.c.bf16 %v480, %v480
        %v714 = vpack.c.bf16 %v589, %v589
        %v715 = vpack.c.bf16 %v321, %v415
        %v716 = vpack.c.bf16 %v485, %v483
        %v717 = vpack.c.bf16 %v594, %v592
        %v718 = vpack.c.bf16 %v324, %v416
        %v719 = vpack.c.bf16 %v490, %v488
        %v720 = vpack.c.bf16 %v599, %v597
        %v721 = vpack.c.bf16 %v327, %v417
        %v722 = vpack.c.bf16 %v495, %v493
        %v723 = vpack.c.bf16 %v604, %v602
        %v724 = vpack.c.bf16 %v330, %v418
        %v725 = vpack.c.bf16 %v500, %v498
        %v726 = vpack.c.bf16 %v609, %v607
        %v727 = vpack.c.bf16 %v333, %v419
        %v728 = vpack.c.bf16 %v505, %v503
        %v729 = vpack.c.bf16 %v614, %v612
        %v730 = vpack.c.bf16 %v336, %v420
        %v731 = vpack.c.bf16 %v510, %v508
        %v732 = vpack.c.bf16 %v619, %v617
        %v733 = vpack.c.bf16 %v339, %v421
        %v734 = vpack.c.bf16 %v515, %v513
        %v735 = vpack.c.bf16 %v624, %v622
        %v736 = vpack.c.bf16 %v342, %v422
        %v737 = vpack.c.bf16 %v520, %v518
        %v738 = vpack.c.bf16 %v629, %v627
        %v739 = vpack.c.bf16 %v345, %v423
        %v740 = vpack.c.bf16 %v525, %v523
        %v741 = vpack.c.bf16 %v634, %v632
        %v742 = vpack.c.bf16 %v348, %v424
        %v743 = vpack.c.bf16 %v530, %v528
        %v744 = vpack.c.bf16 %v639, %v637
        %v745 = vpack.c.bf16 %v351, %v425
        %v746 = vpack.c.bf16 %v535, %v533
        %v747 = vpack.c.bf16 %v644, %v642
        %v748 = vpack.c.bf16 %v354, %v426
        %v749 = vpack.c.bf16 %v540, %v538
        %v750 = vpack.c.bf16 %v649, %v647
        %v751 = vpack.c.bf16 %v357, %v427
        %v752 = vpack.c.bf16 %v545, %v543
        %v753 = vpack.c.bf16 %v654, %v652
        %v754 = vpack.c.bf16 %v360, %v428
        %v755 = vpack.c.bf16 %v550, %v548
        %v756 = vpack.c.bf16 %v659, %v657
        %v757 = vpack.c.bf16 %v363, %v429
        %v758 = vpack.c.bf16 %v555, %v553
        %v759 = vpack.c.bf16 %v664, %v662
        %v760 = vpack.c.bf16 %v366, %v430
        %v761 = vpack.c.bf16 %v702, %v700
        %v762 = vpack.c.bf16 %v709, %v707
        %v763 = vld [vmem:[%s1] sm:$0xf]
        %v764 = vld [vmem:[%s1 + $0x4] sm:$0xf]
        %v765 = vld [vmem:[%s1 + $0x8] sm:$0xf]
        %v766 = vld [vmem:[%s1 + $0xc] sm:$0xf]
        %v767 = vld [vmem:[%s1 + $0x10] sm:$0xf]
        %v768 = vld [vmem:[%s1 + $0x14] sm:$0xf]
        %v769 = vld [vmem:[%s1 + $0x18] sm:$0xf]
        %v770 = vld [vmem:[%s1 + $0x1c] sm:$0xf]
        %v771 = vld [vmem:[%s1 + $0x20] sm:$0xf]
        %v772 = vld [vmem:[%s1 + $0x24] sm:$0xf]
        %v773 = vld [vmem:[%s1 + $0x28] sm:$0xf]
        %v774 = vld [vmem:[%s1 + $0x2c] sm:$0xf]
        %v775 = vld [vmem:[%s1 + $0x30] sm:$0xf]
        %v776 = vld [vmem:[%s1 + $0x34] sm:$0xf]
        %v777 = vld [vmem:[%s1 + $0x38] sm:$0xf]
        %v778 = vld [vmem:[%s1 + $0x3c] sm:$0xf]
        %v779 = vld [vmem:[%s1 + $0x40] sm:$0xf]
        %v780 = vld [vmem:[%s1 + $0x44] sm:$0xf]
        %v781 = vld [vmem:[%s1 + $0x48] sm:$0xf]
        %v782 = vld [vmem:[%s1 + $0x4c] sm:$0xf]
        %v783 = vld [vmem:[%s1 + $0x50] sm:$0xf]
        %v784 = vld [vmem:[%s1 + $0x54] sm:$0xf]
        %v785 = vld [vmem:[%s1 + $0x58] sm:$0xf]
        %v786 = vld [vmem:[%s1 + $0x5c] sm:$0xf]
        %v787 = vld [vmem:[%s1 + $0x60] sm:$0xf]
        %v788 = vld [vmem:[%s1 + $0x64] sm:$0xf]
        %v789 = vld [vmem:[%s1 + $0x68] sm:$0xf]
        %v790 = vld [vmem:[%s1 + $0x6c] sm:$0xf]
        %v791 = vld [vmem:[%s1 + $0x70] sm:$0xf]
        %v792 = vld [vmem:[%s1 + $0x74] sm:$0xf]
        %v793 = vld [vmem:[%s1 + $0x78] sm:$0xf]
        %v794 = vld [vmem:[%s1 + $0x7c] sm:$0xf]
        %v795 = vld [vmem:[%s1 + $0x80] sm:$0xf]
        %v796 = vld [vmem:[%s1 + $0x84] sm:$0xf]
        %v797 = vld [vmem:[%s1 + $0x88] sm:$0xf]
        %v798 = vld [vmem:[%s1 + $0x8c] sm:$0xf]
        %v799 = vld [vmem:[%s1 + $0x90] sm:$0xf]
        %v800 = vld [vmem:[%s1 + $0x94] sm:$0xf]
        %v801 = vld [vmem:[%s1 + $0x98] sm:$0xf]
        %v802 = vld [vmem:[%s1 + $0x9c] sm:$0xf]
        %v803 = vld [vmem:[%s1 + $0xa0] sm:$0xf]
        %v804 = vld [vmem:[%s1 + $0xa4] sm:$0xf]
        %v805 = vld [vmem:[%s1 + $0xa8] sm:$0xf]
        %v806 = vld [vmem:[%s1 + $0xac] sm:$0xf]
        %v807 = vld [vmem:[%s1 + $0xb0] sm:$0xf]
        %v808 = vld [vmem:[%s1 + $0xb4] sm:$0xf]
        %v809 = vld [vmem:[%s1 + $0xb8] sm:$0xf]
        %v810 = vld [vmem:[%s1 + $0xbc] sm:$0xf]
        %v811 = vld [vmem:[%s1 + $0xc0] sm:$0xf]
        %v812 = vld [vmem:[%s1 + $0xc4] sm:$0xf]
        %v813 = vld [vmem:[%s1 + $0xc8] sm:$0xf]
        %v814 = vld [vmem:[%s1 + $0xcc] sm:$0xf]
        %v815 = vld [vmem:[%s1 + $0xd0] sm:$0xf]
        %v816 = vld [vmem:[%s1 + $0xd4] sm:$0xf]
        %v817 = vld [vmem:[%s1 + $0xd8] sm:$0xf]
        %v818 = vld [vmem:[%s1 + $0xdc] sm:$0xf]
        %v819 = vld [vmem:[%s1 + $0xe0] sm:$0xf]
        %v820 = vld [vmem:[%s1 + $0xe4] sm:$0xf]
        %v821 = vld [vmem:[%s1 + $0xe8] sm:$0xf]
        %v822 = vld [vmem:[%s1 + $0xec] sm:$0xf]
        %v823 = vld [vmem:[%s1 + $0xf0] sm:$0xf]
        %v824 = vld [vmem:[%s1 + $0xf4] sm:$0xf]
        %v825 = vld [vmem:[%s1 + $0xf8] sm:$0xf]
        %v826 = vld [vmem:[%s1 + $0xfc] sm:$0xf]
        %v827 = vld [vmem:[%s1 + $0x100] sm:$0xf]
        %v828 = vld [vmem:[%s1 + $0x104] sm:$0xf]
        %v829 = vld [vmem:[%s1 + $0x108] sm:$0xf]
        %v830 = vld [vmem:[%s1 + $0x10c] sm:$0xf]
        %v831 = vld [vmem:[%s1 + $0x110] sm:$0xf]
        %v832 = vld [vmem:[%s1 + $0x114] sm:$0xf]
        %v833 = vld [vmem:[%s1 + $0x118] sm:$0xf]
        %v834 = vld [vmem:[%s1 + $0x11c] sm:$0xf]
        %v835 = vld [vmem:[%s1 + $0x120] sm:$0xf]
        %v836 = vld [vmem:[%s1 + $0x124] sm:$0xf]
        %v837 = vld [vmem:[%s1 + $0x128] sm:$0xf]
        %v838 = vld [vmem:[%s1 + $0x12c] sm:$0xf]
        %v839 = vld [vmem:[%s1 + $0x130] sm:$0xf]
        %v840 = vld [vmem:[%s1 + $0x134] sm:$0xf]
        %v841 = vld [vmem:[%s1 + $0x138] sm:$0xf]
        %v842 = vld [vmem:[%s1 + $0x13c] sm:$0xf]
        %v843 = vld [vmem:[%s1 + $0x140] sm:$0xf]
        %v844 = vld [vmem:[%s1 + $0x144] sm:$0xf]
        %v845 = vld [vmem:[%s1 + $0x148] sm:$0xf]
        %v846 = vld [vmem:[%s1 + $0x14c] sm:$0xf]
        %v847 = vld [vmem:[%s1 + $0x150] sm:$0xf]
        %v848 = vld [vmem:[%s1 + $0x154] sm:$0xf]
        %v849 = vld [vmem:[%s1 + $0x158] sm:$0xf]
        %v850 = vld [vmem:[%s1 + $0x15c] sm:$0xf]
        %v851 = vld [vmem:[%s1 + $0x160] sm:$0xf]
        %v852 = vld [vmem:[%s1 + $0x164] sm:$0xf]
        %v853 = vld [vmem:[%s1 + $0x168] sm:$0xf]
        %v854 = vld [vmem:[%s1 + $0x16c] sm:$0xf]
        %v855 = vld [vmem:[%s1 + $0x170] sm:$0xf]
        %v856 = vld [vmem:[%s1 + $0x174] sm:$0xf]
        %v857 = vld [vmem:[%s1 + $0x178] sm:$0xf]
        %v858 = vld [vmem:[%s1 + $0x17c] sm:$0xf]
        %v859 = vld [vmem:[%s1 + $0x180] sm:$0xf]
        %v860 = vld [vmem:[%s1 + $0x184] sm:$0xf]
        %v861 = vld [vmem:[%s1 + $0x188] sm:$0xf]
        %v862 = vld [vmem:[%s1 + $0x18c] sm:$0xf]
        %v863 = vld [vmem:[%s1 + $0x190] sm:$0xf]
        %v864 = vld [vmem:[%s1 + $0x194] sm:$0xf]
        %v865 = vld [vmem:[%s1 + $0x198] sm:$0xf]
        %v866 = vld [vmem:[%s1 + $0x19c] sm:$0xf]
        %v867 = vld [vmem:[%s1 + $0x1a0] sm:$0xf]
        %v868 = vld [vmem:[%s1 + $0x1a4] sm:$0xf]
        %v869 = vld [vmem:[%s1 + $0x1a8] sm:$0xf]
        %v870 = vld [vmem:[%s1 + $0x1ac] sm:$0xf]
        %v871 = vld [vmem:[%s1 + $0x1b0] sm:$0xf]
        %v872 = vld [vmem:[%s1 + $0x1b4] sm:$0xf]
        %v873 = vld [vmem:[%s1 + $0x1b8] sm:$0xf]
        %v874 = vld [vmem:[%s1 + $0x1bc] sm:$0xf]
        %v875 = vld [vmem:[%s1 + $0x1c0] sm:$0xf]
        %v876 = vld [vmem:[%s1 + $0x1c4] sm:$0xf]
        %v877 = vld [vmem:[%s1 + $0x1c8] sm:$0xf]
        %v878 = vld [vmem:[%s1 + $0x1cc] sm:$0xf]
        %v879 = vld [vmem:[%s1 + $0x1d0] sm:$0xf]
        %v880 = vld [vmem:[%s1 + $0x1d4] sm:$0xf]
        %v881 = vld [vmem:[%s1 + $0x1d8] sm:$0xf]
        %v882 = vld [vmem:[%s1 + $0x1dc] sm:$0xf]
        %v883 = vld [vmem:[%s1 + $0x1e0] sm:$0xf]
        %v884 = vld [vmem:[%s1 + $0x1e4] sm:$0xf]
        %v885 = vld [vmem:[%s1 + $0x1e8] sm:$0xf]
        %v886 = vld [vmem:[%s1 + $0x1ec] sm:$0xf]
        %v887 = vld [vmem:[%s1 + $0x1f0] sm:$0xf]
        %v888 = vld [vmem:[%s1 + $0x1f4] sm:$0xf]
        %v889 = vld [vmem:[%s1 + $0x1f8] sm:$0xf]
        %v890 = vld [vmem:[%s1 + $0x1fc] sm:$0xf]
        %v891 = vld [vmem:[%s1 + $0x200] sm:$0xf]
        %v892 = vld [vmem:[%s1 + $0x204] sm:$0xf]
        %v893 = vld [vmem:[%s1 + $0x208] sm:$0xf]
        %v894 = vld [vmem:[%s1 + $0x20c] sm:$0xf]
        %v895 = vld [vmem:[%s1 + $0x210] sm:$0xf]
        %v896 = vld [vmem:[%s1 + $0x214] sm:$0xf]
        %v897 = vld [vmem:[%s1 + $0x218] sm:$0xf]
        %v898 = vld [vmem:[%s1 + $0x21c] sm:$0xf]
        %v899 = vld [vmem:[%s1 + $0x220] sm:$0xf]
        %v900 = vld [vmem:[%s1 + $0x224] sm:$0xf]
        %v901 = vld [vmem:[%s1 + $0x228] sm:$0xf]
        %v902 = vld [vmem:[%s1 + $0x22c] sm:$0xf]
        %v903 = vld [vmem:[%s1 + $0x230] sm:$0xf]
        %v904 = vld [vmem:[%s1 + $0x234] sm:$0xf]
        %v905 = vld [vmem:[%s1 + $0x238] sm:$0xf]
        %v906 = vld [vmem:[%s1 + $0x23c] sm:$0xf]
        %v907 = vld [vmem:[%s2] sm:$0x1]
        %v909 = vperm.slane %v907, 0
        %v1055 = vunpack.c.l.b16 %v763
        %v1056 = vunpack.c.l.b16 %v764
        %v1057 = vunpack.c.l.b16 %v765
        %v1058 = vunpack.c.l.b16 %v766
        %v1059 = vunpack.c.l.b16 %v767
        %v1060 = vunpack.c.l.b16 %v768
        %v1061 = vunpack.c.l.b16 %v769
        %v1062 = vunpack.c.l.b16 %v770
        %v1063 = vunpack.c.l.b16 %v771
        %v1064 = vunpack.c.l.b16 %v772
        %v1065 = vunpack.c.l.b16 %v773
        %v1066 = vunpack.c.l.b16 %v774
        %v1067 = vunpack.c.l.b16 %v775
        %v1068 = vunpack.c.l.b16 %v776
        %v1069 = vunpack.c.l.b16 %v777
        %v1070 = vunpack.c.l.b16 %v778
        %v1071 = vunpack.c.l.b16 %v779
        %v1072 = vunpack.c.l.b16 %v780
        %v1073 = vunpack.c.l.b16 %v781
        %v1074 = vunpack.c.l.b16 %v782
        %v1075 = vunpack.c.l.b16 %v783
        %v1076 = vunpack.c.l.b16 %v784
        %v1077 = vunpack.c.l.b16 %v785
        %v1078 = vunpack.c.l.b16 %v786
        %v1079 = vunpack.c.l.b16 %v787
        %v1080 = vunpack.c.l.b16 %v788
        %v1081 = vunpack.c.l.b16 %v789
        %v1082 = vunpack.c.l.b16 %v790
        %v1083 = vunpack.c.l.b16 %v791
        %v1084 = vunpack.c.l.b16 %v792
        %v1085 = vunpack.c.l.b16 %v793
        %v1086 = vunpack.c.l.b16 %v794
        %v1087 = vunpack.c.l.b16 %v795
        %v1088 = vunpack.c.l.b16 %v796
        %v1089 = vunpack.c.l.b16 %v797
        %v1090 = vunpack.c.l.b16 %v798
        %v1091 = vunpack.c.l.b16 %v799
        %v1092 = vunpack.c.l.b16 %v800
        %v1093 = vunpack.c.l.b16 %v801
        %v1094 = vunpack.c.l.b16 %v802
        %v1095 = vunpack.c.l.b16 %v803
        %v1096 = vunpack.c.l.b16 %v804
        %v1097 = vunpack.c.l.b16 %v805
        %v1098 = vunpack.c.l.b16 %v806
        %v1099 = vunpack.c.l.b16 %v807
        %v1100 = vunpack.c.l.b16 %v808
        %v1101 = vunpack.c.l.b16 %v809
        %v1102 = vunpack.c.l.b16 %v810
        %v1103 = vunpack.c.l.b16 %v811
        %v1104 = vunpack.c.l.b16 %v812
        %v1105 = vunpack.c.l.b16 %v813
        %v1106 = vunpack.c.l.b16 %v814
        %v1107 = vunpack.c.l.b16 %v815
        %v1108 = vunpack.c.l.b16 %v816
        %v1109 = vunpack.c.l.b16 %v817
        %v1110 = vunpack.c.l.b16 %v818
        %v1111 = vunpack.c.l.b16 %v819
        %v1112 = vunpack.c.l.b16 %v820
        %v1113 = vunpack.c.l.b16 %v821
        %v1114 = vunpack.c.l.b16 %v822
        %v1115 = vunpack.c.l.b16 %v823
        %v1116 = vunpack.c.l.b16 %v824
        %v1117 = vunpack.c.l.b16 %v825
        %v1118 = vunpack.c.l.b16 %v826
        %v1119 = vunpack.c.l.b16 %v827
        %v1120 = vunpack.c.l.b16 %v828
        %v1121 = vunpack.c.l.b16 %v829
        %v1122 = vunpack.c.l.b16 %v830
        %v1123 = vunpack.c.l.b16 %v831
        %v1124 = vunpack.c.l.b16 %v832
        %v1125 = vunpack.c.l.b16 %v833
        %v1126 = vunpack.c.l.b16 %v834
        %v1127 = vunpack.c.l.b16 %v835
        %v1128 = vunpack.c.l.b16 %v836
        %v1129 = vunpack.c.l.b16 %v837
        %v1130 = vunpack.c.l.b16 %v838
        %v1131 = vunpack.c.l.b16 %v839
        %v1132 = vunpack.c.l.b16 %v840
        %v1133 = vunpack.c.l.b16 %v841
        %v1134 = vunpack.c.l.b16 %v842
        %v1135 = vunpack.c.l.b16 %v843
        %v1136 = vunpack.c.l.b16 %v844
        %v1137 = vunpack.c.l.b16 %v845
        %v1138 = vunpack.c.l.b16 %v846
        %v1139 = vunpack.c.l.b16 %v847
        %v1140 = vunpack.c.l.b16 %v848
        %v1141 = vunpack.c.l.b16 %v849
        %v1142 = vunpack.c.l.b16 %v850
        %v1143 = vunpack.c.l.b16 %v851
        %v1144 = vunpack.c.l.b16 %v852
        %v1145 = vunpack.c.l.b16 %v853
        %v1146 = vunpack.c.l.b16 %v854
        %v1147 = vunpack.c.l.b16 %v855
        %v1148 = vunpack.c.l.b16 %v856
        %v1149 = vunpack.c.l.b16 %v857
        %v1150 = vunpack.c.l.b16 %v858
        %v1151 = vunpack.c.l.b16 %v859
        %v1152 = vunpack.c.l.b16 %v860
        %v1153 = vunpack.c.l.b16 %v861
        %v1154 = vunpack.c.l.b16 %v862
        %v1155 = vunpack.c.l.b16 %v863
        %v1156 = vunpack.c.l.b16 %v864
        %v1157 = vunpack.c.l.b16 %v865
        %v1158 = vunpack.c.l.b16 %v866
        %v1159 = vunpack.c.l.b16 %v867
        %v1160 = vunpack.c.l.b16 %v868
        %v1161 = vunpack.c.l.b16 %v869
        %v1162 = vunpack.c.l.b16 %v870
        %v1163 = vunpack.c.l.b16 %v871
        %v1164 = vunpack.c.l.b16 %v872
        %v1165 = vunpack.c.l.b16 %v873
        %v1166 = vunpack.c.l.b16 %v874
        %v1167 = vunpack.c.l.b16 %v875
        %v1168 = vunpack.c.l.b16 %v876
        %v1169 = vunpack.c.l.b16 %v877
        %v1170 = vunpack.c.l.b16 %v878
        %v1171 = vunpack.c.l.b16 %v879
        %v1172 = vunpack.c.l.b16 %v880
        %v1173 = vunpack.c.l.b16 %v881
        %v1174 = vunpack.c.l.b16 %v882
        %v1175 = vunpack.c.l.b16 %v883
        %v1176 = vunpack.c.l.b16 %v884
        %v1177 = vunpack.c.l.b16 %v885
        %v1178 = vunpack.c.l.b16 %v886
        %v1179 = vunpack.c.l.b16 %v887
        %v1180 = vunpack.c.l.b16 %v888
        %v1181 = vunpack.c.l.b16 %v889
        %v1182 = vunpack.c.l.b16 %v890
        %v1183 = vunpack.c.l.b16 %v891
        %v1184 = vunpack.c.l.b16 %v892
        %v1185 = vunpack.c.l.b16 %v893
        %v1186 = vunpack.c.l.b16 %v894
        %v1187 = vunpack.c.l.b16 %v895
        %v1188 = vunpack.c.l.b16 %v896
        %v1189 = vunpack.c.l.b16 %v897
        %v1190 = vunpack.c.l.b16 %v898
        %v1191 = vunpack.c.l.b16 %v899
        %v1192 = vunpack.c.l.b16 %v900
        %v1193 = vunpack.c.l.b16 %v901
        %v1194 = vunpack.c.l.b16 %v902
        %v1195 = vunpack.c.l.b16 %v903
        %v1196 = vunpack.c.l.b16 %v904
        %v1197 = vunpack.c.l.b16 %v905
        %v1198 = vunpack.c.l.b16 %v906
        %v1199 = vpack.c.b16 %v1056, %v1055
        %v1200 = vpack.c.b16 %v1058, %v1057
        %v1201 = vpack.c.b16 %v1060, %v1059
        %v1202 = vpack.c.b16 %v1062, %v1061
        %v1203 = vpack.c.b16 %v1064, %v1063
        %v1204 = vpack.c.b16 %v1066, %v1065
        %v1205 = vpack.c.b16 %v1068, %v1067
        %v1206 = vpack.c.b16 %v1070, %v1069
        %v1207 = vpack.c.b16 %v1072, %v1071
        %v1208 = vpack.c.b16 %v1074, %v1073
        %v1209 = vpack.c.b16 %v1076, %v1075
        %v1210 = vpack.c.b16 %v1078, %v1077
        %v1211 = vpack.c.b16 %v1080, %v1079
        %v1212 = vpack.c.b16 %v1082, %v1081
        %v1213 = vpack.c.b16 %v1084, %v1083
        %v1214 = vpack.c.b16 %v1086, %v1085
        %v1215 = vpack.c.b16 %v1088, %v1087
        %v1216 = vpack.c.b16 %v1090, %v1089
        %v1217 = vpack.c.b16 %v1092, %v1091
        %v1218 = vpack.c.b16 %v1094, %v1093
        %v1219 = vpack.c.b16 %v1096, %v1095
        %v1220 = vpack.c.b16 %v1098, %v1097
        %v1221 = vpack.c.b16 %v1100, %v1099
        %v1222 = vpack.c.b16 %v1102, %v1101
        %v1223 = vpack.c.b16 %v1104, %v1103
        %v1224 = vpack.c.b16 %v1106, %v1105
        %v1225 = vpack.c.b16 %v1108, %v1107
        %v1226 = vpack.c.b16 %v1110, %v1109
        %v1227 = vpack.c.b16 %v1112, %v1111
        %v1228 = vpack.c.b16 %v1114, %v1113
        %v1229 = vpack.c.b16 %v1116, %v1115
        %v1230 = vpack.c.b16 %v1118, %v1117
        %v1231 = vpack.c.b16 %v1120, %v1119
        %v1232 = vpack.c.b16 %v1122, %v1121
        %v1233 = vpack.c.b16 %v1124, %v1123
        %v1234 = vpack.c.b16 %v1126, %v1125
        %v1235 = vpack.c.b16 %v1128, %v1127
        %v1236 = vpack.c.b16 %v1130, %v1129
        %v1237 = vpack.c.b16 %v1132, %v1131
        %v1238 = vpack.c.b16 %v1134, %v1133
        %v1239 = vpack.c.b16 %v1136, %v1135
        %v1240 = vpack.c.b16 %v1138, %v1137
        %v1241 = vpack.c.b16 %v1140, %v1139
        %v1242 = vpack.c.b16 %v1142, %v1141
        %v1243 = vpack.c.b16 %v1144, %v1143
        %v1244 = vpack.c.b16 %v1146, %v1145
        %v1245 = vpack.c.b16 %v1148, %v1147
        %v1246 = vpack.c.b16 %v1150, %v1149
        %v1247 = vpack.c.b16 %v1152, %v1151
        %v1248 = vpack.c.b16 %v1154, %v1153
        %v1249 = vpack.c.b16 %v1156, %v1155
        %v1250 = vpack.c.b16 %v1158, %v1157
        %v1251 = vpack.c.b16 %v1160, %v1159
        %v1252 = vpack.c.b16 %v1162, %v1161
        %v1253 = vpack.c.b16 %v1164, %v1163
        %v1254 = vpack.c.b16 %v1166, %v1165
        %v1255 = vpack.c.b16 %v1168, %v1167
        %v1256 = vpack.c.b16 %v1170, %v1169
        %v1257 = vpack.c.b16 %v1172, %v1171
        %v1258 = vpack.c.b16 %v1174, %v1173
        %v1259 = vpack.c.b16 %v1176, %v1175
        %v1260 = vpack.c.b16 %v1178, %v1177
        %v1261 = vpack.c.b16 %v1180, %v1179
        %v1262 = vpack.c.b16 %v1182, %v1181
        %v1263 = vpack.c.b16 %v1184, %v1183
        %v1264 = vpack.c.b16 %v1186, %v1185
        %v1265 = vpack.c.b16 %v1188, %v1187
        %v1266 = vpack.c.b16 %v1190, %v1189
        %v1267 = vpack.c.b16 %v1192, %v1191
        %v1268 = vpack.c.b16 %v1194, %v1193
        %v1269 = vpack.c.b16 %v1196, %v1195
        %v1270 = vpack.c.b16 %v1198, %v1197
        %1343 = vmatpush.bf16.msra.mxu0 %v1206
        %1344 = vmatpush.bf16.msra.mxu0 %v1205
        %1345 = vmatpush.bf16.msra.mxu0 %v1204
        %1346 = vmatpush.bf16.msra.mxu0 %v1203
        %1347 = vmatpush.bf16.msra.mxu0 %v1202
        %1348 = vmatpush.bf16.msra.mxu0 %v1201
        %1349 = vmatpush.bf16.msra.mxu0 %v1200
        %1350 = vmatpush.bf16.msra.mxu0 %v1199
        %1351 = vmatmul.bf16.gmra.mxu0 %v712
        %v1352 = vpop.f32.mrf.mxu0
        %v1353 = vadd.f32 %v909, %v1352
        %v1354 = vpop.f32.mrf.mxu0
        %v1355 = vadd.f32 %v909, %v1354
        %1356 = vmatmul.bf16.gmra.mxu0 %v715
        %v1357 = vpop.f32.mrf.mxu0
        %v1358 = vadd.f32 %v909, %v1357
        %v1359 = vpop.f32.mrf.mxu0
        %v1360 = vadd.f32 %v909, %v1359
        %1361 = vmatmul.bf16.gmra.mxu0 %v718
        %v1362 = vpop.f32.mrf.mxu0
        %v1363 = vadd.f32 %v909, %v1362
        %v1364 = vpop.f32.mrf.mxu0
        %v1365 = vadd.f32 %v909, %v1364
        %1366 = vmatmul.bf16.gmra.mxu0 %v721
        %v1367 = vpop.f32.mrf.mxu0
        %v1368 = vadd.f32 %v909, %v1367
        %v1369 = vpop.f32.mrf.mxu0
        %v1370 = vadd.f32 %v909, %v1369
        %1371 = vmatmul.bf16.gmra.mxu0 %v724
        %v1372 = vpop.f32.mrf.mxu0
        %v1373 = vadd.f32 %v909, %v1372
        %v1374 = vpop.f32.mrf.mxu0
        %v1375 = vadd.f32 %v909, %v1374
        %1376 = vmatmul.bf16.gmra.mxu0 %v727
        %v1377 = vpop.f32.mrf.mxu0
        %v1378 = vadd.f32 %v909, %v1377
        %v1379 = vpop.f32.mrf.mxu0
        %v1380 = vadd.f32 %v909, %v1379
        %1381 = vmatmul.bf16.gmra.mxu0 %v730
        %v1382 = vpop.f32.mrf.mxu0
        %v1383 = vadd.f32 %v909, %v1382
        %v1384 = vpop.f32.mrf.mxu0
        %v1385 = vadd.f32 %v909, %v1384
        %1386 = vmatmul.bf16.gmra.mxu0 %v733
        %v1387 = vpop.f32.mrf.mxu0
        %v1388 = vadd.f32 %v909, %v1387
        %v1389 = vpop.f32.mrf.mxu0
        %v1390 = vadd.f32 %v909, %v1389
        %1391 = vmatmul.bf16.gmra.mxu0 %v736
        %v1392 = vpop.f32.mrf.mxu0
        %v1393 = vadd.f32 %v909, %v1392
        %v1394 = vpop.f32.mrf.mxu0
        %v1395 = vadd.f32 %v909, %v1394
        %1396 = vmatmul.bf16.gmra.mxu0 %v739
        %v1397 = vpop.f32.mrf.mxu0
        %v1398 = vadd.f32 %v909, %v1397
        %v1399 = vpop.f32.mrf.mxu0
        %v1400 = vadd.f32 %v909, %v1399
        %1401 = vmatmul.bf16.gmra.mxu0 %v742
        %v1402 = vpop.f32.mrf.mxu0
        %v1403 = vadd.f32 %v909, %v1402
        %v1404 = vpop.f32.mrf.mxu0
        %v1405 = vadd.f32 %v909, %v1404
        %1406 = vmatmul.bf16.gmra.mxu0 %v745
        %v1407 = vpop.f32.mrf.mxu0
        %v1408 = vadd.f32 %v909, %v1407
        %v1409 = vpop.f32.mrf.mxu0
        %v1410 = vadd.f32 %v909, %v1409
        %1411 = vmatmul.bf16.gmra.mxu0 %v748
        %v1412 = vpop.f32.mrf.mxu0
        %v1413 = vadd.f32 %v909, %v1412
        %v1414 = vpop.f32.mrf.mxu0
        %v1415 = vadd.f32 %v909, %v1414
        %1416 = vmatmul.bf16.gmra.mxu0 %v751
        %v1417 = vpop.f32.mrf.mxu0
        %v1418 = vadd.f32 %v909, %v1417
        %v1419 = vpop.f32.mrf.mxu0
        %v1420 = vadd.f32 %v909, %v1419
        %1421 = vmatmul.bf16.gmra.mxu0 %v754
        %v1422 = vpop.f32.mrf.mxu0
        %v1423 = vadd.f32 %v909, %v1422
        %v1424 = vpop.f32.mrf.mxu0
        %v1425 = vadd.f32 %v909, %v1424
        %1426 = vmatmul.bf16.gmra.mxu0 %v757
        %v1427 = vpop.f32.mrf.mxu0
        %v1428 = vadd.f32 %v909, %v1427
        %v1429 = vpop.f32.mrf.mxu0
        %v1430 = vadd.f32 %v909, %v1429
        %1431 = vdwg.mxu0
        %1432 = vmatpush.bf16.msra.mxu0 %v1214
        %1433 = vmatpush.bf16.msra.mxu0 %v1213
        %1434 = vmatpush.bf16.msra.mxu0 %v1212
        %1435 = vmatpush.bf16.msra.mxu0 %v1211
        %1436 = vmatpush.bf16.msra.mxu0 %v1210
        %1437 = vmatpush.bf16.msra.mxu0 %v1209
        %1438 = vmatpush.bf16.msra.mxu0 %v1208
        %1439 = vmatpush.bf16.msra.mxu0 %v1207
        %1440 = vmatmul.bf16.gmra.mxu0 %v713
        %v1441 = vpop.f32.mrf.mxu0
        %v1442 = vadd.f32 %v1353, %v1441
        %v1443 = vpop.f32.mrf.mxu0
        %v1444 = vadd.f32 %v1355, %v1443
        %1445 = vmatmul.bf16.gmra.mxu0 %v716
        %v1446 = vpop.f32.mrf.mxu0
        %v1447 = vadd.f32 %v1358, %v1446
        %v1448 = vpop.f32.mrf.mxu0
        %v1449 = vadd.f32 %v1360, %v1448
        %1450 = vmatmul.bf16.gmra.mxu0 %v719
        %v1451 = vpop.f32.mrf.mxu0
        %v1452 = vadd.f32 %v1363, %v1451
        %v1453 = vpop.f32.mrf.mxu0
        %v1454 = vadd.f32 %v1365, %v1453
        %1455 = vmatmul.bf16.gmra.mxu0 %v722
        %v1456 = vpop.f32.mrf.mxu0
        %v1457 = vadd.f32 %v1368, %v1456
        %v1458 = vpop.f32.mrf.mxu0
        %v1459 = vadd.f32 %v1370, %v1458
        %1460 = vmatmul.bf16.gmra.mxu0 %v725
        %v1461 = vpop.f32.mrf.mxu0
        %v1462 = vadd.f32 %v1373, %v1461
        %v1463 = vpop.f32.mrf.mxu0
        %v1464 = vadd.f32 %v1375, %v1463
        %1465 = vmatmul.bf16.gmra.mxu0 %v728
        %v1466 = vpop.f32.mrf.mxu0
        %v1467 = vadd.f32 %v1378, %v1466
        %v1468 = vpop.f32.mrf.mxu0
        %v1469 = vadd.f32 %v1380, %v1468
        %1470 = vmatmul.bf16.gmra.mxu0 %v731
        %v1471 = vpop.f32.mrf.mxu0
        %v1472 = vadd.f32 %v1383, %v1471
        %v1473 = vpop.f32.mrf.mxu0
        %v1474 = vadd.f32 %v1385, %v1473
        %1475 = vmatmul.bf16.gmra.mxu0 %v734
        %v1476 = vpop.f32.mrf.mxu0
        %v1477 = vadd.f32 %v1388, %v1476
        %v1478 = vpop.f32.mrf.mxu0
        %v1479 = vadd.f32 %v1390, %v1478
        %1480 = vmatmul.bf16.gmra.mxu0 %v737
        %v1481 = vpop.f32.mrf.mxu0
        %v1482 = vadd.f32 %v1393, %v1481
        %v1483 = vpop.f32.mrf.mxu0
        %v1484 = vadd.f32 %v1395, %v1483
        %1485 = vmatmul.bf16.gmra.mxu0 %v740
        %v1486 = vpop.f32.mrf.mxu0
        %v1487 = vadd.f32 %v1398, %v1486
        %v1488 = vpop.f32.mrf.mxu0
        %v1489 = vadd.f32 %v1400, %v1488
        %1490 = vmatmul.bf16.gmra.mxu0 %v743
        %v1491 = vpop.f32.mrf.mxu0
        %v1492 = vadd.f32 %v1403, %v1491
        %v1493 = vpop.f32.mrf.mxu0
        %v1494 = vadd.f32 %v1405, %v1493
        %1495 = vmatmul.bf16.gmra.mxu0 %v746
        %v1496 = vpop.f32.mrf.mxu0
        %v1497 = vadd.f32 %v1408, %v1496
        %v1498 = vpop.f32.mrf.mxu0
        %v1499 = vadd.f32 %v1410, %v1498
        %1500 = vmatmul.bf16.gmra.mxu0 %v749
        %v1501 = vpop.f32.mrf.mxu0
        %v1502 = vadd.f32 %v1413, %v1501
        %v1503 = vpop.f32.mrf.mxu0
        %v1504 = vadd.f32 %v1415, %v1503
        %1505 = vmatmul.bf16.gmra.mxu0 %v752
        %v1506 = vpop.f32.mrf.mxu0
        %v1507 = vadd.f32 %v1418, %v1506
        %v1508 = vpop.f32.mrf.mxu0
        %v1509 = vadd.f32 %v1420, %v1508
        %1510 = vmatmul.bf16.gmra.mxu0 %v755
        %v1511 = vpop.f32.mrf.mxu0
        %v1512 = vadd.f32 %v1423, %v1511
        %v1513 = vpop.f32.mrf.mxu0
        %v1514 = vadd.f32 %v1425, %v1513
        %1515 = vmatmul.bf16.gmra.mxu0 %v758
        %v1516 = vpop.f32.mrf.mxu0
        %v1517 = vadd.f32 %v1428, %v1516
        %v1518 = vpop.f32.mrf.mxu0
        %v1519 = vadd.f32 %v1430, %v1518
        %1520 = vdwg.mxu0
        %1521 = vmatpush.bf16.msra.mxu0 %v1222
        %1522 = vmatpush.bf16.msra.mxu0 %v1221
        %1523 = vmatpush.bf16.msra.mxu0 %v1220
        %1524 = vmatpush.bf16.msra.mxu0 %v1219
        %1525 = vmatpush.bf16.msra.mxu0 %v1218
        %1526 = vmatpush.bf16.msra.mxu0 %v1217
        %1527 = vmatpush.bf16.msra.mxu0 %v1216
        %1528 = vmatpush.bf16.msra.mxu0 %v1215
        %1529 = vmatmul.bf16.gmra.mxu0 %v714
        %v1530 = vpop.f32.mrf.mxu0
        %v1531 = vadd.f32 %v1442, %v1530
        %v1532 = vpop.f32.mrf.mxu0
        %v1533 = vadd.f32 %v1444, %v1532
        %1534 = vmatmul.bf16.gmra.mxu0 %v717
        %v1535 = vpop.f32.mrf.mxu0
        %v1536 = vadd.f32 %v1447, %v1535
        %v1537 = vpop.f32.mrf.mxu0
        %v1538 = vadd.f32 %v1449, %v1537
        %1539 = vmatmul.bf16.gmra.mxu0 %v720
        %v1540 = vpop.f32.mrf.mxu0
        %v1541 = vadd.f32 %v1452, %v1540
        %v1542 = vpop.f32.mrf.mxu0
        %v1543 = vadd.f32 %v1454, %v1542
        %1544 = vmatmul.bf16.gmra.mxu0 %v723
        %v1545 = vpop.f32.mrf.mxu0
        %v1546 = vadd.f32 %v1457, %v1545
        %v1547 = vpop.f32.mrf.mxu0
        %v1548 = vadd.f32 %v1459, %v1547
        %1549 = vmatmul.bf16.gmra.mxu0 %v726
        %v1550 = vpop.f32.mrf.mxu0
        %v1551 = vadd.f32 %v1462, %v1550
        %v1552 = vpop.f32.mrf.mxu0
        %v1553 = vadd.f32 %v1464, %v1552
        %1554 = vmatmul.bf16.gmra.mxu0 %v729
        %v1555 = vpop.f32.mrf.mxu0
        %v1556 = vadd.f32 %v1467, %v1555
        %v1557 = vpop.f32.mrf.mxu0
        %v1558 = vadd.f32 %v1469, %v1557
        %1559 = vmatmul.bf16.gmra.mxu0 %v732
        %v1560 = vpop.f32.mrf.mxu0
        %v1561 = vadd.f32 %v1472, %v1560
        %v1562 = vpop.f32.mrf.mxu0
        %v1563 = vadd.f32 %v1474, %v1562
        %1564 = vmatmul.bf16.gmra.mxu0 %v735
        %v1565 = vpop.f32.mrf.mxu0
        %v1566 = vadd.f32 %v1477, %v1565
        %v1567 = vpop.f32.mrf.mxu0
        %v1568 = vadd.f32 %v1479, %v1567
        %1569 = vmatmul.bf16.gmra.mxu0 %v738
        %v1570 = vpop.f32.mrf.mxu0
        %v1571 = vadd.f32 %v1482, %v1570
        %v1572 = vpop.f32.mrf.mxu0
        %v1573 = vadd.f32 %v1484, %v1572
        %1574 = vmatmul.bf16.gmra.mxu0 %v741
        %v1575 = vpop.f32.mrf.mxu0
        %v1576 = vadd.f32 %v1487, %v1575
        %v1577 = vpop.f32.mrf.mxu0
        %v1578 = vadd.f32 %v1489, %v1577
        %1579 = vmatmul.bf16.gmra.mxu0 %v744
        %v1580 = vpop.f32.mrf.mxu0
        %v1581 = vadd.f32 %v1492, %v1580
        %v1582 = vpop.f32.mrf.mxu0
        %v1583 = vadd.f32 %v1494, %v1582
        %1584 = vmatmul.bf16.gmra.mxu0 %v747
        %v1585 = vpop.f32.mrf.mxu0
        %v1586 = vadd.f32 %v1497, %v1585
        %v1587 = vpop.f32.mrf.mxu0
        %v1588 = vadd.f32 %v1499, %v1587
        %1589 = vmatmul.bf16.gmra.mxu0 %v750
        %v1590 = vpop.f32.mrf.mxu0
        %v1591 = vadd.f32 %v1502, %v1590
        %v1592 = vpop.f32.mrf.mxu0
        %v1593 = vadd.f32 %v1504, %v1592
        %1594 = vmatmul.bf16.gmra.mxu0 %v753
        %v1595 = vpop.f32.mrf.mxu0
        %v1596 = vadd.f32 %v1507, %v1595
        %v1597 = vpop.f32.mrf.mxu0
        %v1598 = vadd.f32 %v1509, %v1597
        %1599 = vmatmul.bf16.gmra.mxu0 %v756
        %v1600 = vpop.f32.mrf.mxu0
        %v1601 = vadd.f32 %v1512, %v1600
        %v1602 = vpop.f32.mrf.mxu0
        %v1603 = vadd.f32 %v1514, %v1602
        %1604 = vmatmul.bf16.gmra.mxu0 %v759
        %v1605 = vpop.f32.mrf.mxu0
        %v1606 = vadd.f32 %v1517, %v1605
        %v1607 = vpop.f32.mrf.mxu0
        %v1608 = vadd.f32 %v1519, %v1607
        %1609 = vdwg.mxu0
        %1610 = vmatpush.bf16.msra.mxu0 %v1230
        %1611 = vmatpush.bf16.msra.mxu0 %v1229
        %1612 = vmatpush.bf16.msra.mxu0 %v1228
        %1613 = vmatpush.bf16.msra.mxu0 %v1227
        %1614 = vmatpush.bf16.msra.mxu0 %v1226
        %1615 = vmatpush.bf16.msra.mxu0 %v1225
        %1616 = vmatpush.bf16.msra.mxu0 %v1224
        %1617 = vmatpush.bf16.msra.mxu0 %v1223
        %1618 = vmatmul.bf16.gmra.mxu0 %v715
        %v1619 = vpop.f32.mrf.mxu0
        %v1620 = vadd.f32 %v1531, %v1619
        %v1621 = vpop.f32.mrf.mxu0
        %v1622 = vadd.f32 %v1533, %v1621
        %1623 = vmatmul.bf16.gmra.mxu0 %v718
        %v1624 = vpop.f32.mrf.mxu0
        %v1625 = vadd.f32 %v1536, %v1624
        %v1626 = vpop.f32.mrf.mxu0
        %v1627 = vadd.f32 %v1538, %v1626
        %1628 = vmatmul.bf16.gmra.mxu0 %v721
        %v1629 = vpop.f32.mrf.mxu0
        %v1630 = vadd.f32 %v1541, %v1629
        %v1631 = vpop.f32.mrf.mxu0
        %v1632 = vadd.f32 %v1543, %v1631
        %1633 = vmatmul.bf16.gmra.mxu0 %v724
        %v1634 = vpop.f32.mrf.mxu0
        %v1635 = vadd.f32 %v1546, %v1634
        %v1636 = vpop.f32.mrf.mxu0
        %v1637 = vadd.f32 %v1548, %v1636
        %1638 = vmatmul.bf16.gmra.mxu0 %v727
        %v1639 = vpop.f32.mrf.mxu0
        %v1640 = vadd.f32 %v1551, %v1639
        %v1641 = vpop.f32.mrf.mxu0
        %v1642 = vadd.f32 %v1553, %v1641
        %1643 = vmatmul.bf16.gmra.mxu0 %v730
        %v1644 = vpop.f32.mrf.mxu0
        %v1645 = vadd.f32 %v1556, %v1644
        %v1646 = vpop.f32.mrf.mxu0
        %v1647 = vadd.f32 %v1558, %v1646
        %1648 = vmatmul.bf16.gmra.mxu0 %v733
        %v1649 = vpop.f32.mrf.mxu0
        %v1650 = vadd.f32 %v1561, %v1649
        %v1651 = vpop.f32.mrf.mxu0
        %v1652 = vadd.f32 %v1563, %v1651
        %1653 = vmatmul.bf16.gmra.mxu0 %v736
        %v1654 = vpop.f32.mrf.mxu0
        %v1655 = vadd.f32 %v1566, %v1654
        %v1656 = vpop.f32.mrf.mxu0
        %v1657 = vadd.f32 %v1568, %v1656
        %1658 = vmatmul.bf16.gmra.mxu0 %v739
        %v1659 = vpop.f32.mrf.mxu0
        %v1660 = vadd.f32 %v1571, %v1659
        %v1661 = vpop.f32.mrf.mxu0
        %v1662 = vadd.f32 %v1573, %v1661
        %1663 = vmatmul.bf16.gmra.mxu0 %v742
        %v1664 = vpop.f32.mrf.mxu0
        %v1665 = vadd.f32 %v1576, %v1664
        %v1666 = vpop.f32.mrf.mxu0
        %v1667 = vadd.f32 %v1578, %v1666
        %1668 = vmatmul.bf16.gmra.mxu0 %v745
        %v1669 = vpop.f32.mrf.mxu0
        %v1670 = vadd.f32 %v1581, %v1669
        %v1671 = vpop.f32.mrf.mxu0
        %v1672 = vadd.f32 %v1583, %v1671
        %1673 = vmatmul.bf16.gmra.mxu0 %v748
        %v1674 = vpop.f32.mrf.mxu0
        %v1675 = vadd.f32 %v1586, %v1674
        %v1676 = vpop.f32.mrf.mxu0
        %v1677 = vadd.f32 %v1588, %v1676
        %1678 = vmatmul.bf16.gmra.mxu0 %v751
        %v1679 = vpop.f32.mrf.mxu0
        %v1680 = vadd.f32 %v1591, %v1679
        %v1681 = vpop.f32.mrf.mxu0
        %v1682 = vadd.f32 %v1593, %v1681
        %1683 = vmatmul.bf16.gmra.mxu0 %v754
        %v1684 = vpop.f32.mrf.mxu0
        %v1685 = vadd.f32 %v1596, %v1684
        %v1686 = vpop.f32.mrf.mxu0
        %v1687 = vadd.f32 %v1598, %v1686
        %1688 = vmatmul.bf16.gmra.mxu0 %v757
        %v1689 = vpop.f32.mrf.mxu0
        %v1690 = vadd.f32 %v1601, %v1689
        %v1691 = vpop.f32.mrf.mxu0
        %v1692 = vadd.f32 %v1603, %v1691
        %1693 = vmatmul.bf16.gmra.mxu0 %v760
        %v1694 = vpop.f32.mrf.mxu0
        %v1695 = vadd.f32 %v1606, %v1694
        %v1696 = vpop.f32.mrf.mxu0
        %v1697 = vadd.f32 %v1608, %v1696
        %1698 = vdwg.mxu0
        %1699 = vmatpush.bf16.msra.mxu0 %v1238
        %1700 = vmatpush.bf16.msra.mxu0 %v1237
        %1701 = vmatpush.bf16.msra.mxu0 %v1236
        %1702 = vmatpush.bf16.msra.mxu0 %v1235
        %1703 = vmatpush.bf16.msra.mxu0 %v1234
        %1704 = vmatpush.bf16.msra.mxu0 %v1233
        %1705 = vmatpush.bf16.msra.mxu0 %v1232
        %1706 = vmatpush.bf16.msra.mxu0 %v1231
        %1707 = vmatmul.bf16.gmra.mxu0 %v716
        %v1708 = vpop.f32.mrf.mxu0
        %v1709 = vadd.f32 %v1620, %v1708
        %v1710 = vpop.f32.mrf.mxu0
        %v1711 = vadd.f32 %v1622, %v1710
        %1712 = vmatmul.bf16.gmra.mxu0 %v719
        %v1713 = vpop.f32.mrf.mxu0
        %v1714 = vadd.f32 %v1625, %v1713
        %v1715 = vpop.f32.mrf.mxu0
        %v1716 = vadd.f32 %v1627, %v1715
        %1717 = vmatmul.bf16.gmra.mxu0 %v722
        %v1718 = vpop.f32.mrf.mxu0
        %v1719 = vadd.f32 %v1630, %v1718
        %v1720 = vpop.f32.mrf.mxu0
        %v1721 = vadd.f32 %v1632, %v1720
        %1722 = vmatmul.bf16.gmra.mxu0 %v725
        %v1723 = vpop.f32.mrf.mxu0
        %v1724 = vadd.f32 %v1635, %v1723
        %v1725 = vpop.f32.mrf.mxu0
        %v1726 = vadd.f32 %v1637, %v1725
        %1727 = vmatmul.bf16.gmra.mxu0 %v728
        %v1728 = vpop.f32.mrf.mxu0
        %v1729 = vadd.f32 %v1640, %v1728
        %v1730 = vpop.f32.mrf.mxu0
        %v1731 = vadd.f32 %v1642, %v1730
        %1732 = vmatmul.bf16.gmra.mxu0 %v731
        %v1733 = vpop.f32.mrf.mxu0
        %v1734 = vadd.f32 %v1645, %v1733
        %v1735 = vpop.f32.mrf.mxu0
        %v1736 = vadd.f32 %v1647, %v1735
        %1737 = vmatmul.bf16.gmra.mxu0 %v734
        %v1738 = vpop.f32.mrf.mxu0
        %v1739 = vadd.f32 %v1650, %v1738
        %v1740 = vpop.f32.mrf.mxu0
        %v1741 = vadd.f32 %v1652, %v1740
        %1742 = vmatmul.bf16.gmra.mxu0 %v737
        %v1743 = vpop.f32.mrf.mxu0
        %v1744 = vadd.f32 %v1655, %v1743
        %v1745 = vpop.f32.mrf.mxu0
        %v1746 = vadd.f32 %v1657, %v1745
        %1747 = vmatmul.bf16.gmra.mxu0 %v740
        %v1748 = vpop.f32.mrf.mxu0
        %v1749 = vadd.f32 %v1660, %v1748
        %v1750 = vpop.f32.mrf.mxu0
        %v1751 = vadd.f32 %v1662, %v1750
        %1752 = vmatmul.bf16.gmra.mxu0 %v743
        %v1753 = vpop.f32.mrf.mxu0
        %v1754 = vadd.f32 %v1665, %v1753
        %v1755 = vpop.f32.mrf.mxu0
        %v1756 = vadd.f32 %v1667, %v1755
        %1757 = vmatmul.bf16.gmra.mxu0 %v746
        %v1758 = vpop.f32.mrf.mxu0
        %v1759 = vadd.f32 %v1670, %v1758
        %v1760 = vpop.f32.mrf.mxu0
        %v1761 = vadd.f32 %v1672, %v1760
        %1762 = vmatmul.bf16.gmra.mxu0 %v749
        %v1763 = vpop.f32.mrf.mxu0
        %v1764 = vadd.f32 %v1675, %v1763
        %v1765 = vpop.f32.mrf.mxu0
        %v1766 = vadd.f32 %v1677, %v1765
        %1767 = vmatmul.bf16.gmra.mxu0 %v752
        %v1768 = vpop.f32.mrf.mxu0
        %v1769 = vadd.f32 %v1680, %v1768
        %v1770 = vpop.f32.mrf.mxu0
        %v1771 = vadd.f32 %v1682, %v1770
        %1772 = vmatmul.bf16.gmra.mxu0 %v755
        %v1773 = vpop.f32.mrf.mxu0
        %v1774 = vadd.f32 %v1685, %v1773
        %v1775 = vpop.f32.mrf.mxu0
        %v1776 = vadd.f32 %v1687, %v1775
        %1777 = vmatmul.bf16.gmra.mxu0 %v758
        %v1778 = vpop.f32.mrf.mxu0
        %v1779 = vadd.f32 %v1690, %v1778
        %v1780 = vpop.f32.mrf.mxu0
        %v1781 = vadd.f32 %v1692, %v1780
        %1782 = vmatmul.bf16.gmra.mxu0 %v761
        %v1783 = vpop.f32.mrf.mxu0
        %v1784 = vadd.f32 %v1695, %v1783
        %v1785 = vpop.f32.mrf.mxu0
        %v1786 = vadd.f32 %v1697, %v1785
        %1787 = vdwg.mxu0
        %1788 = vmatpush.bf16.msra.mxu0 %v1246
        %1789 = vmatpush.bf16.msra.mxu0 %v1245
        %1790 = vmatpush.bf16.msra.mxu0 %v1244
        %1791 = vmatpush.bf16.msra.mxu0 %v1243
        %1792 = vmatpush.bf16.msra.mxu0 %v1242
        %1793 = vmatpush.bf16.msra.mxu0 %v1241
        %1794 = vmatpush.bf16.msra.mxu0 %v1240
        %1795 = vmatpush.bf16.msra.mxu0 %v1239
        %1796 = vmatmul.bf16.gmra.mxu0 %v717
        %v1797 = vpop.f32.mrf.mxu0
        %v1798 = vadd.f32 %v1709, %v1797
        %v1799 = vpop.f32.mrf.mxu0
        %v1800 = vadd.f32 %v1711, %v1799
        %1801 = vmatmul.bf16.gmra.mxu0 %v720
        %v1802 = vpop.f32.mrf.mxu0
        %v1803 = vadd.f32 %v1714, %v1802
        %v1804 = vpop.f32.mrf.mxu0
        %v1805 = vadd.f32 %v1716, %v1804
        %1806 = vmatmul.bf16.gmra.mxu0 %v723
        %v1807 = vpop.f32.mrf.mxu0
        %v1808 = vadd.f32 %v1719, %v1807
        %v1809 = vpop.f32.mrf.mxu0
        %v1810 = vadd.f32 %v1721, %v1809
        %1811 = vmatmul.bf16.gmra.mxu0 %v726
        %v1812 = vpop.f32.mrf.mxu0
        %v1813 = vadd.f32 %v1724, %v1812
        %v1814 = vpop.f32.mrf.mxu0
        %v1815 = vadd.f32 %v1726, %v1814
        %1816 = vmatmul.bf16.gmra.mxu0 %v729
        %v1817 = vpop.f32.mrf.mxu0
        %v1818 = vadd.f32 %v1729, %v1817
        %v1819 = vpop.f32.mrf.mxu0
        %v1820 = vadd.f32 %v1731, %v1819
        %1821 = vmatmul.bf16.gmra.mxu0 %v732
        %v1822 = vpop.f32.mrf.mxu0
        %v1823 = vadd.f32 %v1734, %v1822
        %v1824 = vpop.f32.mrf.mxu0
        %v1825 = vadd.f32 %v1736, %v1824
        %1826 = vmatmul.bf16.gmra.mxu0 %v735
        %v1827 = vpop.f32.mrf.mxu0
        %v1828 = vadd.f32 %v1739, %v1827
        %v1829 = vpop.f32.mrf.mxu0
        %v1830 = vadd.f32 %v1741, %v1829
        %1831 = vmatmul.bf16.gmra.mxu0 %v738
        %v1832 = vpop.f32.mrf.mxu0
        %v1833 = vadd.f32 %v1744, %v1832
        %v1834 = vpop.f32.mrf.mxu0
        %v1835 = vadd.f32 %v1746, %v1834
        %1836 = vmatmul.bf16.gmra.mxu0 %v741
        %v1837 = vpop.f32.mrf.mxu0
        %v1838 = vadd.f32 %v1749, %v1837
        %v1839 = vpop.f32.mrf.mxu0
        %v1840 = vadd.f32 %v1751, %v1839
        %1841 = vmatmul.bf16.gmra.mxu0 %v744
        %v1842 = vpop.f32.mrf.mxu0
        %v1843 = vadd.f32 %v1754, %v1842
        %v1844 = vpop.f32.mrf.mxu0
        %v1845 = vadd.f32 %v1756, %v1844
        %1846 = vmatmul.bf16.gmra.mxu0 %v747
        %v1847 = vpop.f32.mrf.mxu0
        %v1848 = vadd.f32 %v1759, %v1847
        %v1849 = vpop.f32.mrf.mxu0
        %v1850 = vadd.f32 %v1761, %v1849
        %1851 = vmatmul.bf16.gmra.mxu0 %v750
        %v1852 = vpop.f32.mrf.mxu0
        %v1853 = vadd.f32 %v1764, %v1852
        %v1854 = vpop.f32.mrf.mxu0
        %v1855 = vadd.f32 %v1766, %v1854
        %1856 = vmatmul.bf16.gmra.mxu0 %v753
        %v1857 = vpop.f32.mrf.mxu0
        %v1858 = vadd.f32 %v1769, %v1857
        %v1859 = vpop.f32.mrf.mxu0
        %v1860 = vadd.f32 %v1771, %v1859
        %1861 = vmatmul.bf16.gmra.mxu0 %v756
        %v1862 = vpop.f32.mrf.mxu0
        %v1863 = vadd.f32 %v1774, %v1862
        %v1864 = vpop.f32.mrf.mxu0
        %v1865 = vadd.f32 %v1776, %v1864
        %1866 = vmatmul.bf16.gmra.mxu0 %v759
        %v1867 = vpop.f32.mrf.mxu0
        %v1868 = vadd.f32 %v1779, %v1867
        %v1869 = vpop.f32.mrf.mxu0
        %v1870 = vadd.f32 %v1781, %v1869
        %1871 = vmatmul.bf16.gmra.mxu0 %v762
        %v1872 = vpop.f32.mrf.mxu0
        %v1873 = vadd.f32 %v1784, %v1872
        %v1874 = vpop.f32.mrf.mxu0
        %v1875 = vadd.f32 %v1786, %v1874
        %1876 = vdwg.mxu0
        %1877 = vmatpush.bf16.msra.mxu0 %v1254
        %1878 = vmatpush.bf16.msra.mxu0 %v1253
        %1879 = vmatpush.bf16.msra.mxu0 %v1252
        %1880 = vmatpush.bf16.msra.mxu0 %v1251
        %1881 = vmatpush.bf16.msra.mxu0 %v1250
        %1882 = vmatpush.bf16.msra.mxu0 %v1249
        %1883 = vmatpush.bf16.msra.mxu0 %v1248
        %1884 = vmatpush.bf16.msra.mxu0 %v1247
        %1885 = vmatmul.bf16.gmra.mxu0 %v718
        %v1886 = vpop.f32.mrf.mxu0
        %v1887 = vadd.f32 %v1798, %v1886
        %v1888 = vpop.f32.mrf.mxu0
        %v1889 = vadd.f32 %v1800, %v1888
        %1890 = vmatmul.bf16.gmra.mxu0 %v721
        %v1891 = vpop.f32.mrf.mxu0
        %v1892 = vadd.f32 %v1803, %v1891
        %v1893 = vpop.f32.mrf.mxu0
        %v1894 = vadd.f32 %v1805, %v1893
        %1895 = vmatmul.bf16.gmra.mxu0 %v724
        %v1896 = vpop.f32.mrf.mxu0
        %v1897 = vadd.f32 %v1808, %v1896
        %v1898 = vpop.f32.mrf.mxu0
        %v1899 = vadd.f32 %v1810, %v1898
        %1900 = vmatmul.bf16.gmra.mxu0 %v727
        %v1901 = vpop.f32.mrf.mxu0
        %v1902 = vadd.f32 %v1813, %v1901
        %v1903 = vpop.f32.mrf.mxu0
        %v1904 = vadd.f32 %v1815, %v1903
        %1905 = vmatmul.bf16.gmra.mxu0 %v730
        %v1906 = vpop.f32.mrf.mxu0
        %v1907 = vadd.f32 %v1818, %v1906
        %v1908 = vpop.f32.mrf.mxu0
        %v1909 = vadd.f32 %v1820, %v1908
        %1910 = vmatmul.bf16.gmra.mxu0 %v733
        %v1911 = vpop.f32.mrf.mxu0
        %v1912 = vadd.f32 %v1823, %v1911
        %v1913 = vpop.f32.mrf.mxu0
        %v1914 = vadd.f32 %v1825, %v1913
        %1915 = vmatmul.bf16.gmra.mxu0 %v736
        %v1916 = vpop.f32.mrf.mxu0
        %v1917 = vadd.f32 %v1828, %v1916
        %v1918 = vpop.f32.mrf.mxu0
        %v1919 = vadd.f32 %v1830, %v1918
        %1920 = vmatmul.bf16.gmra.mxu0 %v739
        %v1921 = vpop.f32.mrf.mxu0
        %v1922 = vadd.f32 %v1833, %v1921
        %v1923 = vpop.f32.mrf.mxu0
        %v1924 = vadd.f32 %v1835, %v1923
        %1925 = vmatmul.bf16.gmra.mxu0 %v742
        %v1926 = vpop.f32.mrf.mxu0
        %v1927 = vadd.f32 %v1838, %v1926
        %v1928 = vpop.f32.mrf.mxu0
        %v1929 = vadd.f32 %v1840, %v1928
        %1930 = vmatmul.bf16.gmra.mxu0 %v745
        %v1931 = vpop.f32.mrf.mxu0
        %v1932 = vadd.f32 %v1843, %v1931
        %v1933 = vpop.f32.mrf.mxu0
        %v1934 = vadd.f32 %v1845, %v1933
        %1935 = vmatmul.bf16.gmra.mxu0 %v748
        %v1936 = vpop.f32.mrf.mxu0
        %v1937 = vadd.f32 %v1848, %v1936
        %v1938 = vpop.f32.mrf.mxu0
        %v1939 = vadd.f32 %v1850, %v1938
        %1940 = vmatmul.bf16.gmra.mxu0 %v751
        %v1941 = vpop.f32.mrf.mxu0
        %v1942 = vadd.f32 %v1853, %v1941
        %v1943 = vpop.f32.mrf.mxu0
        %v1944 = vadd.f32 %v1855, %v1943
        %1945 = vmatmul.bf16.gmra.mxu0 %v754
        %v1946 = vpop.f32.mrf.mxu0
        %v1947 = vadd.f32 %v1858, %v1946
        %v1948 = vpop.f32.mrf.mxu0
        %v1949 = vadd.f32 %v1860, %v1948
        %1950 = vmatmul.bf16.gmra.mxu0 %v757
        %v1951 = vpop.f32.mrf.mxu0
        %v1952 = vadd.f32 %v1863, %v1951
        %v1953 = vpop.f32.mrf.mxu0
        %v1954 = vadd.f32 %v1865, %v1953
        %1955 = vmatmul.bf16.gmra.mxu0 %v760
        %v1956 = vpop.f32.mrf.mxu0
        %v1957 = vadd.f32 %v1868, %v1956
        %v1958 = vpop.f32.mrf.mxu0
        %v1959 = vadd.f32 %v1870, %v1958
        %1960 = vmatmul.bf16.gmra.mxu0 %v712
        %v1961 = vpop.f32.mrf.mxu0
        %v1962 = vadd.f32 %v1873, %v1961
        %v1963 = vpop.f32.mrf.mxu0
        %v1964 = vadd.f32 %v1875, %v1963
        %1965 = vdwg.mxu0
        %1966 = vmatpush.bf16.msra.mxu0 %v1262
        %1967 = vmatpush.bf16.msra.mxu0 %v1261
        %1968 = vmatpush.bf16.msra.mxu0 %v1260
        %1969 = vmatpush.bf16.msra.mxu0 %v1259
        %1970 = vmatpush.bf16.msra.mxu0 %v1258
        %1971 = vmatpush.bf16.msra.mxu0 %v1257
        %1972 = vmatpush.bf16.msra.mxu0 %v1256
        %1973 = vmatpush.bf16.msra.mxu0 %v1255
        %1974 = vmatmul.bf16.gmra.mxu0 %v719
        %v1975 = vpop.f32.mrf.mxu0
        %v1976 = vadd.f32 %v1887, %v1975
        %v1977 = vpop.f32.mrf.mxu0
        %v1978 = vadd.f32 %v1889, %v1977
        %1979 = vmatmul.bf16.gmra.mxu0 %v722
        %v1980 = vpop.f32.mrf.mxu0
        %v1981 = vadd.f32 %v1892, %v1980
        %v1982 = vpop.f32.mrf.mxu0
        %v1983 = vadd.f32 %v1894, %v1982
        %1984 = vmatmul.bf16.gmra.mxu0 %v725
        %v1985 = vpop.f32.mrf.mxu0
        %v1986 = vadd.f32 %v1897, %v1985
        %v1987 = vpop.f32.mrf.mxu0
        %v1988 = vadd.f32 %v1899, %v1987
        %1989 = vmatmul.bf16.gmra.mxu0 %v728
        %v1990 = vpop.f32.mrf.mxu0
        %v1991 = vadd.f32 %v1902, %v1990
        %v1992 = vpop.f32.mrf.mxu0
        %v1993 = vadd.f32 %v1904, %v1992
        %1994 = vmatmul.bf16.gmra.mxu0 %v731
        %v1995 = vpop.f32.mrf.mxu0
        %v1996 = vadd.f32 %v1907, %v1995
        %v1997 = vpop.f32.mrf.mxu0
        %v1998 = vadd.f32 %v1909, %v1997
        %1999 = vmatmul.bf16.gmra.mxu0 %v734
        %v2000 = vpop.f32.mrf.mxu0
        %v2001 = vadd.f32 %v1912, %v2000
        %v2002 = vpop.f32.mrf.mxu0
        %v2003 = vadd.f32 %v1914, %v2002
        %2004 = vmatmul.bf16.gmra.mxu0 %v737
        %v2005 = vpop.f32.mrf.mxu0
        %v2006 = vadd.f32 %v1917, %v2005
        %v2007 = vpop.f32.mrf.mxu0
        %v2008 = vadd.f32 %v1919, %v2007
        %2009 = vmatmul.bf16.gmra.mxu0 %v740
        %v2010 = vpop.f32.mrf.mxu0
        %v2011 = vadd.f32 %v1922, %v2010
        %v2012 = vpop.f32.mrf.mxu0
        %v2013 = vadd.f32 %v1924, %v2012
        %2014 = vmatmul.bf16.gmra.mxu0 %v743
        %v2015 = vpop.f32.mrf.mxu0
        %v2016 = vadd.f32 %v1927, %v2015
        %v2017 = vpop.f32.mrf.mxu0
        %v2018 = vadd.f32 %v1929, %v2017
        %2019 = vmatmul.bf16.gmra.mxu0 %v746
        %v2020 = vpop.f32.mrf.mxu0
        %v2021 = vadd.f32 %v1932, %v2020
        %v2022 = vpop.f32.mrf.mxu0
        %v2023 = vadd.f32 %v1934, %v2022
        %2024 = vmatmul.bf16.gmra.mxu0 %v749
        %v2025 = vpop.f32.mrf.mxu0
        %v2026 = vadd.f32 %v1937, %v2025
        %v2027 = vpop.f32.mrf.mxu0
        %v2028 = vadd.f32 %v1939, %v2027
        %2029 = vmatmul.bf16.gmra.mxu0 %v752
        %v2030 = vpop.f32.mrf.mxu0
        %v2031 = vadd.f32 %v1942, %v2030
        %v2032 = vpop.f32.mrf.mxu0
        %v2033 = vadd.f32 %v1944, %v2032
        %2034 = vmatmul.bf16.gmra.mxu0 %v755
        %v2035 = vpop.f32.mrf.mxu0
        %v2036 = vadd.f32 %v1947, %v2035
        %v2037 = vpop.f32.mrf.mxu0
        %v2038 = vadd.f32 %v1949, %v2037
        %2039 = vmatmul.bf16.gmra.mxu0 %v758
        %v2040 = vpop.f32.mrf.mxu0
        %v2041 = vadd.f32 %v1952, %v2040
        %v2042 = vpop.f32.mrf.mxu0
        %v2043 = vadd.f32 %v1954, %v2042
        %2044 = vmatmul.bf16.gmra.mxu0 %v761
        %v2045 = vpop.f32.mrf.mxu0
        %v2046 = vadd.f32 %v1957, %v2045
        %v2047 = vpop.f32.mrf.mxu0
        %v2048 = vadd.f32 %v1959, %v2047
        %2049 = vmatmul.bf16.gmra.mxu0 %v713
        %v2050 = vpop.f32.mrf.mxu0
        %v2051 = vadd.f32 %v1962, %v2050
        %v2052 = vpop.f32.mrf.mxu0
        %v2053 = vadd.f32 %v1964, %v2052
        %2054 = vdwg.mxu0
        %2055 = vmatpush.bf16.msra.mxu0 %v1270
        %2056 = vmatpush.bf16.msra.mxu0 %v1269
        %2057 = vmatpush.bf16.msra.mxu0 %v1268
        %2058 = vmatpush.bf16.msra.mxu0 %v1267
        %2059 = vmatpush.bf16.msra.mxu0 %v1266
        %2060 = vmatpush.bf16.msra.mxu0 %v1265
        %2061 = vmatpush.bf16.msra.mxu0 %v1264
        %2062 = vmatpush.bf16.msra.mxu0 %v1263
        %2063 = vmatmul.bf16.gmra.mxu0 %v720
        %v2064 = vpop.f32.mrf.mxu0
        %v2065 = vadd.f32 %v1976, %v2064
        %v2066 = vpop.f32.mrf.mxu0
        %v2067 = vadd.f32 %v1978, %v2066
        %2068 = vmatmul.bf16.gmra.mxu0 %v723
        %v2069 = vpop.f32.mrf.mxu0
        %v2070 = vadd.f32 %v1981, %v2069
        %v2071 = vpop.f32.mrf.mxu0
        %v2072 = vadd.f32 %v1983, %v2071
        %2073 = vmatmul.bf16.gmra.mxu0 %v726
        %v2074 = vpop.f32.mrf.mxu0
        %v2075 = vadd.f32 %v1986, %v2074
        %v2076 = vpop.f32.mrf.mxu0
        %v2077 = vadd.f32 %v1988, %v2076
        %2078 = vmatmul.bf16.gmra.mxu0 %v729
        %v2079 = vpop.f32.mrf.mxu0
        %v2080 = vadd.f32 %v1991, %v2079
        %v2081 = vpop.f32.mrf.mxu0
        %v2082 = vadd.f32 %v1993, %v2081
        %2083 = vmatmul.bf16.gmra.mxu0 %v732
        %v2084 = vpop.f32.mrf.mxu0
        %v2085 = vadd.f32 %v1996, %v2084
        %v2086 = vpop.f32.mrf.mxu0
        %v2087 = vadd.f32 %v1998, %v2086
        %2088 = vmatmul.bf16.gmra.mxu0 %v735
        %v2089 = vpop.f32.mrf.mxu0
        %v2090 = vadd.f32 %v2001, %v2089
        %v2091 = vpop.f32.mrf.mxu0
        %v2092 = vadd.f32 %v2003, %v2091
        %2093 = vmatmul.bf16.gmra.mxu0 %v738
        %v2094 = vpop.f32.mrf.mxu0
        %v2095 = vadd.f32 %v2006, %v2094
        %v2096 = vpop.f32.mrf.mxu0
        %v2097 = vadd.f32 %v2008, %v2096
        %2098 = vmatmul.bf16.gmra.mxu0 %v741
        %v2099 = vpop.f32.mrf.mxu0
        %v2100 = vadd.f32 %v2011, %v2099
        %v2101 = vpop.f32.mrf.mxu0
        %v2102 = vadd.f32 %v2013, %v2101
        %2103 = vmatmul.bf16.gmra.mxu0 %v744
        %v2104 = vpop.f32.mrf.mxu0
        %v2105 = vadd.f32 %v2016, %v2104
        %v2106 = vpop.f32.mrf.mxu0
        %v2107 = vadd.f32 %v2018, %v2106
        %2108 = vmatmul.bf16.gmra.mxu0 %v747
        %v2109 = vpop.f32.mrf.mxu0
        %v2110 = vadd.f32 %v2021, %v2109
        %v2111 = vpop.f32.mrf.mxu0
        %v2112 = vadd.f32 %v2023, %v2111
        %2113 = vmatmul.bf16.gmra.mxu0 %v750
        %v2114 = vpop.f32.mrf.mxu0
        %v2115 = vadd.f32 %v2026, %v2114
        %v2116 = vpop.f32.mrf.mxu0
        %v2117 = vadd.f32 %v2028, %v2116
        %2118 = vmatmul.bf16.gmra.mxu0 %v753
        %v2119 = vpop.f32.mrf.mxu0
        %v2120 = vadd.f32 %v2031, %v2119
        %v2121 = vpop.f32.mrf.mxu0
        %v2122 = vadd.f32 %v2033, %v2121
        %2123 = vmatmul.bf16.gmra.mxu0 %v756
        %v2124 = vpop.f32.mrf.mxu0
        %v2125 = vadd.f32 %v2036, %v2124
        %v2126 = vpop.f32.mrf.mxu0
        %v2127 = vadd.f32 %v2038, %v2126
        %2128 = vmatmul.bf16.gmra.mxu0 %v759
        %v2129 = vpop.f32.mrf.mxu0
        %v2130 = vadd.f32 %v2041, %v2129
        %v2131 = vpop.f32.mrf.mxu0
        %v2132 = vadd.f32 %v2043, %v2131
        %2133 = vmatmul.bf16.gmra.mxu0 %v762
        %v2134 = vpop.f32.mrf.mxu0
        %v2135 = vadd.f32 %v2046, %v2134
        %v2136 = vpop.f32.mrf.mxu0
        %v2137 = vadd.f32 %v2048, %v2136
        %2138 = vmatmul.bf16.gmra.mxu0 %v714
        %v2139 = vpop.f32.mrf.mxu0
        %v2140 = vadd.f32 %v2051, %v2139
        %v2141 = vpop.f32.mrf.mxu0
        %v2142 = vadd.f32 %v2053, %v2141
        %2143 = vdwg.mxu0
        %v2144 = vmax.f32 %v2065, 0.0
        %v2145 = vmax.f32 %v2067, 0.0
        %v2146 = vmax.f32 %v2070, 0.0
        %v2147 = vmax.f32 %v2072, 0.0
        %v2148 = vmax.f32 %v2075, 0.0
        %v2149 = vmax.f32 %v2077, 0.0
        %v2150 = vmax.f32 %v2080, 0.0
        %v2151 = vmax.f32 %v2082, 0.0
        %v2152 = vmax.f32 %v2085, 0.0
        %v2153 = vmax.f32 %v2087, 0.0
        %v2154 = vmax.f32 %v2090, 0.0
        %v2155 = vmax.f32 %v2092, 0.0
        %v2156 = vmax.f32 %v2095, 0.0
        %v2157 = vmax.f32 %v2097, 0.0
        %v2158 = vmax.f32 %v2100, 0.0
        %v2159 = vmax.f32 %v2102, 0.0
        %v2160 = vmax.f32 %v2105, 0.0
        %v2161 = vmax.f32 %v2107, 0.0
        %v2162 = vmax.f32 %v2110, 0.0
        %v2163 = vmax.f32 %v2112, 0.0
        %v2164 = vmax.f32 %v2115, 0.0
        %v2165 = vmax.f32 %v2117, 0.0
        %v2166 = vmax.f32 %v2120, 0.0
        %v2167 = vmax.f32 %v2122, 0.0
        %v2168 = vmax.f32 %v2125, 0.0
        %v2169 = vmax.f32 %v2127, 0.0
        %v2170 = vmax.f32 %v2130, 0.0
        %v2171 = vmax.f32 %v2132, 0.0
        %v2172 = vmax.f32 %v2135, 0.0
        %v2173 = vmax.f32 %v2137, 0.0
        %v2174 = vmax.f32 %v2140, 0.0
        %v2175 = vmax.f32 %v2142, 0.0
        %v2208 = vrot.slane %v2144, 7
        %v2209 = vrot.slane %v2145, 7
        %v2210 = vsel %vm318, %v2208, %v2209
        %v2211 = vrot.slane %v2146, 7
        %v2212 = vrot.slane %v2147, 7
        %v2213 = vsel %vm318, %v2211, %v2212
        %v2214 = vrot.slane %v2148, 7
        %v2215 = vrot.slane %v2149, 7
        %v2216 = vsel %vm318, %v2214, %v2215
        %v2217 = vrot.slane %v2150, 7
        %v2218 = vrot.slane %v2151, 7
        %v2219 = vsel %vm318, %v2217, %v2218
        %v2220 = vrot.slane %v2152, 7
        %v2221 = vrot.slane %v2153, 7
        %v2222 = vsel %vm318, %v2220, %v2221
        %v2223 = vrot.slane %v2154, 7
        %v2224 = vrot.slane %v2155, 7
        %v2225 = vsel %vm318, %v2223, %v2224
        %v2226 = vrot.slane %v2156, 7
        %v2227 = vrot.slane %v2157, 7
        %v2228 = vsel %vm318, %v2226, %v2227
        %v2229 = vrot.slane %v2158, 7
        %v2230 = vrot.slane %v2159, 7
        %v2231 = vsel %vm318, %v2229, %v2230
        %v2232 = vrot.slane %v2160, 7
        %v2233 = vrot.slane %v2161, 7
        %v2234 = vsel %vm318, %v2232, %v2233
        %v2235 = vrot.slane %v2162, 7
        %v2236 = vrot.slane %v2163, 7
        %v2237 = vsel %vm318, %v2235, %v2236
        %v2238 = vrot.slane %v2164, 7
        %v2239 = vrot.slane %v2165, 7
        %v2240 = vsel %vm318, %v2238, %v2239
        %v2241 = vrot.slane %v2166, 7
        %v2242 = vrot.slane %v2167, 7
        %v2243 = vsel %vm318, %v2241, %v2242
        %v2244 = vrot.slane %v2168, 7
        %v2245 = vrot.slane %v2169, 7
        %v2246 = vsel %vm318, %v2244, %v2245
        %v2247 = vrot.slane %v2170, 7
        %v2248 = vrot.slane %v2171, 7
        %v2249 = vsel %vm318, %v2247, %v2248
        %v2250 = vrot.slane %v2172, 7
        %v2251 = vrot.slane %v2173, 7
        %v2252 = vsel %vm318, %v2250, %v2251
        %v2253 = vrot.slane %v2174, 7
        %v2254 = vrot.slane %v2175, 7
        %v2255 = vsel %vm318, %v2253, %v2254
        %v2304 = vsel %vm318, 0.0, %v2208
        %v2305 = vsel %vm318, 0.0, %v2211
        %v2306 = vsel %vm318, 0.0, %v2214
        %v2307 = vsel %vm318, 0.0, %v2217
        %v2308 = vsel %vm318, 0.0, %v2220
        %v2309 = vsel %vm318, 0.0, %v2223
        %v2310 = vsel %vm318, 0.0, %v2226
        %v2311 = vsel %vm318, 0.0, %v2229
        %v2312 = vsel %vm318, 0.0, %v2232
        %v2313 = vsel %vm318, 0.0, %v2235
        %v2314 = vsel %vm318, 0.0, %v2238
        %v2315 = vsel %vm318, 0.0, %v2241
        %v2316 = vsel %vm318, 0.0, %v2244
        %v2317 = vsel %vm318, 0.0, %v2247
        %v2318 = vsel %vm318, 0.0, %v2250
        %v2319 = vsel %vm318, 0.0, %v2253
        %v2320 = vsel %vm318, %v2209, 0.0
        %v2321 = vsel %vm318, %v2212, 0.0
        %v2322 = vsel %vm318, %v2215, 0.0
        %v2323 = vsel %vm318, %v2218, 0.0
        %v2324 = vsel %vm318, %v2221, 0.0
        %v2325 = vsel %vm318, %v2224, 0.0
        %v2326 = vsel %vm318, %v2227, 0.0
        %v2327 = vsel %vm318, %v2230, 0.0
        %v2328 = vsel %vm318, %v2233, 0.0
        %v2329 = vsel %vm318, %v2236, 0.0
        %v2330 = vsel %vm318, %v2239, 0.0
        %v2331 = vsel %vm318, %v2242, 0.0
        %v2332 = vsel %vm318, %v2245, 0.0
        %v2333 = vsel %vm318, %v2248, 0.0
        %v2334 = vsel %vm318, %v2251, 0.0
        %v2335 = vsel %vm318, %v2254, 0.0
        %v2366 = vrot.slane %v2304, 1
        %v2367 = vrot.slane %v2210, 1
        %v2368 = vsel %vm478, %v2366, %v2367
        %v2369 = vrot.slane %v2320, 1
        %v2370 = vsel %vm478, %v2367, %v2369
        %v2371 = vrot.slane %v2305, 1
        %v2372 = vrot.slane %v2213, 1
        %v2373 = vsel %vm478, %v2371, %v2372
        %v2374 = vrot.slane %v2321, 1
        %v2375 = vsel %vm478, %v2372, %v2374
        %v2376 = vrot.slane %v2306, 1
        %v2377 = vrot.slane %v2216, 1
        %v2378 = vsel %vm478, %v2376, %v2377
        %v2379 = vrot.slane %v2322, 1
        %v2380 = vsel %vm478, %v2377, %v2379
        %v2381 = vrot.slane %v2307, 1
        %v2382 = vrot.slane %v2219, 1
        %v2383 = vsel %vm478, %v2381, %v2382
        %v2384 = vrot.slane %v2323, 1
        %v2385 = vsel %vm478, %v2382, %v2384
        %v2386 = vrot.slane %v2308, 1
        %v2387 = vrot.slane %v2222, 1
        %v2388 = vsel %vm478, %v2386, %v2387
        %v2389 = vrot.slane %v2324, 1
        %v2390 = vsel %vm478, %v2387, %v2389
        %v2391 = vrot.slane %v2309, 1
        %v2392 = vrot.slane %v2225, 1
        %v2393 = vsel %vm478, %v2391, %v2392
        %v2394 = vrot.slane %v2325, 1
        %v2395 = vsel %vm478, %v2392, %v2394
        %v2396 = vrot.slane %v2310, 1
        %v2397 = vrot.slane %v2228, 1
        %v2398 = vsel %vm478, %v2396, %v2397
        %v2399 = vrot.slane %v2326, 1
        %v2400 = vsel %vm478, %v2397, %v2399
        %v2401 = vrot.slane %v2311, 1
        %v2402 = vrot.slane %v2231, 1
        %v2403 = vsel %vm478, %v2401, %v2402
        %v2404 = vrot.slane %v2327, 1
        %v2405 = vsel %vm478, %v2402, %v2404
        %v2406 = vrot.slane %v2312, 1
        %v2407 = vrot.slane %v2234, 1
        %v2408 = vsel %vm478, %v2406, %v2407
        %v2409 = vrot.slane %v2328, 1
        %v2410 = vsel %vm478, %v2407, %v2409
        %v2411 = vrot.slane %v2313, 1
        %v2412 = vrot.slane %v2237, 1
        %v2413 = vsel %vm478, %v2411, %v2412
        %v2414 = vrot.slane %v2329, 1
        %v2415 = vsel %vm478, %v2412, %v2414
        %v2416 = vrot.slane %v2314, 1
        %v2417 = vrot.slane %v2240, 1
        %v2418 = vsel %vm478, %v2416, %v2417
        %v2419 = vrot.slane %v2330, 1
        %v2420 = vsel %vm478, %v2417, %v2419
        %v2421 = vrot.slane %v2315, 1
        %v2422 = vrot.slane %v2243, 1
        %v2423 = vsel %vm478, %v2421, %v2422
        %v2424 = vrot.slane %v2331, 1
        %v2425 = vsel %vm478, %v2422, %v2424
        %v2426 = vrot.slane %v2316, 1
        %v2427 = vrot.slane %v2246, 1
        %v2428 = vsel %vm478, %v2426, %v2427
        %v2429 = vrot.slane %v2332, 1
        %v2430 = vsel %vm478, %v2427, %v2429
        %v2431 = vrot.slane %v2317, 1
        %v2432 = vrot.slane %v2249, 1
        %v2433 = vsel %vm478, %v2431, %v2432
        %v2434 = vrot.slane %v2333, 1
        %v2435 = vsel %vm478, %v2432, %v2434
        %v2436 = vrot.slane %v2318, 1
        %v2437 = vrot.slane %v2252, 1
        %v2438 = vsel %vm478, %v2436, %v2437
        %v2439 = vrot.slane %v2334, 1
        %v2440 = vsel %vm478, %v2437, %v2439
        %v2471 = vrot.slane %v2304, 2
        %v2472 = vrot.slane %v2210, 2
        %v2473 = vsel %vm587, %v2471, %v2472
        %v2474 = vrot.slane %v2320, 2
        %v2475 = vsel %vm587, %v2472, %v2474
        %v2476 = vrot.slane %v2305, 2
        %v2477 = vrot.slane %v2213, 2
        %v2478 = vsel %vm587, %v2476, %v2477
        %v2479 = vrot.slane %v2321, 2
        %v2480 = vsel %vm587, %v2477, %v2479
        %v2481 = vrot.slane %v2306, 2
        %v2482 = vrot.slane %v2216, 2
        %v2483 = vsel %vm587, %v2481, %v2482
        %v2484 = vrot.slane %v2322, 2
        %v2485 = vsel %vm587, %v2482, %v2484
        %v2486 = vrot.slane %v2307, 2
        %v2487 = vrot.slane %v2219, 2
        %v2488 = vsel %vm587, %v2486, %v2487
        %v2489 = vrot.slane %v2323, 2
        %v2490 = vsel %vm587, %v2487, %v2489
        %v2491 = vrot.slane %v2308, 2
        %v2492 = vrot.slane %v2222, 2
        %v2493 = vsel %vm587, %v2491, %v2492
        %v2494 = vrot.slane %v2324, 2
        %v2495 = vsel %vm587, %v2492, %v2494
        %v2496 = vrot.slane %v2309, 2
        %v2497 = vrot.slane %v2225, 2
        %v2498 = vsel %vm587, %v2496, %v2497
        %v2499 = vrot.slane %v2325, 2
        %v2500 = vsel %vm587, %v2497, %v2499
        %v2501 = vrot.slane %v2310, 2
        %v2502 = vrot.slane %v2228, 2
        %v2503 = vsel %vm587, %v2501, %v2502
        %v2504 = vrot.slane %v2326, 2
        %v2505 = vsel %vm587, %v2502, %v2504
        %v2506 = vrot.slane %v2311, 2
        %v2507 = vrot.slane %v2231, 2
        %v2508 = vsel %vm587, %v2506, %v2507
        %v2509 = vrot.slane %v2327, 2
        %v2510 = vsel %vm587, %v2507, %v2509
        %v2511 = vrot.slane %v2312, 2
        %v2512 = vrot.slane %v2234, 2
        %v2513 = vsel %vm587, %v2511, %v2512
        %v2514 = vrot.slane %v2328, 2
        %v2515 = vsel %vm587, %v2512, %v2514
        %v2516 = vrot.slane %v2313, 2
        %v2517 = vrot.slane %v2237, 2
        %v2518 = vsel %vm587, %v2516, %v2517
        %v2519 = vrot.slane %v2329, 2
        %v2520 = vsel %vm587, %v2517, %v2519
        %v2521 = vrot.slane %v2314, 2
        %v2522 = vrot.slane %v2240, 2
        %v2523 = vsel %vm587, %v2521, %v2522
        %v2524 = vrot.slane %v2330, 2
        %v2525 = vsel %vm587, %v2522, %v2524
        %v2526 = vrot.slane %v2315, 2
        %v2527 = vrot.slane %v2243, 2
        %v2528 = vsel %vm587, %v2526, %v2527
        %v2529 = vrot.slane %v2331, 2
        %v2530 = vsel %vm587, %v2527, %v2529
        %v2531 = vrot.slane %v2316, 2
        %v2532 = vrot.slane %v2246, 2
        %v2533 = vsel %vm587, %v2531, %v2532
        %v2534 = vrot.slane %v2332, 2
        %v2535 = vsel %vm587, %v2532, %v2534
        %v2536 = vrot.slane %v2317, 2
        %v2537 = vrot.slane %v2249, 2
        %v2538 = vsel %vm587, %v2536, %v2537
        %v2539 = vrot.slane %v2333, 2
        %v2540 = vsel %vm587, %v2537, %v2539
        %v2541 = vrot.slane %v2318, 2
        %v2542 = vrot.slane %v2252, 2
        %v2543 = vsel %vm587, %v2541, %v2542
        %v2544 = vrot.slane %v2334, 2
        %v2545 = vsel %vm587, %v2542, %v2544
        %v2578 = vrot.slane %v2319, 1
        %v2579 = vrot.slane %v2255, 1
        %v2580 = vsel %vm478, %v2578, %v2579
        %v2581 = vrot.slane %v2335, 1
        %v2582 = vsel %vm478, %v2579, %v2581
        %v2585 = vrot.slane %v2319, 2
        %v2586 = vrot.slane %v2255, 2
        %v2587 = vsel %vm587, %v2585, %v2586
        %v2588 = vrot.slane %v2335, 2
        %v2589 = vsel %vm587, %v2586, %v2588
        %v2592 = vpack.c.bf16 %v2210, %v2304
        %v2593 = vpack.c.bf16 %v2370, %v2368
        %v2594 = vpack.c.bf16 %v2475, %v2473
        %v2595 = vpack.c.bf16 %v2213, %v2305
        %v2596 = vpack.c.bf16 %v2375, %v2373
        %v2597 = vpack.c.bf16 %v2480, %v2478
        %v2598 = vpack.c.bf16 %v2216, %v2306
        %v2599 = vpack.c.bf16 %v2380, %v2378
        %v2600 = vpack.c.bf16 %v2485, %v2483
        %v2601 = vpack.c.bf16 %v2219, %v2307
        %v2602 = vpack.c.bf16 %v2385, %v2383
        %v2603 = vpack.c.bf16 %v2490, %v2488
        %v2604 = vpack.c.bf16 %v2222, %v2308
        %v2605 = vpack.c.bf16 %v2390, %v2388
        %v2606 = vpack.c.bf16 %v2495, %v2493
        %v2607 = vpack.c.bf16 %v2225, %v2309
        %v2608 = vpack.c.bf16 %v2395, %v2393
        %v2609 = vpack.c.bf16 %v2500, %v2498
        %v2610 = vpack.c.bf16 %v2228, %v2310
        %v2611 = vpack.c.bf16 %v2400, %v2398
        %v2612 = vpack.c.bf16 %v2505, %v2503
        %v2613 = vpack.c.bf16 %v2231, %v2311
        %v2614 = vpack.c.bf16 %v2405, %v2403
        %v2615 = vpack.c.bf16 %v2510, %v2508
        %v2616 = vpack.c.bf16 %v2234, %v2312
        %v2617 = vpack.c.bf16 %v2410, %v2408
        %v2618 = vpack.c.bf16 %v2515, %v2513
        %v2619 = vpack.c.bf16 %v2237, %v2313
        %v2620 = vpack.c.bf16 %v2415, %v2413
        %v2621 = vpack.c.bf16 %v2520, %v2518
        %v2622 = vpack.c.bf16 %v2240, %v2314
        %v2623 = vpack.c.bf16 %v2420, %v2418
        %v2624 = vpack.c.bf16 %v2525, %v2523
        %v2625 = vpack.c.bf16 %v2243, %v2315
        %v2626 = vpack.c.bf16 %v2425, %v2423
        %v2627 = vpack.c.bf16 %v2530, %v2528
        %v2628 = vpack.c.bf16 %v2246, %v2316
        %v2629 = vpack.c.bf16 %v2430, %v2428
        %v2630 = vpack.c.bf16 %v2535, %v2533
        %v2631 = vpack.c.bf16 %v2249, %v2317
        %v2632 = vpack.c.bf16 %v2435, %v2433
        %v2633 = vpack.c.bf16 %v2540, %v2538
        %v2634 = vpack.c.bf16 %v2252, %v2318
        %v2635 = vpack.c.bf16 %v2440, %v2438
        %v2636 = vpack.c.bf16 %v2545, %v2543
        %v2637 = vpack.c.bf16 %v2255, %v2319
        %v2638 = vpack.c.bf16 %v2582, %v2580
        %v2639 = vpack.c.bf16 %v2589, %v2587
        %v2640 = vld [vmem:[%s3] sm:$0xf]
        %v2641 = vld [vmem:[%s3 + $0x4] sm:$0xf]
        %v2642 = vld [vmem:[%s3 + $0x8] sm:$0xf]
        %v2643 = vld [vmem:[%s3 + $0xc] sm:$0xf]
        %v2644 = vld [vmem:[%s3 + $0x10] sm:$0xf]
        %v2645 = vld [vmem:[%s3 + $0x14] sm:$0xf]
        %v2646 = vld [vmem:[%s3 + $0x18] sm:$0xf]
        %v2647 = vld [vmem:[%s3 + $0x1c] sm:$0xf]
        %v2648 = vld [vmem:[%s3 + $0x20] sm:$0xf]
        %v2649 = vld [vmem:[%s3 + $0x24] sm:$0xf]
        %v2650 = vld [vmem:[%s3 + $0x28] sm:$0xf]
        %v2651 = vld [vmem:[%s3 + $0x2c] sm:$0xf]
        %v2652 = vld [vmem:[%s3 + $0x30] sm:$0xf]
        %v2653 = vld [vmem:[%s3 + $0x34] sm:$0xf]
        %v2654 = vld [vmem:[%s3 + $0x38] sm:$0xf]
        %v2655 = vld [vmem:[%s3 + $0x3c] sm:$0xf]
        %v2656 = vld [vmem:[%s3 + $0x40] sm:$0xf]
        %v2657 = vld [vmem:[%s3 + $0x44] sm:$0xf]
        %v2658 = vld [vmem:[%s3 + $0x48] sm:$0xf]
        %v2659 = vld [vmem:[%s3 + $0x4c] sm:$0xf]
        %v2660 = vld [vmem:[%s3 + $0x50] sm:$0xf]
        %v2661 = vld [vmem:[%s3 + $0x54] sm:$0xf]
        %v2662 = vld [vmem:[%s3 + $0x58] sm:$0xf]
        %v2663 = vld [vmem:[%s3 + $0x5c] sm:$0xf]
        %v2664 = vld [vmem:[%s3 + $0x60] sm:$0xf]
        %v2665 = vld [vmem:[%s3 + $0x64] sm:$0xf]
        %v2666 = vld [vmem:[%s3 + $0x68] sm:$0xf]
        %v2667 = vld [vmem:[%s3 + $0x6c] sm:$0xf]
        %v2668 = vld [vmem:[%s3 + $0x70] sm:$0xf]
        %v2669 = vld [vmem:[%s3 + $0x74] sm:$0xf]
        %v2670 = vld [vmem:[%s3 + $0x78] sm:$0xf]
        %v2671 = vld [vmem:[%s3 + $0x7c] sm:$0xf]
        %v2672 = vld [vmem:[%s3 + $0x80] sm:$0xf]
        %v2673 = vld [vmem:[%s3 + $0x84] sm:$0xf]
        %v2674 = vld [vmem:[%s3 + $0x88] sm:$0xf]
        %v2675 = vld [vmem:[%s3 + $0x8c] sm:$0xf]
        %v2676 = vld [vmem:[%s3 + $0x90] sm:$0xf]
        %v2677 = vld [vmem:[%s3 + $0x94] sm:$0xf]
        %v2678 = vld [vmem:[%s3 + $0x98] sm:$0xf]
        %v2679 = vld [vmem:[%s3 + $0x9c] sm:$0xf]
        %v2680 = vld [vmem:[%s3 + $0xa0] sm:$0xf]
        %v2681 = vld [vmem:[%s3 + $0xa4] sm:$0xf]
        %v2682 = vld [vmem:[%s3 + $0xa8] sm:$0xf]
        %v2683 = vld [vmem:[%s3 + $0xac] sm:$0xf]
        %v2684 = vld [vmem:[%s3 + $0xb0] sm:$0xf]
        %v2685 = vld [vmem:[%s3 + $0xb4] sm:$0xf]
        %v2686 = vld [vmem:[%s3 + $0xb8] sm:$0xf]
        %v2687 = vld [vmem:[%s3 + $0xbc] sm:$0xf]
        %v2688 = vld [vmem:[%s3 + $0xc0] sm:$0xf]
        %v2689 = vld [vmem:[%s3 + $0xc4] sm:$0xf]
        %v2690 = vld [vmem:[%s3 + $0xc8] sm:$0xf]
        %v2691 = vld [vmem:[%s3 + $0xcc] sm:$0xf]
        %v2692 = vld [vmem:[%s3 + $0xd0] sm:$0xf]
        %v2693 = vld [vmem:[%s3 + $0xd4] sm:$0xf]
        %v2694 = vld [vmem:[%s3 + $0xd8] sm:$0xf]
        %v2695 = vld [vmem:[%s3 + $0xdc] sm:$0xf]
        %v2696 = vld [vmem:[%s3 + $0xe0] sm:$0xf]
        %v2697 = vld [vmem:[%s3 + $0xe4] sm:$0xf]
        %v2698 = vld [vmem:[%s3 + $0xe8] sm:$0xf]
        %v2699 = vld [vmem:[%s3 + $0xec] sm:$0xf]
        %v2700 = vld [vmem:[%s3 + $0xf0] sm:$0xf]
        %v2701 = vld [vmem:[%s3 + $0xf4] sm:$0xf]
        %v2702 = vld [vmem:[%s3 + $0xf8] sm:$0xf]
        %v2703 = vld [vmem:[%s3 + $0xfc] sm:$0xf]
        %v2704 = vld [vmem:[%s3 + $0x100] sm:$0xf]
        %v2705 = vld [vmem:[%s3 + $0x104] sm:$0xf]
        %v2706 = vld [vmem:[%s3 + $0x108] sm:$0xf]
        %v2707 = vld [vmem:[%s3 + $0x10c] sm:$0xf]
        %v2708 = vld [vmem:[%s3 + $0x110] sm:$0xf]
        %v2709 = vld [vmem:[%s3 + $0x114] sm:$0xf]
        %v2710 = vld [vmem:[%s3 + $0x118] sm:$0xf]
        %v2711 = vld [vmem:[%s3 + $0x11c] sm:$0xf]
        %v2712 = vld [vmem:[%s3 + $0x120] sm:$0xf]
        %v2713 = vld [vmem:[%s3 + $0x124] sm:$0xf]
        %v2714 = vld [vmem:[%s3 + $0x128] sm:$0xf]
        %v2715 = vld [vmem:[%s3 + $0x12c] sm:$0xf]
        %v2716 = vld [vmem:[%s3 + $0x130] sm:$0xf]
        %v2717 = vld [vmem:[%s3 + $0x134] sm:$0xf]
        %v2718 = vld [vmem:[%s3 + $0x138] sm:$0xf]
        %v2719 = vld [vmem:[%s3 + $0x13c] sm:$0xf]
        %v2720 = vld [vmem:[%s3 + $0x140] sm:$0xf]
        %v2721 = vld [vmem:[%s3 + $0x144] sm:$0xf]
        %v2722 = vld [vmem:[%s3 + $0x148] sm:$0xf]
        %v2723 = vld [vmem:[%s3 + $0x14c] sm:$0xf]
        %v2724 = vld [vmem:[%s3 + $0x150] sm:$0xf]
        %v2725 = vld [vmem:[%s3 + $0x154] sm:$0xf]
        %v2726 = vld [vmem:[%s3 + $0x158] sm:$0xf]
        %v2727 = vld [vmem:[%s3 + $0x15c] sm:$0xf]
        %v2728 = vld [vmem:[%s3 + $0x160] sm:$0xf]
        %v2729 = vld [vmem:[%s3 + $0x164] sm:$0xf]
        %v2730 = vld [vmem:[%s3 + $0x168] sm:$0xf]
        %v2731 = vld [vmem:[%s3 + $0x16c] sm:$0xf]
        %v2732 = vld [vmem:[%s3 + $0x170] sm:$0xf]
        %v2733 = vld [vmem:[%s3 + $0x174] sm:$0xf]
        %v2734 = vld [vmem:[%s3 + $0x178] sm:$0xf]
        %v2735 = vld [vmem:[%s3 + $0x17c] sm:$0xf]
        %v2736 = vld [vmem:[%s3 + $0x180] sm:$0xf]
        %v2737 = vld [vmem:[%s3 + $0x184] sm:$0xf]
        %v2738 = vld [vmem:[%s3 + $0x188] sm:$0xf]
        %v2739 = vld [vmem:[%s3 + $0x18c] sm:$0xf]
        %v2740 = vld [vmem:[%s3 + $0x190] sm:$0xf]
        %v2741 = vld [vmem:[%s3 + $0x194] sm:$0xf]
        %v2742 = vld [vmem:[%s3 + $0x198] sm:$0xf]
        %v2743 = vld [vmem:[%s3 + $0x19c] sm:$0xf]
        %v2744 = vld [vmem:[%s3 + $0x1a0] sm:$0xf]
        %v2745 = vld [vmem:[%s3 + $0x1a4] sm:$0xf]
        %v2746 = vld [vmem:[%s3 + $0x1a8] sm:$0xf]
        %v2747 = vld [vmem:[%s3 + $0x1ac] sm:$0xf]
        %v2748 = vld [vmem:[%s3 + $0x1b0] sm:$0xf]
        %v2749 = vld [vmem:[%s3 + $0x1b4] sm:$0xf]
        %v2750 = vld [vmem:[%s3 + $0x1b8] sm:$0xf]
        %v2751 = vld [vmem:[%s3 + $0x1bc] sm:$0xf]
        %v2752 = vld [vmem:[%s3 + $0x1c0] sm:$0xf]
        %v2753 = vld [vmem:[%s3 + $0x1c4] sm:$0xf]
        %v2754 = vld [vmem:[%s3 + $0x1c8] sm:$0xf]
        %v2755 = vld [vmem:[%s3 + $0x1cc] sm:$0xf]
        %v2756 = vld [vmem:[%s3 + $0x1d0] sm:$0xf]
        %v2757 = vld [vmem:[%s3 + $0x1d4] sm:$0xf]
        %v2758 = vld [vmem:[%s3 + $0x1d8] sm:$0xf]
        %v2759 = vld [vmem:[%s3 + $0x1dc] sm:$0xf]
        %v2760 = vld [vmem:[%s3 + $0x1e0] sm:$0xf]
        %v2761 = vld [vmem:[%s3 + $0x1e4] sm:$0xf]
        %v2762 = vld [vmem:[%s3 + $0x1e8] sm:$0xf]
        %v2763 = vld [vmem:[%s3 + $0x1ec] sm:$0xf]
        %v2764 = vld [vmem:[%s3 + $0x1f0] sm:$0xf]
        %v2765 = vld [vmem:[%s3 + $0x1f4] sm:$0xf]
        %v2766 = vld [vmem:[%s3 + $0x1f8] sm:$0xf]
        %v2767 = vld [vmem:[%s3 + $0x1fc] sm:$0xf]
        %v2768 = vld [vmem:[%s3 + $0x200] sm:$0xf]
        %v2769 = vld [vmem:[%s3 + $0x204] sm:$0xf]
        %v2770 = vld [vmem:[%s3 + $0x208] sm:$0xf]
        %v2771 = vld [vmem:[%s3 + $0x20c] sm:$0xf]
        %v2772 = vld [vmem:[%s3 + $0x210] sm:$0xf]
        %v2773 = vld [vmem:[%s3 + $0x214] sm:$0xf]
        %v2774 = vld [vmem:[%s3 + $0x218] sm:$0xf]
        %v2775 = vld [vmem:[%s3 + $0x21c] sm:$0xf]
        %v2776 = vld [vmem:[%s3 + $0x220] sm:$0xf]
        %v2777 = vld [vmem:[%s3 + $0x224] sm:$0xf]
        %v2778 = vld [vmem:[%s3 + $0x228] sm:$0xf]
        %v2779 = vld [vmem:[%s3 + $0x22c] sm:$0xf]
        %v2780 = vld [vmem:[%s3 + $0x230] sm:$0xf]
        %v2781 = vld [vmem:[%s3 + $0x234] sm:$0xf]
        %v2782 = vld [vmem:[%s3 + $0x238] sm:$0xf]
        %v2783 = vld [vmem:[%s3 + $0x23c] sm:$0xf]
        %v2784 = vld [vmem:[%s4] sm:$0x1]
        %v2786 = vperm.slane %v2784, 0
        %v2932 = vunpack.c.l.b16 %v2640
        %v2933 = vunpack.c.l.b16 %v2641
        %v2934 = vunpack.c.l.b16 %v2642
        %v2935 = vunpack.c.l.b16 %v2643
        %v2936 = vunpack.c.l.b16 %v2644
        %v2937 = vunpack.c.l.b16 %v2645
        %v2938 = vunpack.c.l.b16 %v2646
        %v2939 = vunpack.c.l.b16 %v2647
        %v2940 = vunpack.c.l.b16 %v2648
        %v2941 = vunpack.c.l.b16 %v2649
        %v2942 = vunpack.c.l.b16 %v2650
        %v2943 = vunpack.c.l.b16 %v2651
        %v2944 = vunpack.c.l.b16 %v2652
        %v2945 = vunpack.c.l.b16 %v2653
        %v2946 = vunpack.c.l.b16 %v2654
        %v2947 = vunpack.c.l.b16 %v2655
        %v2948 = vunpack.c.l.b16 %v2656
        %v2949 = vunpack.c.l.b16 %v2657
        %v2950 = vunpack.c.l.b16 %v2658
        %v2951 = vunpack.c.l.b16 %v2659
        %v2952 = vunpack.c.l.b16 %v2660
        %v2953 = vunpack.c.l.b16 %v2661
        %v2954 = vunpack.c.l.b16 %v2662
        %v2955 = vunpack.c.l.b16 %v2663
        %v2956 = vunpack.c.l.b16 %v2664
        %v2957 = vunpack.c.l.b16 %v2665
        %v2958 = vunpack.c.l.b16 %v2666
        %v2959 = vunpack.c.l.b16 %v2667
        %v2960 = vunpack.c.l.b16 %v2668
        %v2961 = vunpack.c.l.b16 %v2669
        %v2962 = vunpack.c.l.b16 %v2670
        %v2963 = vunpack.c.l.b16 %v2671
        %v2964 = vunpack.c.l.b16 %v2672
        %v2965 = vunpack.c.l.b16 %v2673
        %v2966 = vunpack.c.l.b16 %v2674
        %v2967 = vunpack.c.l.b16 %v2675
        %v2968 = vunpack.c.l.b16 %v2676
        %v2969 = vunpack.c.l.b16 %v2677
        %v2970 = vunpack.c.l.b16 %v2678
        %v2971 = vunpack.c.l.b16 %v2679
        %v2972 = vunpack.c.l.b16 %v2680
        %v2973 = vunpack.c.l.b16 %v2681
        %v2974 = vunpack.c.l.b16 %v2682
        %v2975 = vunpack.c.l.b16 %v2683
        %v2976 = vunpack.c.l.b16 %v2684
        %v2977 = vunpack.c.l.b16 %v2685
        %v2978 = vunpack.c.l.b16 %v2686
        %v2979 = vunpack.c.l.b16 %v2687
        %v2980 = vunpack.c.l.b16 %v2688
        %v2981 = vunpack.c.l.b16 %v2689
        %v2982 = vunpack.c.l.b16 %v2690
        %v2983 = vunpack.c.l.b16 %v2691
        %v2984 = vunpack.c.l.b16 %v2692
        %v2985 = vunpack.c.l.b16 %v2693
        %v2986 = vunpack.c.l.b16 %v2694
        %v2987 = vunpack.c.l.b16 %v2695
        %v2988 = vunpack.c.l.b16 %v2696
        %v2989 = vunpack.c.l.b16 %v2697
        %v2990 = vunpack.c.l.b16 %v2698
        %v2991 = vunpack.c.l.b16 %v2699
        %v2992 = vunpack.c.l.b16 %v2700
        %v2993 = vunpack.c.l.b16 %v2701
        %v2994 = vunpack.c.l.b16 %v2702
        %v2995 = vunpack.c.l.b16 %v2703
        %v2996 = vunpack.c.l.b16 %v2704
        %v2997 = vunpack.c.l.b16 %v2705
        %v2998 = vunpack.c.l.b16 %v2706
        %v2999 = vunpack.c.l.b16 %v2707
        %v3000 = vunpack.c.l.b16 %v2708
        %v3001 = vunpack.c.l.b16 %v2709
        %v3002 = vunpack.c.l.b16 %v2710
        %v3003 = vunpack.c.l.b16 %v2711
        %v3004 = vunpack.c.l.b16 %v2712
        %v3005 = vunpack.c.l.b16 %v2713
        %v3006 = vunpack.c.l.b16 %v2714
        %v3007 = vunpack.c.l.b16 %v2715
        %v3008 = vunpack.c.l.b16 %v2716
        %v3009 = vunpack.c.l.b16 %v2717
        %v3010 = vunpack.c.l.b16 %v2718
        %v3011 = vunpack.c.l.b16 %v2719
        %v3012 = vunpack.c.l.b16 %v2720
        %v3013 = vunpack.c.l.b16 %v2721
        %v3014 = vunpack.c.l.b16 %v2722
        %v3015 = vunpack.c.l.b16 %v2723
        %v3016 = vunpack.c.l.b16 %v2724
        %v3017 = vunpack.c.l.b16 %v2725
        %v3018 = vunpack.c.l.b16 %v2726
        %v3019 = vunpack.c.l.b16 %v2727
        %v3020 = vunpack.c.l.b16 %v2728
        %v3021 = vunpack.c.l.b16 %v2729
        %v3022 = vunpack.c.l.b16 %v2730
        %v3023 = vunpack.c.l.b16 %v2731
        %v3024 = vunpack.c.l.b16 %v2732
        %v3025 = vunpack.c.l.b16 %v2733
        %v3026 = vunpack.c.l.b16 %v2734
        %v3027 = vunpack.c.l.b16 %v2735
        %v3028 = vunpack.c.l.b16 %v2736
        %v3029 = vunpack.c.l.b16 %v2737
        %v3030 = vunpack.c.l.b16 %v2738
        %v3031 = vunpack.c.l.b16 %v2739
        %v3032 = vunpack.c.l.b16 %v2740
        %v3033 = vunpack.c.l.b16 %v2741
        %v3034 = vunpack.c.l.b16 %v2742
        %v3035 = vunpack.c.l.b16 %v2743
        %v3036 = vunpack.c.l.b16 %v2744
        %v3037 = vunpack.c.l.b16 %v2745
        %v3038 = vunpack.c.l.b16 %v2746
        %v3039 = vunpack.c.l.b16 %v2747
        %v3040 = vunpack.c.l.b16 %v2748
        %v3041 = vunpack.c.l.b16 %v2749
        %v3042 = vunpack.c.l.b16 %v2750
        %v3043 = vunpack.c.l.b16 %v2751
        %v3044 = vunpack.c.l.b16 %v2752
        %v3045 = vunpack.c.l.b16 %v2753
        %v3046 = vunpack.c.l.b16 %v2754
        %v3047 = vunpack.c.l.b16 %v2755
        %v3048 = vunpack.c.l.b16 %v2756
        %v3049 = vunpack.c.l.b16 %v2757
        %v3050 = vunpack.c.l.b16 %v2758
        %v3051 = vunpack.c.l.b16 %v2759
        %v3052 = vunpack.c.l.b16 %v2760
        %v3053 = vunpack.c.l.b16 %v2761
        %v3054 = vunpack.c.l.b16 %v2762
        %v3055 = vunpack.c.l.b16 %v2763
        %v3056 = vunpack.c.l.b16 %v2764
        %v3057 = vunpack.c.l.b16 %v2765
        %v3058 = vunpack.c.l.b16 %v2766
        %v3059 = vunpack.c.l.b16 %v2767
        %v3060 = vunpack.c.l.b16 %v2768
        %v3061 = vunpack.c.l.b16 %v2769
        %v3062 = vunpack.c.l.b16 %v2770
        %v3063 = vunpack.c.l.b16 %v2771
        %v3064 = vunpack.c.l.b16 %v2772
        %v3065 = vunpack.c.l.b16 %v2773
        %v3066 = vunpack.c.l.b16 %v2774
        %v3067 = vunpack.c.l.b16 %v2775
        %v3068 = vunpack.c.l.b16 %v2776
        %v3069 = vunpack.c.l.b16 %v2777
        %v3070 = vunpack.c.l.b16 %v2778
        %v3071 = vunpack.c.l.b16 %v2779
        %v3072 = vunpack.c.l.b16 %v2780
        %v3073 = vunpack.c.l.b16 %v2781
        %v3074 = vunpack.c.l.b16 %v2782
        %v3075 = vunpack.c.l.b16 %v2783
        %v3076 = vpack.c.b16 %v2933, %v2932
        %v3077 = vpack.c.b16 %v2935, %v2934
        %v3078 = vpack.c.b16 %v2937, %v2936
        %v3079 = vpack.c.b16 %v2939, %v2938
        %v3080 = vpack.c.b16 %v2941, %v2940
        %v3081 = vpack.c.b16 %v2943, %v2942
        %v3082 = vpack.c.b16 %v2945, %v2944
        %v3083 = vpack.c.b16 %v2947, %v2946
        %v3084 = vpack.c.b16 %v2949, %v2948
        %v3085 = vpack.c.b16 %v2951, %v2950
        %v3086 = vpack.c.b16 %v2953, %v2952
        %v3087 = vpack.c.b16 %v2955, %v2954
        %v3088 = vpack.c.b16 %v2957, %v2956
        %v3089 = vpack.c.b16 %v2959, %v2958
        %v3090 = vpack.c.b16 %v2961, %v2960
        %v3091 = vpack.c.b16 %v2963, %v2962
        %v3092 = vpack.c.b16 %v2965, %v2964
        %v3093 = vpack.c.b16 %v2967, %v2966
        %v3094 = vpack.c.b16 %v2969, %v2968
        %v3095 = vpack.c.b16 %v2971, %v2970
        %v3096 = vpack.c.b16 %v2973, %v2972
        %v3097 = vpack.c.b16 %v2975, %v2974
        %v3098 = vpack.c.b16 %v2977, %v2976
        %v3099 = vpack.c.b16 %v2979, %v2978
        %v3100 = vpack.c.b16 %v2981, %v2980
        %v3101 = vpack.c.b16 %v2983, %v2982
        %v3102 = vpack.c.b16 %v2985, %v2984
        %v3103 = vpack.c.b16 %v2987, %v2986
        %v3104 = vpack.c.b16 %v2989, %v2988
        %v3105 = vpack.c.b16 %v2991, %v2990
        %v3106 = vpack.c.b16 %v2993, %v2992
        %v3107 = vpack.c.b16 %v2995, %v2994
        %v3108 = vpack.c.b16 %v2997, %v2996
        %v3109 = vpack.c.b16 %v2999, %v2998
        %v3110 = vpack.c.b16 %v3001, %v3000
        %v3111 = vpack.c.b16 %v3003, %v3002
        %v3112 = vpack.c.b16 %v3005, %v3004
        %v3113 = vpack.c.b16 %v3007, %v3006
        %v3114 = vpack.c.b16 %v3009, %v3008
        %v3115 = vpack.c.b16 %v3011, %v3010
        %v3116 = vpack.c.b16 %v3013, %v3012
        %v3117 = vpack.c.b16 %v3015, %v3014
        %v3118 = vpack.c.b16 %v3017, %v3016
        %v3119 = vpack.c.b16 %v3019, %v3018
        %v3120 = vpack.c.b16 %v3021, %v3020
        %v3121 = vpack.c.b16 %v3023, %v3022
        %v3122 = vpack.c.b16 %v3025, %v3024
        %v3123 = vpack.c.b16 %v3027, %v3026
        %v3124 = vpack.c.b16 %v3029, %v3028
        %v3125 = vpack.c.b16 %v3031, %v3030
        %v3126 = vpack.c.b16 %v3033, %v3032
        %v3127 = vpack.c.b16 %v3035, %v3034
        %v3128 = vpack.c.b16 %v3037, %v3036
        %v3129 = vpack.c.b16 %v3039, %v3038
        %v3130 = vpack.c.b16 %v3041, %v3040
        %v3131 = vpack.c.b16 %v3043, %v3042
        %v3132 = vpack.c.b16 %v3045, %v3044
        %v3133 = vpack.c.b16 %v3047, %v3046
        %v3134 = vpack.c.b16 %v3049, %v3048
        %v3135 = vpack.c.b16 %v3051, %v3050
        %v3136 = vpack.c.b16 %v3053, %v3052
        %v3137 = vpack.c.b16 %v3055, %v3054
        %v3138 = vpack.c.b16 %v3057, %v3056
        %v3139 = vpack.c.b16 %v3059, %v3058
        %v3140 = vpack.c.b16 %v3061, %v3060
        %v3141 = vpack.c.b16 %v3063, %v3062
        %v3142 = vpack.c.b16 %v3065, %v3064
        %v3143 = vpack.c.b16 %v3067, %v3066
        %v3144 = vpack.c.b16 %v3069, %v3068
        %v3145 = vpack.c.b16 %v3071, %v3070
        %v3146 = vpack.c.b16 %v3073, %v3072
        %v3147 = vpack.c.b16 %v3075, %v3074
        %3220 = vmatpush.bf16.msra.mxu0 %v3083
        %3221 = vmatpush.bf16.msra.mxu0 %v3082
        %3222 = vmatpush.bf16.msra.mxu0 %v3081
        %3223 = vmatpush.bf16.msra.mxu0 %v3080
        %3224 = vmatpush.bf16.msra.mxu0 %v3079
        %3225 = vmatpush.bf16.msra.mxu0 %v3078
        %3226 = vmatpush.bf16.msra.mxu0 %v3077
        %3227 = vmatpush.bf16.msra.mxu0 %v3076
        %3228 = vmatmul.bf16.gmra.mxu0 %v712
        %v3229 = vpop.f32.mrf.mxu0
        %v3230 = vadd.f32 %v2786, %v3229
        %v3231 = vpop.f32.mrf.mxu0
        %v3232 = vadd.f32 %v2786, %v3231
        %3233 = vmatmul.bf16.gmra.mxu0 %v2592
        %v3234 = vpop.f32.mrf.mxu0
        %v3235 = vadd.f32 %v2786, %v3234
        %v3236 = vpop.f32.mrf.mxu0
        %v3237 = vadd.f32 %v2786, %v3236
        %3238 = vmatmul.bf16.gmra.mxu0 %v2595
        %v3239 = vpop.f32.mrf.mxu0
        %v3240 = vadd.f32 %v2786, %v3239
        %v3241 = vpop.f32.mrf.mxu0
        %v3242 = vadd.f32 %v2786, %v3241
        %3243 = vmatmul.bf16.gmra.mxu0 %v2598
        %v3244 = vpop.f32.mrf.mxu0
        %v3245 = vadd.f32 %v2786, %v3244
        %v3246 = vpop.f32.mrf.mxu0
        %v3247 = vadd.f32 %v2786, %v3246
        %3248 = vmatmul.bf16.gmra.mxu0 %v2601
        %v3249 = vpop.f32.mrf.mxu0
        %v3250 = vadd.f32 %v2786, %v3249
        %v3251 = vpop.f32.mrf.mxu0
        %v3252 = vadd.f32 %v2786, %v3251
        %3253 = vmatmul.bf16.gmra.mxu0 %v2604
        %v3254 = vpop.f32.mrf.mxu0
        %v3255 = vadd.f32 %v2786, %v3254
        %v3256 = vpop.f32.mrf.mxu0
        %v3257 = vadd.f32 %v2786, %v3256
        %3258 = vmatmul.bf16.gmra.mxu0 %v2607
        %v3259 = vpop.f32.mrf.mxu0
        %v3260 = vadd.f32 %v2786, %v3259
        %v3261 = vpop.f32.mrf.mxu0
        %v3262 = vadd.f32 %v2786, %v3261
        %3263 = vmatmul.bf16.gmra.mxu0 %v2610
        %v3264 = vpop.f32.mrf.mxu0
        %v3265 = vadd.f32 %v2786, %v3264
        %v3266 = vpop.f32.mrf.mxu0
        %v3267 = vadd.f32 %v2786, %v3266
        %3268 = vmatmul.bf16.gmra.mxu0 %v2613
        %v3269 = vpop.f32.mrf.mxu0
        %v3270 = vadd.f32 %v2786, %v3269
        %v3271 = vpop.f32.mrf.mxu0
        %v3272 = vadd.f32 %v2786, %v3271
        %3273 = vmatmul.bf16.gmra.mxu0 %v2616
        %v3274 = vpop.f32.mrf.mxu0
        %v3275 = vadd.f32 %v2786, %v3274
        %v3276 = vpop.f32.mrf.mxu0
        %v3277 = vadd.f32 %v2786, %v3276
        %3278 = vmatmul.bf16.gmra.mxu0 %v2619
        %v3279 = vpop.f32.mrf.mxu0
        %v3280 = vadd.f32 %v2786, %v3279
        %v3281 = vpop.f32.mrf.mxu0
        %v3282 = vadd.f32 %v2786, %v3281
        %3283 = vmatmul.bf16.gmra.mxu0 %v2622
        %v3284 = vpop.f32.mrf.mxu0
        %v3285 = vadd.f32 %v2786, %v3284
        %v3286 = vpop.f32.mrf.mxu0
        %v3287 = vadd.f32 %v2786, %v3286
        %3288 = vmatmul.bf16.gmra.mxu0 %v2625
        %v3289 = vpop.f32.mrf.mxu0
        %v3290 = vadd.f32 %v2786, %v3289
        %v3291 = vpop.f32.mrf.mxu0
        %v3292 = vadd.f32 %v2786, %v3291
        %3293 = vmatmul.bf16.gmra.mxu0 %v2628
        %v3294 = vpop.f32.mrf.mxu0
        %v3295 = vadd.f32 %v2786, %v3294
        %v3296 = vpop.f32.mrf.mxu0
        %v3297 = vadd.f32 %v2786, %v3296
        %3298 = vmatmul.bf16.gmra.mxu0 %v2631
        %v3299 = vpop.f32.mrf.mxu0
        %v3300 = vadd.f32 %v2786, %v3299
        %v3301 = vpop.f32.mrf.mxu0
        %v3302 = vadd.f32 %v2786, %v3301
        %3303 = vmatmul.bf16.gmra.mxu0 %v2634
        %v3304 = vpop.f32.mrf.mxu0
        %v3305 = vadd.f32 %v2786, %v3304
        %v3306 = vpop.f32.mrf.mxu0
        %v3307 = vadd.f32 %v2786, %v3306
        %3308 = vdwg.mxu0
        %3309 = vmatpush.bf16.msra.mxu0 %v3091
        %3310 = vmatpush.bf16.msra.mxu0 %v3090
        %3311 = vmatpush.bf16.msra.mxu0 %v3089
        %3312 = vmatpush.bf16.msra.mxu0 %v3088
        %3313 = vmatpush.bf16.msra.mxu0 %v3087
        %3314 = vmatpush.bf16.msra.mxu0 %v3086
        %3315 = vmatpush.bf16.msra.mxu0 %v3085
        %3316 = vmatpush.bf16.msra.mxu0 %v3084
        %3317 = vmatmul.bf16.gmra.mxu0 %v713
        %v3318 = vpop.f32.mrf.mxu0
        %v3319 = vadd.f32 %v3230, %v3318
        %v3320 = vpop.f32.mrf.mxu0
        %v3321 = vadd.f32 %v3232, %v3320
        %3322 = vmatmul.bf16.gmra.mxu0 %v2593
        %v3323 = vpop.f32.mrf.mxu0
        %v3324 = vadd.f32 %v3235, %v3323
        %v3325 = vpop.f32.mrf.mxu0
        %v3326 = vadd.f32 %v3237, %v3325
        %3327 = vmatmul.bf16.gmra.mxu0 %v2596
        %v3328 = vpop.f32.mrf.mxu0
        %v3329 = vadd.f32 %v3240, %v3328
        %v3330 = vpop.f32.mrf.mxu0
        %v3331 = vadd.f32 %v3242, %v3330
        %3332 = vmatmul.bf16.gmra.mxu0 %v2599
        %v3333 = vpop.f32.mrf.mxu0
        %v3334 = vadd.f32 %v3245, %v3333
        %v3335 = vpop.f32.mrf.mxu0
        %v3336 = vadd.f32 %v3247, %v3335
        %3337 = vmatmul.bf16.gmra.mxu0 %v2602
        %v3338 = vpop.f32.mrf.mxu0
        %v3339 = vadd.f32 %v3250, %v3338
        %v3340 = vpop.f32.mrf.mxu0
        %v3341 = vadd.f32 %v3252, %v3340
        %3342 = vmatmul.bf16.gmra.mxu0 %v2605
        %v3343 = vpop.f32.mrf.mxu0
        %v3344 = vadd.f32 %v3255, %v3343
        %v3345 = vpop.f32.mrf.mxu0
        %v3346 = vadd.f32 %v3257, %v3345
        %3347 = vmatmul.bf16.gmra.mxu0 %v2608
        %v3348 = vpop.f32.mrf.mxu0
        %v3349 = vadd.f32 %v3260, %v3348
        %v3350 = vpop.f32.mrf.mxu0
        %v3351 = vadd.f32 %v3262, %v3350
        %3352 = vmatmul.bf16.gmra.mxu0 %v2611
        %v3353 = vpop.f32.mrf.mxu0
        %v3354 = vadd.f32 %v3265, %v3353
        %v3355 = vpop.f32.mrf.mxu0
        %v3356 = vadd.f32 %v3267, %v3355
        %3357 = vmatmul.bf16.gmra.mxu0 %v2614
        %v3358 = vpop.f32.mrf.mxu0
        %v3359 = vadd.f32 %v3270, %v3358
        %v3360 = vpop.f32.mrf.mxu0
        %v3361 = vadd.f32 %v3272, %v3360
        %3362 = vmatmul.bf16.gmra.mxu0 %v2617
        %v3363 = vpop.f32.mrf.mxu0
        %v3364 = vadd.f32 %v3275, %v3363
        %v3365 = vpop.f32.mrf.mxu0
        %v3366 = vadd.f32 %v3277, %v3365
        %3367 = vmatmul.bf16.gmra.mxu0 %v2620
        %v3368 = vpop.f32.mrf.mxu0
        %v3369 = vadd.f32 %v3280, %v3368
        %v3370 = vpop.f32.mrf.mxu0
        %v3371 = vadd.f32 %v3282, %v3370
        %3372 = vmatmul.bf16.gmra.mxu0 %v2623
        %v3373 = vpop.f32.mrf.mxu0
        %v3374 = vadd.f32 %v3285, %v3373
        %v3375 = vpop.f32.mrf.mxu0
        %v3376 = vadd.f32 %v3287, %v3375
        %3377 = vmatmul.bf16.gmra.mxu0 %v2626
        %v3378 = vpop.f32.mrf.mxu0
        %v3379 = vadd.f32 %v3290, %v3378
        %v3380 = vpop.f32.mrf.mxu0
        %v3381 = vadd.f32 %v3292, %v3380
        %3382 = vmatmul.bf16.gmra.mxu0 %v2629
        %v3383 = vpop.f32.mrf.mxu0
        %v3384 = vadd.f32 %v3295, %v3383
        %v3385 = vpop.f32.mrf.mxu0
        %v3386 = vadd.f32 %v3297, %v3385
        %3387 = vmatmul.bf16.gmra.mxu0 %v2632
        %v3388 = vpop.f32.mrf.mxu0
        %v3389 = vadd.f32 %v3300, %v3388
        %v3390 = vpop.f32.mrf.mxu0
        %v3391 = vadd.f32 %v3302, %v3390
        %3392 = vmatmul.bf16.gmra.mxu0 %v2635
        %v3393 = vpop.f32.mrf.mxu0
        %v3394 = vadd.f32 %v3305, %v3393
        %v3395 = vpop.f32.mrf.mxu0
        %v3396 = vadd.f32 %v3307, %v3395
        %3397 = vdwg.mxu0
        %3398 = vmatpush.bf16.msra.mxu0 %v3099
        %3399 = vmatpush.bf16.msra.mxu0 %v3098
        %3400 = vmatpush.bf16.msra.mxu0 %v3097
        %3401 = vmatpush.bf16.msra.mxu0 %v3096
        %3402 = vmatpush.bf16.msra.mxu0 %v3095
        %3403 = vmatpush.bf16.msra.mxu0 %v3094
        %3404 = vmatpush.bf16.msra.mxu0 %v3093
        %3405 = vmatpush.bf16.msra.mxu0 %v3092
        %3406 = vmatmul.bf16.gmra.mxu0 %v714
        %v3407 = vpop.f32.mrf.mxu0
        %v3408 = vadd.f32 %v3319, %v3407
        %v3409 = vpop.f32.mrf.mxu0
        %v3410 = vadd.f32 %v3321, %v3409
        %3411 = vmatmul.bf16.gmra.mxu0 %v2594
        %v3412 = vpop.f32.mrf.mxu0
        %v3413 = vadd.f32 %v3324, %v3412
        %v3414 = vpop.f32.mrf.mxu0
        %v3415 = vadd.f32 %v3326, %v3414
        %3416 = vmatmul.bf16.gmra.mxu0 %v2597
        %v3417 = vpop.f32.mrf.mxu0
        %v3418 = vadd.f32 %v3329, %v3417
        %v3419 = vpop.f32.mrf.mxu0
        %v3420 = vadd.f32 %v3331, %v3419
        %3421 = vmatmul.bf16.gmra.mxu0 %v2600
        %v3422 = vpop.f32.mrf.mxu0
        %v3423 = vadd.f32 %v3334, %v3422
        %v3424 = vpop.f32.mrf.mxu0
        %v3425 = vadd.f32 %v3336, %v3424
        %3426 = vmatmul.bf16.gmra.mxu0 %v2603
        %v3427 = vpop.f32.mrf.mxu0
        %v3428 = vadd.f32 %v3339, %v3427
        %v3429 = vpop.f32.mrf.mxu0
        %v3430 = vadd.f32 %v3341, %v3429
        %3431 = vmatmul.bf16.gmra.mxu0 %v2606
        %v3432 = vpop.f32.mrf.mxu0
        %v3433 = vadd.f32 %v3344, %v3432
        %v3434 = vpop.f32.mrf.mxu0
        %v3435 = vadd.f32 %v3346, %v3434
        %3436 = vmatmul.bf16.gmra.mxu0 %v2609
        %v3437 = vpop.f32.mrf.mxu0
        %v3438 = vadd.f32 %v3349, %v3437
        %v3439 = vpop.f32.mrf.mxu0
        %v3440 = vadd.f32 %v3351, %v3439
        %3441 = vmatmul.bf16.gmra.mxu0 %v2612
        %v3442 = vpop.f32.mrf.mxu0
        %v3443 = vadd.f32 %v3354, %v3442
        %v3444 = vpop.f32.mrf.mxu0
        %v3445 = vadd.f32 %v3356, %v3444
        %3446 = vmatmul.bf16.gmra.mxu0 %v2615
        %v3447 = vpop.f32.mrf.mxu0
        %v3448 = vadd.f32 %v3359, %v3447
        %v3449 = vpop.f32.mrf.mxu0
        %v3450 = vadd.f32 %v3361, %v3449
        %3451 = vmatmul.bf16.gmra.mxu0 %v2618
        %v3452 = vpop.f32.mrf.mxu0
        %v3453 = vadd.f32 %v3364, %v3452
        %v3454 = vpop.f32.mrf.mxu0
        %v3455 = vadd.f32 %v3366, %v3454
        %3456 = vmatmul.bf16.gmra.mxu0 %v2621
        %v3457 = vpop.f32.mrf.mxu0
        %v3458 = vadd.f32 %v3369, %v3457
        %v3459 = vpop.f32.mrf.mxu0
        %v3460 = vadd.f32 %v3371, %v3459
        %3461 = vmatmul.bf16.gmra.mxu0 %v2624
        %v3462 = vpop.f32.mrf.mxu0
        %v3463 = vadd.f32 %v3374, %v3462
        %v3464 = vpop.f32.mrf.mxu0
        %v3465 = vadd.f32 %v3376, %v3464
        %3466 = vmatmul.bf16.gmra.mxu0 %v2627
        %v3467 = vpop.f32.mrf.mxu0
        %v3468 = vadd.f32 %v3379, %v3467
        %v3469 = vpop.f32.mrf.mxu0
        %v3470 = vadd.f32 %v3381, %v3469
        %3471 = vmatmul.bf16.gmra.mxu0 %v2630
        %v3472 = vpop.f32.mrf.mxu0
        %v3473 = vadd.f32 %v3384, %v3472
        %v3474 = vpop.f32.mrf.mxu0
        %v3475 = vadd.f32 %v3386, %v3474
        %3476 = vmatmul.bf16.gmra.mxu0 %v2633
        %v3477 = vpop.f32.mrf.mxu0
        %v3478 = vadd.f32 %v3389, %v3477
        %v3479 = vpop.f32.mrf.mxu0
        %v3480 = vadd.f32 %v3391, %v3479
        %3481 = vmatmul.bf16.gmra.mxu0 %v2636
        %v3482 = vpop.f32.mrf.mxu0
        %v3483 = vadd.f32 %v3394, %v3482
        %v3484 = vpop.f32.mrf.mxu0
        %v3485 = vadd.f32 %v3396, %v3484
        %3486 = vdwg.mxu0
        %3487 = vmatpush.bf16.msra.mxu0 %v3107
        %3488 = vmatpush.bf16.msra.mxu0 %v3106
        %3489 = vmatpush.bf16.msra.mxu0 %v3105
        %3490 = vmatpush.bf16.msra.mxu0 %v3104
        %3491 = vmatpush.bf16.msra.mxu0 %v3103
        %3492 = vmatpush.bf16.msra.mxu0 %v3102
        %3493 = vmatpush.bf16.msra.mxu0 %v3101
        %3494 = vmatpush.bf16.msra.mxu0 %v3100
        %3495 = vmatmul.bf16.gmra.mxu0 %v2592
        %v3496 = vpop.f32.mrf.mxu0
        %v3497 = vadd.f32 %v3408, %v3496
        %v3498 = vpop.f32.mrf.mxu0
        %v3499 = vadd.f32 %v3410, %v3498
        %3500 = vmatmul.bf16.gmra.mxu0 %v2595
        %v3501 = vpop.f32.mrf.mxu0
        %v3502 = vadd.f32 %v3413, %v3501
        %v3503 = vpop.f32.mrf.mxu0
        %v3504 = vadd.f32 %v3415, %v3503
        %3505 = vmatmul.bf16.gmra.mxu0 %v2598
        %v3506 = vpop.f32.mrf.mxu0
        %v3507 = vadd.f32 %v3418, %v3506
        %v3508 = vpop.f32.mrf.mxu0
        %v3509 = vadd.f32 %v3420, %v3508
        %3510 = vmatmul.bf16.gmra.mxu0 %v2601
        %v3511 = vpop.f32.mrf.mxu0
        %v3512 = vadd.f32 %v3423, %v3511
        %v3513 = vpop.f32.mrf.mxu0
        %v3514 = vadd.f32 %v3425, %v3513
        %3515 = vmatmul.bf16.gmra.mxu0 %v2604
        %v3516 = vpop.f32.mrf.mxu0
        %v3517 = vadd.f32 %v3428, %v3516
        %v3518 = vpop.f32.mrf.mxu0
        %v3519 = vadd.f32 %v3430, %v3518
        %3520 = vmatmul.bf16.gmra.mxu0 %v2607
        %v3521 = vpop.f32.mrf.mxu0
        %v3522 = vadd.f32 %v3433, %v3521
        %v3523 = vpop.f32.mrf.mxu0
        %v3524 = vadd.f32 %v3435, %v3523
        %3525 = vmatmul.bf16.gmra.mxu0 %v2610
        %v3526 = vpop.f32.mrf.mxu0
        %v3527 = vadd.f32 %v3438, %v3526
        %v3528 = vpop.f32.mrf.mxu0
        %v3529 = vadd.f32 %v3440, %v3528
        %3530 = vmatmul.bf16.gmra.mxu0 %v2613
        %v3531 = vpop.f32.mrf.mxu0
        %v3532 = vadd.f32 %v3443, %v3531
        %v3533 = vpop.f32.mrf.mxu0
        %v3534 = vadd.f32 %v3445, %v3533
        %3535 = vmatmul.bf16.gmra.mxu0 %v2616
        %v3536 = vpop.f32.mrf.mxu0
        %v3537 = vadd.f32 %v3448, %v3536
        %v3538 = vpop.f32.mrf.mxu0
        %v3539 = vadd.f32 %v3450, %v3538
        %3540 = vmatmul.bf16.gmra.mxu0 %v2619
        %v3541 = vpop.f32.mrf.mxu0
        %v3542 = vadd.f32 %v3453, %v3541
        %v3543 = vpop.f32.mrf.mxu0
        %v3544 = vadd.f32 %v3455, %v3543
        %3545 = vmatmul.bf16.gmra.mxu0 %v2622
        %v3546 = vpop.f32.mrf.mxu0
        %v3547 = vadd.f32 %v3458, %v3546
        %v3548 = vpop.f32.mrf.mxu0
        %v3549 = vadd.f32 %v3460, %v3548
        %3550 = vmatmul.bf16.gmra.mxu0 %v2625
        %v3551 = vpop.f32.mrf.mxu0
        %v3552 = vadd.f32 %v3463, %v3551
        %v3553 = vpop.f32.mrf.mxu0
        %v3554 = vadd.f32 %v3465, %v3553
        %3555 = vmatmul.bf16.gmra.mxu0 %v2628
        %v3556 = vpop.f32.mrf.mxu0
        %v3557 = vadd.f32 %v3468, %v3556
        %v3558 = vpop.f32.mrf.mxu0
        %v3559 = vadd.f32 %v3470, %v3558
        %3560 = vmatmul.bf16.gmra.mxu0 %v2631
        %v3561 = vpop.f32.mrf.mxu0
        %v3562 = vadd.f32 %v3473, %v3561
        %v3563 = vpop.f32.mrf.mxu0
        %v3564 = vadd.f32 %v3475, %v3563
        %3565 = vmatmul.bf16.gmra.mxu0 %v2634
        %v3566 = vpop.f32.mrf.mxu0
        %v3567 = vadd.f32 %v3478, %v3566
        %v3568 = vpop.f32.mrf.mxu0
        %v3569 = vadd.f32 %v3480, %v3568
        %3570 = vmatmul.bf16.gmra.mxu0 %v2637
        %v3571 = vpop.f32.mrf.mxu0
        %v3572 = vadd.f32 %v3483, %v3571
        %v3573 = vpop.f32.mrf.mxu0
        %v3574 = vadd.f32 %v3485, %v3573
        %3575 = vdwg.mxu0
        %3576 = vmatpush.bf16.msra.mxu0 %v3115
        %3577 = vmatpush.bf16.msra.mxu0 %v3114
        %3578 = vmatpush.bf16.msra.mxu0 %v3113
        %3579 = vmatpush.bf16.msra.mxu0 %v3112
        %3580 = vmatpush.bf16.msra.mxu0 %v3111
        %3581 = vmatpush.bf16.msra.mxu0 %v3110
        %3582 = vmatpush.bf16.msra.mxu0 %v3109
        %3583 = vmatpush.bf16.msra.mxu0 %v3108
        %3584 = vmatmul.bf16.gmra.mxu0 %v2593
        %v3585 = vpop.f32.mrf.mxu0
        %v3586 = vadd.f32 %v3497, %v3585
        %v3587 = vpop.f32.mrf.mxu0
        %v3588 = vadd.f32 %v3499, %v3587
        %3589 = vmatmul.bf16.gmra.mxu0 %v2596
        %v3590 = vpop.f32.mrf.mxu0
        %v3591 = vadd.f32 %v3502, %v3590
        %v3592 = vpop.f32.mrf.mxu0
        %v3593 = vadd.f32 %v3504, %v3592
        %3594 = vmatmul.bf16.gmra.mxu0 %v2599
        %v3595 = vpop.f32.mrf.mxu0
        %v3596 = vadd.f32 %v3507, %v3595
        %v3597 = vpop.f32.mrf.mxu0
        %v3598 = vadd.f32 %v3509, %v3597
        %3599 = vmatmul.bf16.gmra.mxu0 %v2602
        %v3600 = vpop.f32.mrf.mxu0
        %v3601 = vadd.f32 %v3512, %v3600
        %v3602 = vpop.f32.mrf.mxu0
        %v3603 = vadd.f32 %v3514, %v3602
        %3604 = vmatmul.bf16.gmra.mxu0 %v2605
        %v3605 = vpop.f32.mrf.mxu0
        %v3606 = vadd.f32 %v3517, %v3605
        %v3607 = vpop.f32.mrf.mxu0
        %v3608 = vadd.f32 %v3519, %v3607
        %3609 = vmatmul.bf16.gmra.mxu0 %v2608
        %v3610 = vpop.f32.mrf.mxu0
        %v3611 = vadd.f32 %v3522, %v3610
        %v3612 = vpop.f32.mrf.mxu0
        %v3613 = vadd.f32 %v3524, %v3612
        %3614 = vmatmul.bf16.gmra.mxu0 %v2611
        %v3615 = vpop.f32.mrf.mxu0
        %v3616 = vadd.f32 %v3527, %v3615
        %v3617 = vpop.f32.mrf.mxu0
        %v3618 = vadd.f32 %v3529, %v3617
        %3619 = vmatmul.bf16.gmra.mxu0 %v2614
        %v3620 = vpop.f32.mrf.mxu0
        %v3621 = vadd.f32 %v3532, %v3620
        %v3622 = vpop.f32.mrf.mxu0
        %v3623 = vadd.f32 %v3534, %v3622
        %3624 = vmatmul.bf16.gmra.mxu0 %v2617
        %v3625 = vpop.f32.mrf.mxu0
        %v3626 = vadd.f32 %v3537, %v3625
        %v3627 = vpop.f32.mrf.mxu0
        %v3628 = vadd.f32 %v3539, %v3627
        %3629 = vmatmul.bf16.gmra.mxu0 %v2620
        %v3630 = vpop.f32.mrf.mxu0
        %v3631 = vadd.f32 %v3542, %v3630
        %v3632 = vpop.f32.mrf.mxu0
        %v3633 = vadd.f32 %v3544, %v3632
        %3634 = vmatmul.bf16.gmra.mxu0 %v2623
        %v3635 = vpop.f32.mrf.mxu0
        %v3636 = vadd.f32 %v3547, %v3635
        %v3637 = vpop.f32.mrf.mxu0
        %v3638 = vadd.f32 %v3549, %v3637
        %3639 = vmatmul.bf16.gmra.mxu0 %v2626
        %v3640 = vpop.f32.mrf.mxu0
        %v3641 = vadd.f32 %v3552, %v3640
        %v3642 = vpop.f32.mrf.mxu0
        %v3643 = vadd.f32 %v3554, %v3642
        %3644 = vmatmul.bf16.gmra.mxu0 %v2629
        %v3645 = vpop.f32.mrf.mxu0
        %v3646 = vadd.f32 %v3557, %v3645
        %v3647 = vpop.f32.mrf.mxu0
        %v3648 = vadd.f32 %v3559, %v3647
        %3649 = vmatmul.bf16.gmra.mxu0 %v2632
        %v3650 = vpop.f32.mrf.mxu0
        %v3651 = vadd.f32 %v3562, %v3650
        %v3652 = vpop.f32.mrf.mxu0
        %v3653 = vadd.f32 %v3564, %v3652
        %3654 = vmatmul.bf16.gmra.mxu0 %v2635
        %v3655 = vpop.f32.mrf.mxu0
        %v3656 = vadd.f32 %v3567, %v3655
        %v3657 = vpop.f32.mrf.mxu0
        %v3658 = vadd.f32 %v3569, %v3657
        %3659 = vmatmul.bf16.gmra.mxu0 %v2638
        %v3660 = vpop.f32.mrf.mxu0
        %v3661 = vadd.f32 %v3572, %v3660
        %v3662 = vpop.f32.mrf.mxu0
        %v3663 = vadd.f32 %v3574, %v3662
        %3664 = vdwg.mxu0
        %3665 = vmatpush.bf16.msra.mxu0 %v3123
        %3666 = vmatpush.bf16.msra.mxu0 %v3122
        %3667 = vmatpush.bf16.msra.mxu0 %v3121
        %3668 = vmatpush.bf16.msra.mxu0 %v3120
        %3669 = vmatpush.bf16.msra.mxu0 %v3119
        %3670 = vmatpush.bf16.msra.mxu0 %v3118
        %3671 = vmatpush.bf16.msra.mxu0 %v3117
        %3672 = vmatpush.bf16.msra.mxu0 %v3116
        %3673 = vmatmul.bf16.gmra.mxu0 %v2594
        %v3674 = vpop.f32.mrf.mxu0
        %v3675 = vadd.f32 %v3586, %v3674
        %v3676 = vpop.f32.mrf.mxu0
        %v3677 = vadd.f32 %v3588, %v3676
        %3678 = vmatmul.bf16.gmra.mxu0 %v2597
        %v3679 = vpop.f32.mrf.mxu0
        %v3680 = vadd.f32 %v3591, %v3679
        %v3681 = vpop.f32.mrf.mxu0
        %v3682 = vadd.f32 %v3593, %v3681
        %3683 = vmatmul.bf16.gmra.mxu0 %v2600
        %v3684 = vpop.f32.mrf.mxu0
        %v3685 = vadd.f32 %v3596, %v3684
        %v3686 = vpop.f32.mrf.mxu0
        %v3687 = vadd.f32 %v3598, %v3686
        %3688 = vmatmul.bf16.gmra.mxu0 %v2603
        %v3689 = vpop.f32.mrf.mxu0
        %v3690 = vadd.f32 %v3601, %v3689
        %v3691 = vpop.f32.mrf.mxu0
        %v3692 = vadd.f32 %v3603, %v3691
        %3693 = vmatmul.bf16.gmra.mxu0 %v2606
        %v3694 = vpop.f32.mrf.mxu0
        %v3695 = vadd.f32 %v3606, %v3694
        %v3696 = vpop.f32.mrf.mxu0
        %v3697 = vadd.f32 %v3608, %v3696
        %3698 = vmatmul.bf16.gmra.mxu0 %v2609
        %v3699 = vpop.f32.mrf.mxu0
        %v3700 = vadd.f32 %v3611, %v3699
        %v3701 = vpop.f32.mrf.mxu0
        %v3702 = vadd.f32 %v3613, %v3701
        %3703 = vmatmul.bf16.gmra.mxu0 %v2612
        %v3704 = vpop.f32.mrf.mxu0
        %v3705 = vadd.f32 %v3616, %v3704
        %v3706 = vpop.f32.mrf.mxu0
        %v3707 = vadd.f32 %v3618, %v3706
        %3708 = vmatmul.bf16.gmra.mxu0 %v2615
        %v3709 = vpop.f32.mrf.mxu0
        %v3710 = vadd.f32 %v3621, %v3709
        %v3711 = vpop.f32.mrf.mxu0
        %v3712 = vadd.f32 %v3623, %v3711
        %3713 = vmatmul.bf16.gmra.mxu0 %v2618
        %v3714 = vpop.f32.mrf.mxu0
        %v3715 = vadd.f32 %v3626, %v3714
        %v3716 = vpop.f32.mrf.mxu0
        %v3717 = vadd.f32 %v3628, %v3716
        %3718 = vmatmul.bf16.gmra.mxu0 %v2621
        %v3719 = vpop.f32.mrf.mxu0
        %v3720 = vadd.f32 %v3631, %v3719
        %v3721 = vpop.f32.mrf.mxu0
        %v3722 = vadd.f32 %v3633, %v3721
        %3723 = vmatmul.bf16.gmra.mxu0 %v2624
        %v3724 = vpop.f32.mrf.mxu0
        %v3725 = vadd.f32 %v3636, %v3724
        %v3726 = vpop.f32.mrf.mxu0
        %v3727 = vadd.f32 %v3638, %v3726
        %3728 = vmatmul.bf16.gmra.mxu0 %v2627
        %v3729 = vpop.f32.mrf.mxu0
        %v3730 = vadd.f32 %v3641, %v3729
        %v3731 = vpop.f32.mrf.mxu0
        %v3732 = vadd.f32 %v3643, %v3731
        %3733 = vmatmul.bf16.gmra.mxu0 %v2630
        %v3734 = vpop.f32.mrf.mxu0
        %v3735 = vadd.f32 %v3646, %v3734
        %v3736 = vpop.f32.mrf.mxu0
        %v3737 = vadd.f32 %v3648, %v3736
        %3738 = vmatmul.bf16.gmra.mxu0 %v2633
        %v3739 = vpop.f32.mrf.mxu0
        %v3740 = vadd.f32 %v3651, %v3739
        %v3741 = vpop.f32.mrf.mxu0
        %v3742 = vadd.f32 %v3653, %v3741
        %3743 = vmatmul.bf16.gmra.mxu0 %v2636
        %v3744 = vpop.f32.mrf.mxu0
        %v3745 = vadd.f32 %v3656, %v3744
        %v3746 = vpop.f32.mrf.mxu0
        %v3747 = vadd.f32 %v3658, %v3746
        %3748 = vmatmul.bf16.gmra.mxu0 %v2639
        %v3749 = vpop.f32.mrf.mxu0
        %v3750 = vadd.f32 %v3661, %v3749
        %v3751 = vpop.f32.mrf.mxu0
        %v3752 = vadd.f32 %v3663, %v3751
        %3753 = vdwg.mxu0
        %3754 = vmatpush.bf16.msra.mxu0 %v3131
        %3755 = vmatpush.bf16.msra.mxu0 %v3130
        %3756 = vmatpush.bf16.msra.mxu0 %v3129
        %3757 = vmatpush.bf16.msra.mxu0 %v3128
        %3758 = vmatpush.bf16.msra.mxu0 %v3127
        %3759 = vmatpush.bf16.msra.mxu0 %v3126
        %3760 = vmatpush.bf16.msra.mxu0 %v3125
        %3761 = vmatpush.bf16.msra.mxu0 %v3124
        %3762 = vmatmul.bf16.gmra.mxu0 %v2595
        %v3763 = vpop.f32.mrf.mxu0
        %v3764 = vadd.f32 %v3675, %v3763
        %v3765 = vpop.f32.mrf.mxu0
        %v3766 = vadd.f32 %v3677, %v3765
        %3767 = vmatmul.bf16.gmra.mxu0 %v2598
        %v3768 = vpop.f32.mrf.mxu0
        %v3769 = vadd.f32 %v3680, %v3768
        %v3770 = vpop.f32.mrf.mxu0
        %v3771 = vadd.f32 %v3682, %v3770
        %3772 = vmatmul.bf16.gmra.mxu0 %v2601
        %v3773 = vpop.f32.mrf.mxu0
        %v3774 = vadd.f32 %v3685, %v3773
        %v3775 = vpop.f32.mrf.mxu0
        %v3776 = vadd.f32 %v3687, %v3775
        %3777 = vmatmul.bf16.gmra.mxu0 %v2604
        %v3778 = vpop.f32.mrf.mxu0
        %v3779 = vadd.f32 %v3690, %v3778
        %v3780 = vpop.f32.mrf.mxu0
        %v3781 = vadd.f32 %v3692, %v3780
        %3782 = vmatmul.bf16.gmra.mxu0 %v2607
        %v3783 = vpop.f32.mrf.mxu0
        %v3784 = vadd.f32 %v3695, %v3783
        %v3785 = vpop.f32.mrf.mxu0
        %v3786 = vadd.f32 %v3697, %v3785
        %3787 = vmatmul.bf16.gmra.mxu0 %v2610
        %v3788 = vpop.f32.mrf.mxu0
        %v3789 = vadd.f32 %v3700, %v3788
        %v3790 = vpop.f32.mrf.mxu0
        %v3791 = vadd.f32 %v3702, %v3790
        %3792 = vmatmul.bf16.gmra.mxu0 %v2613
        %v3793 = vpop.f32.mrf.mxu0
        %v3794 = vadd.f32 %v3705, %v3793
        %v3795 = vpop.f32.mrf.mxu0
        %v3796 = vadd.f32 %v3707, %v3795
        %3797 = vmatmul.bf16.gmra.mxu0 %v2616
        %v3798 = vpop.f32.mrf.mxu0
        %v3799 = vadd.f32 %v3710, %v3798
        %v3800 = vpop.f32.mrf.mxu0
        %v3801 = vadd.f32 %v3712, %v3800
        %3802 = vmatmul.bf16.gmra.mxu0 %v2619
        %v3803 = vpop.f32.mrf.mxu0
        %v3804 = vadd.f32 %v3715, %v3803
        %v3805 = vpop.f32.mrf.mxu0
        %v3806 = vadd.f32 %v3717, %v3805
        %3807 = vmatmul.bf16.gmra.mxu0 %v2622
        %v3808 = vpop.f32.mrf.mxu0
        %v3809 = vadd.f32 %v3720, %v3808
        %v3810 = vpop.f32.mrf.mxu0
        %v3811 = vadd.f32 %v3722, %v3810
        %3812 = vmatmul.bf16.gmra.mxu0 %v2625
        %v3813 = vpop.f32.mrf.mxu0
        %v3814 = vadd.f32 %v3725, %v3813
        %v3815 = vpop.f32.mrf.mxu0
        %v3816 = vadd.f32 %v3727, %v3815
        %3817 = vmatmul.bf16.gmra.mxu0 %v2628
        %v3818 = vpop.f32.mrf.mxu0
        %v3819 = vadd.f32 %v3730, %v3818
        %v3820 = vpop.f32.mrf.mxu0
        %v3821 = vadd.f32 %v3732, %v3820
        %3822 = vmatmul.bf16.gmra.mxu0 %v2631
        %v3823 = vpop.f32.mrf.mxu0
        %v3824 = vadd.f32 %v3735, %v3823
        %v3825 = vpop.f32.mrf.mxu0
        %v3826 = vadd.f32 %v3737, %v3825
        %3827 = vmatmul.bf16.gmra.mxu0 %v2634
        %v3828 = vpop.f32.mrf.mxu0
        %v3829 = vadd.f32 %v3740, %v3828
        %v3830 = vpop.f32.mrf.mxu0
        %v3831 = vadd.f32 %v3742, %v3830
        %3832 = vmatmul.bf16.gmra.mxu0 %v2637
        %v3833 = vpop.f32.mrf.mxu0
        %v3834 = vadd.f32 %v3745, %v3833
        %v3835 = vpop.f32.mrf.mxu0
        %v3836 = vadd.f32 %v3747, %v3835
        %3837 = vmatmul.bf16.gmra.mxu0 %v712
        %v3838 = vpop.f32.mrf.mxu0
        %v3839 = vadd.f32 %v3750, %v3838
        %v3840 = vpop.f32.mrf.mxu0
        %v3841 = vadd.f32 %v3752, %v3840
        %3842 = vdwg.mxu0
        %3843 = vmatpush.bf16.msra.mxu0 %v3139
        %3844 = vmatpush.bf16.msra.mxu0 %v3138
        %3845 = vmatpush.bf16.msra.mxu0 %v3137
        %3846 = vmatpush.bf16.msra.mxu0 %v3136
        %3847 = vmatpush.bf16.msra.mxu0 %v3135
        %3848 = vmatpush.bf16.msra.mxu0 %v3134
        %3849 = vmatpush.bf16.msra.mxu0 %v3133
        %3850 = vmatpush.bf16.msra.mxu0 %v3132
        %3851 = vmatmul.bf16.gmra.mxu0 %v2596
        %v3852 = vpop.f32.mrf.mxu0
        %v3853 = vadd.f32 %v3764, %v3852
        %v3854 = vpop.f32.mrf.mxu0
        %v3855 = vadd.f32 %v3766, %v3854
        %3856 = vmatmul.bf16.gmra.mxu0 %v2599
        %v3857 = vpop.f32.mrf.mxu0
        %v3858 = vadd.f32 %v3769, %v3857
        %v3859 = vpop.f32.mrf.mxu0
        %v3860 = vadd.f32 %v3771, %v3859
        %3861 = vmatmul.bf16.gmra.mxu0 %v2602
        %v3862 = vpop.f32.mrf.mxu0
        %v3863 = vadd.f32 %v3774, %v3862
        %v3864 = vpop.f32.mrf.mxu0
        %v3865 = vadd.f32 %v3776, %v3864
        %3866 = vmatmul.bf16.gmra.mxu0 %v2605
        %v3867 = vpop.f32.mrf.mxu0
        %v3868 = vadd.f32 %v3779, %v3867
        %v3869 = vpop.f32.mrf.mxu0
        %v3870 = vadd.f32 %v3781, %v3869
        %3871 = vmatmul.bf16.gmra.mxu0 %v2608
        %v3872 = vpop.f32.mrf.mxu0
        %v3873 = vadd.f32 %v3784, %v3872
        %v3874 = vpop.f32.mrf.mxu0
        %v3875 = vadd.f32 %v3786, %v3874
        %3876 = vmatmul.bf16.gmra.mxu0 %v2611
        %v3877 = vpop.f32.mrf.mxu0
        %v3878 = vadd.f32 %v3789, %v3877
        %v3879 = vpop.f32.mrf.mxu0
        %v3880 = vadd.f32 %v3791, %v3879
        %3881 = vmatmul.bf16.gmra.mxu0 %v2614
        %v3882 = vpop.f32.mrf.mxu0
        %v3883 = vadd.f32 %v3794, %v3882
        %v3884 = vpop.f32.mrf.mxu0
        %v3885 = vadd.f32 %v3796, %v3884
        %3886 = vmatmul.bf16.gmra.mxu0 %v2617
        %v3887 = vpop.f32.mrf.mxu0
        %v3888 = vadd.f32 %v3799, %v3887
        %v3889 = vpop.f32.mrf.mxu0
        %v3890 = vadd.f32 %v3801, %v3889
        %3891 = vmatmul.bf16.gmra.mxu0 %v2620
        %v3892 = vpop.f32.mrf.mxu0
        %v3893 = vadd.f32 %v3804, %v3892
        %v3894 = vpop.f32.mrf.mxu0
        %v3895 = vadd.f32 %v3806, %v3894
        %3896 = vmatmul.bf16.gmra.mxu0 %v2623
        %v3897 = vpop.f32.mrf.mxu0
        %v3898 = vadd.f32 %v3809, %v3897
        %v3899 = vpop.f32.mrf.mxu0
        %v3900 = vadd.f32 %v3811, %v3899
        %3901 = vmatmul.bf16.gmra.mxu0 %v2626
        %v3902 = vpop.f32.mrf.mxu0
        %v3903 = vadd.f32 %v3814, %v3902
        %v3904 = vpop.f32.mrf.mxu0
        %v3905 = vadd.f32 %v3816, %v3904
        %3906 = vmatmul.bf16.gmra.mxu0 %v2629
        %v3907 = vpop.f32.mrf.mxu0
        %v3908 = vadd.f32 %v3819, %v3907
        %v3909 = vpop.f32.mrf.mxu0
        %v3910 = vadd.f32 %v3821, %v3909
        %3911 = vmatmul.bf16.gmra.mxu0 %v2632
        %v3912 = vpop.f32.mrf.mxu0
        %v3913 = vadd.f32 %v3824, %v3912
        %v3914 = vpop.f32.mrf.mxu0
        %v3915 = vadd.f32 %v3826, %v3914
        %3916 = vmatmul.bf16.gmra.mxu0 %v2635
        %v3917 = vpop.f32.mrf.mxu0
        %v3918 = vadd.f32 %v3829, %v3917
        %v3919 = vpop.f32.mrf.mxu0
        %v3920 = vadd.f32 %v3831, %v3919
        %3921 = vmatmul.bf16.gmra.mxu0 %v2638
        %v3922 = vpop.f32.mrf.mxu0
        %v3923 = vadd.f32 %v3834, %v3922
        %v3924 = vpop.f32.mrf.mxu0
        %v3925 = vadd.f32 %v3836, %v3924
        %3926 = vmatmul.bf16.gmra.mxu0 %v713
        %v3927 = vpop.f32.mrf.mxu0
        %v3928 = vadd.f32 %v3839, %v3927
        %v3929 = vpop.f32.mrf.mxu0
        %v3930 = vadd.f32 %v3841, %v3929
        %3931 = vdwg.mxu0
        %3932 = vmatpush.bf16.msra.mxu0 %v3147
        %3933 = vmatpush.bf16.msra.mxu0 %v3146
        %3934 = vmatpush.bf16.msra.mxu0 %v3145
        %3935 = vmatpush.bf16.msra.mxu0 %v3144
        %3936 = vmatpush.bf16.msra.mxu0 %v3143
        %3937 = vmatpush.bf16.msra.mxu0 %v3142
        %3938 = vmatpush.bf16.msra.mxu0 %v3141
        %3939 = vmatpush.bf16.msra.mxu0 %v3140
        %3940 = vmatmul.bf16.gmra.mxu0 %v2597
        %v3941 = vpop.f32.mrf.mxu0
        %v3942 = vadd.f32 %v3853, %v3941
        %v3943 = vpop.f32.mrf.mxu0
        %v3944 = vadd.f32 %v3855, %v3943
        %3945 = vmatmul.bf16.gmra.mxu0 %v2600
        %v3946 = vpop.f32.mrf.mxu0
        %v3947 = vadd.f32 %v3858, %v3946
        %v3948 = vpop.f32.mrf.mxu0
        %v3949 = vadd.f32 %v3860, %v3948
        %3950 = vmatmul.bf16.gmra.mxu0 %v2603
        %v3951 = vpop.f32.mrf.mxu0
        %v3952 = vadd.f32 %v3863, %v3951
        %v3953 = vpop.f32.mrf.mxu0
        %v3954 = vadd.f32 %v3865, %v3953
        %3955 = vmatmul.bf16.gmra.mxu0 %v2606
        %v3956 = vpop.f32.mrf.mxu0
        %v3957 = vadd.f32 %v3868, %v3956
        %v3958 = vpop.f32.mrf.mxu0
        %v3959 = vadd.f32 %v3870, %v3958
        %3960 = vmatmul.bf16.gmra.mxu0 %v2609
        %v3961 = vpop.f32.mrf.mxu0
        %v3962 = vadd.f32 %v3873, %v3961
        %v3963 = vpop.f32.mrf.mxu0
        %v3964 = vadd.f32 %v3875, %v3963
        %3965 = vmatmul.bf16.gmra.mxu0 %v2612
        %v3966 = vpop.f32.mrf.mxu0
        %v3967 = vadd.f32 %v3878, %v3966
        %v3968 = vpop.f32.mrf.mxu0
        %v3969 = vadd.f32 %v3880, %v3968
        %3970 = vmatmul.bf16.gmra.mxu0 %v2615
        %v3971 = vpop.f32.mrf.mxu0
        %v3972 = vadd.f32 %v3883, %v3971
        %v3973 = vpop.f32.mrf.mxu0
        %v3974 = vadd.f32 %v3885, %v3973
        %3975 = vmatmul.bf16.gmra.mxu0 %v2618
        %v3976 = vpop.f32.mrf.mxu0
        %v3977 = vadd.f32 %v3888, %v3976
        %v3978 = vpop.f32.mrf.mxu0
        %v3979 = vadd.f32 %v3890, %v3978
        %3980 = vmatmul.bf16.gmra.mxu0 %v2621
        %v3981 = vpop.f32.mrf.mxu0
        %v3982 = vadd.f32 %v3893, %v3981
        %v3983 = vpop.f32.mrf.mxu0
        %v3984 = vadd.f32 %v3895, %v3983
        %3985 = vmatmul.bf16.gmra.mxu0 %v2624
        %v3986 = vpop.f32.mrf.mxu0
        %v3987 = vadd.f32 %v3898, %v3986
        %v3988 = vpop.f32.mrf.mxu0
        %v3989 = vadd.f32 %v3900, %v3988
        %3990 = vmatmul.bf16.gmra.mxu0 %v2627
        %v3991 = vpop.f32.mrf.mxu0
        %v3992 = vadd.f32 %v3903, %v3991
        %v3993 = vpop.f32.mrf.mxu0
        %v3994 = vadd.f32 %v3905, %v3993
        %3995 = vmatmul.bf16.gmra.mxu0 %v2630
        %v3996 = vpop.f32.mrf.mxu0
        %v3997 = vadd.f32 %v3908, %v3996
        %v3998 = vpop.f32.mrf.mxu0
        %v3999 = vadd.f32 %v3910, %v3998
        %4000 = vmatmul.bf16.gmra.mxu0 %v2633
        %v4001 = vpop.f32.mrf.mxu0
        %v4002 = vadd.f32 %v3913, %v4001
        %v4003 = vpop.f32.mrf.mxu0
        %v4004 = vadd.f32 %v3915, %v4003
        %4005 = vmatmul.bf16.gmra.mxu0 %v2636
        %v4006 = vpop.f32.mrf.mxu0
        %v4007 = vadd.f32 %v3918, %v4006
        %v4008 = vpop.f32.mrf.mxu0
        %v4009 = vadd.f32 %v3920, %v4008
        %4010 = vmatmul.bf16.gmra.mxu0 %v2639
        %v4011 = vpop.f32.mrf.mxu0
        %v4012 = vadd.f32 %v3923, %v4011
        %v4013 = vpop.f32.mrf.mxu0
        %v4014 = vadd.f32 %v3925, %v4013
        %4015 = vmatmul.bf16.gmra.mxu0 %v714
        %v4016 = vpop.f32.mrf.mxu0
        %v4017 = vadd.f32 %v3928, %v4016
        %v4018 = vpop.f32.mrf.mxu0
        %v4019 = vadd.f32 %v3930, %v4018
        %4020 = vdwg.mxu0
        %v4021 = vmax.f32 %v3942, 0.0
        %v4022 = vmax.f32 %v3944, 0.0
        %v4023 = vmax.f32 %v3947, 0.0
        %v4024 = vmax.f32 %v3949, 0.0
        %v4025 = vmax.f32 %v3952, 0.0
        %v4026 = vmax.f32 %v3954, 0.0
        %v4027 = vmax.f32 %v3957, 0.0
        %v4028 = vmax.f32 %v3959, 0.0
        %v4029 = vmax.f32 %v3962, 0.0
        %v4030 = vmax.f32 %v3964, 0.0
        %v4031 = vmax.f32 %v3967, 0.0
        %v4032 = vmax.f32 %v3969, 0.0
        %v4033 = vmax.f32 %v3972, 0.0
        %v4034 = vmax.f32 %v3974, 0.0
        %v4035 = vmax.f32 %v3977, 0.0
        %v4036 = vmax.f32 %v3979, 0.0
        %v4037 = vmax.f32 %v3982, 0.0
        %v4038 = vmax.f32 %v3984, 0.0
        %v4039 = vmax.f32 %v3987, 0.0
        %v4040 = vmax.f32 %v3989, 0.0
        %v4041 = vmax.f32 %v3992, 0.0
        %v4042 = vmax.f32 %v3994, 0.0
        %v4043 = vmax.f32 %v3997, 0.0
        %v4044 = vmax.f32 %v3999, 0.0
        %v4045 = vmax.f32 %v4002, 0.0
        %v4046 = vmax.f32 %v4004, 0.0
        %v4047 = vmax.f32 %v4007, 0.0
        %v4048 = vmax.f32 %v4009, 0.0
        %v4049 = vmax.f32 %v4012, 0.0
        %v4050 = vmax.f32 %v4014, 0.0
        %v4051 = vmax.f32 %v4017, 0.0
        %v4052 = vmax.f32 %v4019, 0.0
        %v4053 = vadd.f32 %v4021, %v4022
        %v4054 = vadd.f32 %v4053, %v4023
        %v4055 = vadd.f32 %v4054, %v4024
        %v4056 = vadd.f32 %v4055, %v4025
        %v4057 = vadd.f32 %v4056, %v4026
        %v4058 = vadd.f32 %v4057, %v4027
        %v4059 = vadd.f32 %v4058, %v4028
        %v4060 = vadd.f32 %v4059, %v4029
        %v4061 = vadd.f32 %v4060, %v4030
        %v4062 = vadd.f32 %v4061, %v4031
        %v4063 = vadd.f32 %v4062, %v4032
        %v4064 = vadd.f32 %v4063, %v4033
        %v4065 = vadd.f32 %v4064, %v4034
        %v4066 = vadd.f32 %v4065, %v4035
        %v4067 = vadd.f32 %v4066, %v4036
        %v4068 = vadd.f32 %v4067, %v4037
        %v4069 = vadd.f32 %v4068, %v4038
        %v4070 = vadd.f32 %v4069, %v4039
        %v4071 = vadd.f32 %v4070, %v4040
        %v4072 = vadd.f32 %v4071, %v4041
        %v4073 = vadd.f32 %v4072, %v4042
        %v4074 = vadd.f32 %v4073, %v4043
        %v4075 = vadd.f32 %v4074, %v4044
        %v4076 = vadd.f32 %v4075, %v4045
        %v4077 = vadd.f32 %v4076, %v4046
        %v4078 = vadd.f32 %v4077, %v4047
        %v4079 = vadd.f32 %v4078, %v4048
        %v4080 = vadd.f32 %v4079, %v4049
        %v4081 = vadd.f32 %v4080, %v4050
        %v4082 = vadd.f32 %v4081, %v4051
        %v4083 = vadd.f32 %v4082, %v4052
        %v4084 = vrot.slane %v4083, 4
        %v4085 = vadd.f32 %v4083, %v4084
        %v4086 = vrot.slane %v4085, 2
        %v4087 = vadd.f32 %v4085, %v4086
        %v4088 = vrot.slane %v4087, 1
        %v4089 = vadd.f32 %v4087, %v4088
        %v4090 = vmul.f32 %v4089, 0.00390625
        %4091 = vst [vmem:[%s216] sm:$0x1] %v4090
        %s4092 = sand.u32 %s137, 1
        %s4093 = scalar_lea.sflag [#allocation3], %s4092
        %s4094 = sand.u32 %s137, 1
        %s4095 = scalar_lea.vmem [#allocation2], %s4094
        // Predicated region
        $region41: #{feature_extractor_forward.1} parent=39 // pred_check
          %p4096 = pneg %p147
        $region42: #{feature_extractor_forward.1} parent=39 // pred_check_branch
          %4098 = sbr.rel (%p4096) target = $region44
        $region43: #{feature_extractor_forward.1} parent=39 // pred_region
          %4100 = vsyncadd %s4093, 0
          %s4101 = scalar_lea.hbm %s5, %s19
          %s4103 = sshll.u32 %s4095, 4
          %s4104 = int_to_ptr.vmem [resolvable:$true] %s4103
          %s4105 = sshll.u32 %s4101, 4
          %s4106 = int_to_ptr.hbm [resolvable:$true] %s4105
          %4108 = dma.vmem_to_hbm [thread:$0]  %s4104, 16, %s4106, %s4093
        $region44: #{feature_extractor_forward.1} parent=39 // pred_fallthru
          _
      $region40: #{feature_extractor_forward.1} parent=5 // pred_fallthru
        _
      %p4109 = scmp.le.s32.totalorder 2, %s14
      // Predicated region
      $region45: #{feature_extractor_forward.1} parent=5 // pred_check
        %p4110 = pneg %p4109
      $region46: #{feature_extractor_forward.1} parent=5 // pred_check_branch
        %4112 = sbr.rel (%p4110) target = $region48
      $region47: #{feature_extractor_forward.1} parent=5 // pred_region
        %s4113 = ssub.s32 %s14, 2
        // Predicated region
        $region49: #{feature_extractor_forward.1} parent=47 // pred_check
          %p4114 = pneg %p153
        $region50: #{feature_extractor_forward.1} parent=47 // pred_check_branch
          %4116 = sbr.rel (%p4114) target = $region52
        $region51: #{feature_extractor_forward.1} parent=47 // pred_region
          %s4117 = sand.u32 %s138, 1
          %s4118 = scalar_lea.sflag [#allocation3], %s4117
          %s4119 = sand.u32 %s138, 1
          %s4120 = scalar_lea.vmem [#allocation2], %s4119
          %4122 = dma.done %s4118, 16
        $region52: #{feature_extractor_forward.1} parent=47 // pred_fallthru
          _
      $region48: #{feature_extractor_forward.1} parent=5 // pred_fallthru
        _
    $region6: #{feature_extractor_forward.1} parent=1 // loop_footer
      %s18 = sadd.s32 1, %s14
    $region7: #{feature_extractor_forward.1} parent=1 // loop_footer_branch
      %13 = sbr.rel target = $region3
    $region8: #{feature_extractor_forward.1} parent=1 // loop_exit
      _
    %4123 = vsyncpa [#allocation3], 1
    %s4124 = scalar_lea.sflag [#allocation3], 1
    %4125 = vsyncpa %s4124, 1

</llo_original>
